<compile_context>
chip_gen: v7x
topology: tpu7x:2x2x1
jax: 0.10.0
libtpu: 0.0.40
codegen_flags: <defaults>
</compile_context>

<pallas_src>
import numpy as np
import jax
import jax.numpy as jnp
from jax.experimental import pallas as pl
from jax.experimental.pallas import tpu as pltpu

# ------------------------- configuration (small) -----------------------------
DIM = 32                 # channels C
H = W = 8                # input_resolution
L_TOK = H * W            # tokens per image
NUM_HEADS = 4
HEAD_DIM = DIM // NUM_HEADS
WINDOW = 4               # window_size (8 % 4 == 0 -> no padding branch)
SHIFT = 2                # shift_size > 0 -> exercises roll + attention mask
HIDDEN = int(DIM * 4.0)  # mlp_ratio = 4.0
N = WINDOW * WINDOW      # tokens per window
B = 2                    # batch
EPS = 1e-5               # LayerNorm eps (torch default)
NEG_INF = -1e9           # cross-window / cross-image pairs -> exp() underflows to 0


# ------------------------------ fused kernel ----------------------------------
def swin_block_kernel(x_ref, ln1_g_ref, ln1_b_ref, wqkv_ref, bqkv_ref,
                      bias_ref, hmask_ref, seg_ref, segch_ref,
                      wproj_ref, bproj_ref, ln2_g_ref, ln2_b_ref,
                      w1_ref, b1_ref, w2_ref, b2_ref, o_ref):
    """Whole Swin block for the whole (batch-fused) token set.

    All window / shift / cross-image bookkeeping lives in the precomputed
    (M, heads*M) additive bias, so attention is dense, lane-packed and fully
    MXU-friendly."""
    x = x_ref[...].astype(jnp.float32)                                 # (M, C)
    M = x.shape[0]

    # ---------------- LayerNorm 1 ----------------
    mu = jnp.mean(x, axis=-1, keepdims=True)
    var = jnp.mean((x - mu) ** 2, axis=-1, keepdims=True)
    xn = (x - mu) * jax.lax.rsqrt(var + EPS) * ln1_g_ref[...] + ln1_b_ref[...]

    # -------- fused QKV: one (M,C)@(C,3C) matmul, scale folded into Q cols --------
    qkv = jnp.dot(xn, wqkv_ref[...],
                  preferred_element_type=jnp.float32) + bqkv_ref[...]  # (M, 3C)
    q = qkv[:, :DIM]                                                   # (M, C), pre-scaled
    k = qkv[:, DIM:2 * DIM]                                            # (M, C)
    v = qkv[:, 2 * DIM:]                                               # (M, C)

    # -------- head packing: sublane-tile K/V and zero other heads' channels --------
    hmask = hmask_ref[...]                                             # (heads*M, C)
    k_blk = jnp.tile(k, (NUM_HEADS, 1)) * hmask                        # (heads*M, C)
    v_blk = jnp.tile(v, (NUM_HEADS, 1)) * hmask                        # (heads*M, C)

    # -------- scores: one lane-dense matmul (M, heads*M) --------
    # s[i, h*M + j] = Q_h[i] . K_h[j]  (+ folded rel-pos / shift / image mask)
    s = jnp.einsum("mc,nc->mn", q, k_blk,
                   preferred_element_type=jnp.float32) + bias_ref[...]  # (M, heads*M)

    # -------- softmax (no row-max: logits small & bounded; -1e9 -> exp == 0) --------
    p = jnp.exp(s)                                                     # (M, heads*M)
    denom = jnp.dot(p, seg_ref[...],
                    preferred_element_type=jnp.float32)                # (M, heads)
    recip = pl.reciprocal(denom, approx=False)                         # exact (EUP)

    # -------- PV: lands directly in head-concatenated (M, C) layout --------
    o = jnp.dot(p, v_blk, preferred_element_type=jnp.float32)          # (M, C)
    # per-head 1/denominator broadcast to that head's channel columns
    o = o * jnp.dot(recip, segch_ref[...],
                    preferred_element_type=jnp.float32)                # (M, C)

    # -------- output projection: single (M,C)@(C,C) matmul --------
    attn = jnp.dot(o, wproj_ref[...],
                   preferred_element_type=jnp.float32) + bproj_ref[...]

    # ---------------- residual 1 ----------------
    x1 = x + attn

    # ---------------- LayerNorm 2 + MLP + residual 2 ----------------
    mu2 = jnp.mean(x1, axis=-1, keepdims=True)
    var2 = jnp.mean((x1 - mu2) ** 2, axis=-1, keepdims=True)
    xn2 = (x1 - mu2) * jax.lax.rsqrt(var2 + EPS) * ln2_g_ref[...] + ln2_b_ref[...]
    hid = jnp.dot(xn2, w1_ref[...], preferred_element_type=jnp.float32) + b1_ref[...]
    hid = jax.nn.gelu(hid, approximate=True)
    y = jnp.dot(hid, w2_ref[...], preferred_element_type=jnp.float32) + b2_ref[...]

    o_ref[...] = (x1 + y).astype(o_ref.dtype)


# ------------------------------- wrapper --------------------------------------
def swin_block_pallas(x, kp):
    Bb, L, C = x.shape
    M = Bb * L
    x2 = x.reshape(M, C)                       # batch fused into tokens (free view)

    ordered = [kp["ln1_g"], kp["ln1_b"], kp["wqkv"], kp["bqkv"], kp["bias"],
               kp["hmask"], kp["seg"], kp["seg_ch"], kp["wproj"], kp["bproj"],
               kp["ln2_g"], kp["ln2_b"], kp["w1"], kp["b1"], kp["w2"], kp["b2"]]

    def whole(a):  # whole array, single grid step (loaded once, VMEM resident)
        return pl.BlockSpec(a.shape, lambda i, _nd=a.ndim: (0,) * _nd)

    out = pl.pallas_call(
        swin_block_kernel,
        out_shape=jax.ShapeDtypeStruct((M, C), x.dtype),
        grid=(1,),
        in_specs=[whole(x2)] + [whole(a) for a in ordered],
        out_specs=pl.BlockSpec((M, C), lambda i: (0, 0)),
        compiler_params=pltpu.CompilerParams(
            dimension_semantics=("arbitrary",)),
    )(x2, *ordered)
    return out.reshape(Bb, L, C)


# ----------------------- host-side parameter folding ---------------------------
def make_kernel_params(p, dense_bias, Bb):
    """Fold softmax scale into Q weights, build head-packing masks / one-hots and the
    block-diagonal lane-packed attention bias."""
    M = Bb * L_TOK
    scale = HEAD_DIM ** -0.5

    # fold softmax scale into the Q columns of the fused QKV weight / bias
    qscale = jnp.concatenate([jnp.full((DIM,), scale, jnp.float32),
                              jnp.ones((2 * DIM,), jnp.float32)])
    wqkv_s = p["wqkv"] * qscale[None, :]                    # (C, 3C)
    bqkv_s = (p["bqkv"][0] * qscale)[None, :]               # (1, 3C)

    # per-head channel mask for K/V sublane packing: (heads*M, C)
    hmask = np.zeros((NUM_HEADS * M, DIM), np.float32)
    for h in range(NUM_HEADS):
        hmask[h * M:(h + 1) * M, h * HEAD_DIM:(h + 1) * HEAD_DIM] = 1.0

    # one-hot segment matrix for per-head row sums: (heads*M, heads)
    seg = np.zeros((NUM_HEADS * M, NUM_HEADS), np.float32)
    for h in range(NUM_HEADS):
        seg[h * M:(h + 1) * M, h] = 1.0

    # one-hot per-head channel broadcast matrix: (heads, C)
    seg_ch = np.zeros((NUM_HEADS, DIM), np.float32)
    for h in range(NUM_HEADS):
        seg_ch[h, h * HEAD_DIM:(h + 1) * HEAD_DIM] = 1.0

    # lane-packed, block-diagonal (across images) attention bias: (M, heads*M)
    db = np.asarray(dense_bias, np.float32)                 # (heads, L, L)
    packed_bias = np.full((M, NUM_HEADS * M), NEG_INF, np.float32)
    for b in range(Bb):
        r0 = b * L_TOK
        for h in range(NUM_HEADS):
            c0 = h * M + b * L_TOK
            packed_bias[r0:r0 + L_TOK, c0:c0 + L_TOK] = db[h]

    return {
        "ln1_g": p["ln1_g"], "ln1_b": p["ln1_b"],
        "wqkv": wqkv_s, "bqkv": bqkv_s,
        "bias": jnp.asarray(packed_bias),
        "hmask": jnp.asarray(hmask),
        "seg": jnp.asarray(seg),
        "seg_ch": jnp.asarray(seg_ch),
        "wproj": p["wproj"], "bproj": p["bproj"],
        "ln2_g": p["ln2_g"], "ln2_b": p["ln2_b"],
        "w1": p["w1"], "b1": p["b1"], "w2": p["w2"], "b2": p["b2"],
    }


def make_relative_position_index(ws):
    coords = np.stack(np.meshgrid(np.arange(ws), np.arange(ws), indexing="ij"))
    cf = coords.reshape(2, -1)
    rel = cf[:, :, None] - cf[:, None, :]
    rel = rel.transpose(1, 2, 0).astype(np.int64)
    rel[:, :, 0] += ws - 1
    rel[:, :, 1] += ws - 1
    rel[:, :, 0] *= 2 * ws - 1
    return rel.sum(-1)                                      # (N, N)


def make_attn_mask(ws, shift, Hh, Ww):
    img_mask = np.zeros((1, Hh, Ww, 1), np.float32)
    slices = (slice(0, -ws), slice(-ws, -shift), slice(-shift, None))
    cnt = 0
    for hs in slices:
        for wsl in slices:
            img_mask[:, hs, wsl, :] = cnt
            cnt += 1
    mw = img_mask.reshape(1, Hh // ws, ws, Ww // ws, ws, 1)
    mw = mw.transpose(0, 1, 3, 2, 4, 5).reshape(-1, ws * ws)
    am = mw[:, None, :] - mw[:, :, None]
    return np.where(am != 0, -100.0, 0.0).astype(np.float32)  # (nW, N, N)


def make_dense_bias(rel_bias, attn_mask):
    """Fold shift + window partition + shift-mask + relative-position bias into one
    dense (heads, L, L) additive bias in ORIGINAL token order."""
    nww = W // WINDOW
    info = []
    for r in range(H):
        for c in range(W):
            rs, cs = (r - SHIFT) % H, (c - SHIFT) % W    # position after roll(-SHIFT)
            wid = (rs // WINDOW) * nww + (cs // WINDOW)  # window id
            n = (rs % WINDOW) * WINDOW + (cs % WINDOW)   # index inside the window
            info.append((wid, n))
    bias = np.full((NUM_HEADS, L_TOK, L_TOK), NEG_INF, np.float32)
    for i, (wi, ni) in enumerate(info):
        for j, (wj, nj) in enumerate(info):
            if wi == wj:
                bias[:, i, j] = rel_bias[:, ni, nj] + attn_mask[wi, ni, nj]
    return bias


# --------------------------- pure-JAX reference --------------------------------
def window_partition_jax(x4, ws):
    Bb, Hh, Ww, C = x4.shape
    x = x4.reshape(Bb, Hh // ws, ws, Ww // ws, ws, C)
    x = x.transpose(0, 1, 3, 2, 4, 5)
    return x.reshape(-1, ws * ws, C)


def window_reverse_jax(wins, ws, Bb, Hh, Ww, C):
    x = wins.reshape(Bb, Hh // ws, Ww // ws, ws, ws, C)
    x = x.transpose(0, 1, 3, 2, 4, 5)
    return x.reshape(Bb, Hh, Ww, C)


def ref_forward(x, p, rel_bias, attn_mask):
    Bb, L, C = x.shape

    def ln(v, g, b):
        m = jnp.mean(v, -1, keepdims=True)
        var = jnp.mean((v - m) ** 2, -1, keepdims=True)
        return (v - m) / jnp.sqrt(var + EPS) * g[0] + b[0]

    shortcut = x
    xn = ln(x, p["ln1_g"], p["ln1_b"]).reshape(Bb, H, W, C)
    if SHIFT > 0:
        xn = jnp.roll(xn, shift=(-SHIFT, -SHIFT), axis=(1, 2))
    xw = window_partition_jax(xn, WINDOW)
    B_, Nn, _ = xw.shape
    qkv = xw @ p["wqkv"] + p["bqkv"][0]
    qkv = qkv.reshape(B_, Nn, 3, NUM_HEADS, HEAD_DIM).transpose(2, 0, 3, 1, 4)
    q, k, v = qkv[0], qkv[1], qkv[2]
    attn = jnp.einsum("bhqd,bhkd->bhqk", q, k) * (HEAD_DIM ** -0.5)
    attn = attn + rel_bias[None]
    nW = attn_mask.shape[0]
    attn = attn.reshape(B_ // nW, nW, NUM_HEADS, Nn, Nn) + attn_mask[None, :, None]
    attn = jax.nn.softmax(attn.reshape(B_, NUM_HEADS, Nn, Nn), axis=-1)
    aw = jnp.einsum("bhqk,bhkd->bhqd", attn, v).transpose(0, 2, 1, 3).reshape(B_, Nn, C)
    aw = aw @ p["wproj"] + p["bproj"][0]
    x4 = window_reverse_jax(aw, WINDOW, Bb, H, W, C)
    if SHIFT > 0:
        x4 = jnp.roll(x4, shift=(SHIFT, SHIFT), axis=(1, 2))
    x = shortcut + x4.reshape(Bb, L, C)
    xn2 = ln(x, p["ln2_g"], p["ln2_b"])
    h = jax.nn.gelu(xn2 @ p["w1"] + p["b1"][0], approximate=True)
    return x + (h @ p["w2"] + p["b2"][0])


# --------------------------------- main -----------------------------------------
if __name__ == "__main__":
    key = jax.random.PRNGKey(0)
    ks = jax.random.split(key, 10)

    p = {
        "ln1_g": jnp.ones((1, DIM), jnp.float32),
        "ln1_b": jnp.zeros((1, DIM), jnp.float32),
        "ln2_g": jnp.ones((1, DIM), jnp.float32),
        "ln2_b": jnp.zeros((1, DIM), jnp.float32),
        "wqkv": 0.02 * jax.random.normal(ks[0], (DIM, 3 * DIM), jnp.float32),
        "bqkv": 0.02 * jax.random.normal(ks[1], (1, 3 * DIM), jnp.float32),
        "wproj": 0.02 * jax.random.normal(ks[2], (DIM, DIM), jnp.float32),
        "bproj": 0.02 * jax.random.normal(ks[3], (1, DIM), jnp.float32),
        "w1": 0.02 * jax.random.normal(ks[4], (DIM, HIDDEN), jnp.float32),
        "b1": 0.02 * jax.random.normal(ks[5], (1, HIDDEN), jnp.float32),
        "w2": 0.02 * jax.random.normal(ks[6], (HIDDEN, DIM), jnp.float32),
        "b2": 0.02 * jax.random.normal(ks[7], (1, DIM), jnp.float32),
    }
    rpb_table = 0.02 * jax.random.normal(
        ks[8], ((2 * WINDOW - 1) * (2 * WINDOW - 1), NUM_HEADS), jnp.float32)
    rpi = make_relative_position_index(WINDOW)
    rel_bias = jnp.asarray(rpb_table)[rpi.reshape(-1)].reshape(N, N, NUM_HEADS)
    rel_bias = jnp.transpose(rel_bias, (2, 0, 1))            # (num_heads, N, N)
    if SHIFT > 0:
        attn_mask_np = make_attn_mask(WINDOW, SHIFT, H, W)   # (nW, N, N)
    else:
        attn_mask_np = np.zeros(((H // WINDOW) * (W // WINDOW), N, N), np.float32)
    attn_mask = jnp.asarray(attn_mask_np)

    dense_bias = make_dense_bias(np.asarray(rel_bias), attn_mask_np)
    kp = make_kernel_params(p, dense_bias, B)

    x = jax.random.normal(ks[9], (B, H * W, DIM), jnp.float32)

    out = jax.block_until_ready(swin_block_pallas(x, kp))
    ref = ref_forward(x, p, rel_bias, attn_mask)
    np.testing.assert_allclose(np.asarray(out), np.asarray(ref), rtol=2e-4, atol=2e-4)
    print("KERNEL_OK")
</pallas_src>

<mosaic_0001>
module attributes {stable_mosaic.version = 11 : i64} {
  func.func @swin_block_kernel(%arg0: i32, %arg1: memref<128x32xf32, #tpu.memory_space<vmem>>, %arg2: memref<1x32xf32, #tpu.memory_space<vmem>>, %arg3: memref<1x32xf32, #tpu.memory_space<vmem>>, %arg4: memref<32x96xf32, #tpu.memory_space<vmem>>, %arg5: memref<1x96xf32, #tpu.memory_space<vmem>>, %arg6: memref<128x512xf32, #tpu.memory_space<vmem>>, %arg7: memref<512x32xf32, #tpu.memory_space<vmem>>, %arg8: memref<512x4xf32, #tpu.memory_space<vmem>>, %arg9: memref<4x32xf32, #tpu.memory_space<vmem>>, %arg10: memref<32x32xf32, #tpu.memory_space<vmem>>, %arg11: memref<1x32xf32, #tpu.memory_space<vmem>>, %arg12: memref<1x32xf32, #tpu.memory_space<vmem>>, %arg13: memref<1x32xf32, #tpu.memory_space<vmem>>, %arg14: memref<32x128xf32, #tpu.memory_space<vmem>>, %arg15: memref<1x128xf32, #tpu.memory_space<vmem>>, %arg16: memref<128x32xf32, #tpu.memory_space<vmem>>, %arg17: memref<1x32xf32, #tpu.memory_space<vmem>>, %arg18: memref<128x32xf32, #tpu.memory_space<vmem>>) attributes {dimension_semantics = [#tpu.dimension_semantics<arbitrary>], iteration_bounds = array<i64: 1>, scalar_prefetch = 0 : i64, scratch_operands = 0 : i64, tpu.core_type = #tpu.core_type<tc>, window_params = [{pipeline_mode = #tpu.pipeline_mode<synchronous>, transform_indices = @transform_0, window_bounds = array<i64: 128, 32>}, {pipeline_mode = #tpu.pipeline_mode<synchronous>, transform_indices = @transform_1, window_bounds = array<i64: 1, 32>}, {pipeline_mode = #tpu.pipeline_mode<synchronous>, transform_indices = @transform_2, window_bounds = array<i64: 1, 32>}, {pipeline_mode = #tpu.pipeline_mode<synchronous>, transform_indices = @transform_3, window_bounds = array<i64: 32, 96>}, {pipeline_mode = #tpu.pipeline_mode<synchronous>, transform_indices = @transform_4, window_bounds = array<i64: 1, 96>}, {pipeline_mode = #tpu.pipeline_mode<synchronous>, transform_indices = @transform_5, window_bounds = array<i64: 128, 512>}, {pipeline_mode = #tpu.pipeline_mode<synchronous>, transform_indices = @transform_6, window_bounds = array<i64: 512, 32>}, {pipeline_mode = #tpu.pipeline_mode<synchronous>, transform_indices = @transform_7, window_bounds = array<i64: 512, 4>}, {pipeline_mode = #tpu.pipeline_mode<synchronous>, transform_indices = @transform_8, window_bounds = array<i64: 4, 32>}, {pipeline_mode = #tpu.pipeline_mode<synchronous>, transform_indices = @transform_9, window_bounds = array<i64: 32, 32>}, {pipeline_mode = #tpu.pipeline_mode<synchronous>, transform_indices = @transform_10, window_bounds = array<i64: 1, 32>}, {pipeline_mode = #tpu.pipeline_mode<synchronous>, transform_indices = @transform_11, window_bounds = array<i64: 1, 32>}, {pipeline_mode = #tpu.pipeline_mode<synchronous>, transform_indices = @transform_12, window_bounds = array<i64: 1, 32>}, {pipeline_mode = #tpu.pipeline_mode<synchronous>, transform_indices = @transform_13, window_bounds = array<i64: 32, 128>}, {pipeline_mode = #tpu.pipeline_mode<synchronous>, transform_indices = @transform_14, window_bounds = array<i64: 1, 128>}, {pipeline_mode = #tpu.pipeline_mode<synchronous>, transform_indices = @transform_15, window_bounds = array<i64: 128, 32>}, {pipeline_mode = #tpu.pipeline_mode<synchronous>, transform_indices = @transform_16, window_bounds = array<i64: 1, 32>}, {pipeline_mode = #tpu.pipeline_mode<synchronous>, transform_indices = @transform_17, window_bounds = array<i64: 128, 32>}]} {
    %c0 = arith.constant 0 : index
    %c0_0 = arith.constant 0 : index
    %0 = vector.load %arg1[%c0, %c0_0] : memref<128x32xf32, #tpu.memory_space<vmem>>, vector<128x32xf32>
    %cst = arith.constant dense<0.000000e+00> : vector<128xf32>
    %1 = vector.multi_reduction <add>, %0, %cst [1] : vector<128x32xf32> to vector<128xf32>
    %2 = vector.shape_cast %1 : vector<128xf32> to vector<128x1xf32>
    %cst_1 = arith.constant 3.200000e+01 : f32
    %3 = vector.broadcast %cst_1 : f32 to vector<128x1xf32>
    %4 = arith.divf %2, %3 : vector<128x1xf32>
    %5 = vector.broadcast %4 : vector<128x1xf32> to vector<128x32xf32>
    %6 = arith.subf %0, %5 : vector<128x32xf32>
    %7 = arith.mulf %6, %6 : vector<128x32xf32>
    %cst_2 = arith.constant dense<0.000000e+00> : vector<128xf32>
    %8 = vector.multi_reduction <add>, %7, %cst_2 [1] : vector<128x32xf32> to vector<128xf32>
    %9 = vector.shape_cast %8 : vector<128xf32> to vector<128x1xf32>
    %cst_3 = arith.constant 3.200000e+01 : f32
    %10 = vector.broadcast %cst_3 : f32 to vector<128x1xf32>
    %11 = arith.divf %9, %10 : vector<128x1xf32>
    %12 = vector.broadcast %4 : vector<128x1xf32> to vector<128x32xf32>
    %13 = arith.subf %0, %12 : vector<128x32xf32>
    %cst_4 = arith.constant 9.99999974E-6 : f32
    %14 = vector.broadcast %cst_4 : f32 to vector<128x1xf32>
    %15 = arith.addf %11, %14 : vector<128x1xf32>
    %16 = math.rsqrt %15 : vector<128x1xf32>
    %17 = vector.broadcast %16 : vector<128x1xf32> to vector<128x32xf32>
    %18 = arith.mulf %13, %17 : vector<128x32xf32>
    %c0_5 = arith.constant 0 : index
    %c0_6 = arith.constant 0 : index
    %19 = vector.load %arg2[%c0_5, %c0_6] : memref<1x32xf32, #tpu.memory_space<vmem>>, vector<1x32xf32>
    %20 = vector.broadcast %19 : vector<1x32xf32> to vector<128x32xf32>
    %21 = arith.mulf %18, %20 : vector<128x32xf32>
    %c0_7 = arith.constant 0 : index
    %c0_8 = arith.constant 0 : index
    %22 = vector.load %arg3[%c0_7, %c0_8] : memref<1x32xf32, #tpu.memory_space<vmem>>, vector<1x32xf32>
    %23 = vector.broadcast %22 : vector<1x32xf32> to vector<128x32xf32>
    %24 = arith.addf %21, %23 : vector<128x32xf32>
    %c0_9 = arith.constant 0 : index
    %c0_10 = arith.constant 0 : index
    %25 = vector.load %arg4[%c0_9, %c0_10] : memref<32x96xf32, #tpu.memory_space<vmem>>, vector<32x96xf32>
    %cst_11 = arith.constant dense<0.000000e+00> : vector<128x96xf32>
    %26 = tpu.matmul %24, %25, %cst_11 {dimension_numbers = #tpu.dot_dimension_numbers<[1], [0], [0], [1], [0, 0, 1, 1], [], []>} : vector<128x32xf32>, vector<32x96xf32>, vector<128x96xf32> -> vector<128x96xf32>
    %c0_12 = arith.constant 0 : index
    %c0_13 = arith.constant 0 : index
    %27 = vector.load %arg5[%c0_12, %c0_13] : memref<1x96xf32, #tpu.memory_space<vmem>>, vector<1x96xf32>
    %28 = vector.broadcast %27 : vector<1x96xf32> to vector<128x96xf32>
    %29 = arith.addf %26, %28 : vector<128x96xf32>
    %30 = vector.extract_strided_slice %29 {offsets = [0, 0], sizes = [128, 32], strides = [1, 1]} : vector<128x96xf32> to vector<128x32xf32>
    %31 = vector.extract_strided_slice %29 {offsets = [0, 32], sizes = [128, 32], strides = [1, 1]} : vector<128x96xf32> to vector<128x32xf32>
    %32 = vector.extract_strided_slice %29 {offsets = [0, 64], sizes = [128, 32], strides = [1, 1]} : vector<128x96xf32> to vector<128x32xf32>
    %c0_14 = arith.constant 0 : index
    %c0_15 = arith.constant 0 : index
    %33 = vector.load %arg7[%c0_14, %c0_15] : memref<512x32xf32, #tpu.memory_space<vmem>>, vector<512x32xf32>
    %34 = tpu.concatenate %31, %31, %31, %31 in 0 : vector<128x32xf32>, vector<128x32xf32>, vector<128x32xf32>, vector<128x32xf32> -> vector<512x32xf32>
    %35 = arith.mulf %34, %33 : vector<512x32xf32>
    %36 = tpu.concatenate %32, %32, %32, %32 in 0 : vector<128x32xf32>, vector<128x32xf32>, vector<128x32xf32>, vector<128x32xf32> -> vector<512x32xf32>
    %37 = arith.mulf %36, %33 : vector<512x32xf32>
    "tpu.trace_start"() <{level = 10 : i32, message = "mc,nc->mn"}> : () -> ()
    %cst_16 = arith.constant dense<0.000000e+00> : vector<128x512xf32>
    %38 = tpu.matmul %30, %35, %cst_16 {dimension_numbers = #tpu.dot_dimension_numbers<[1], [1], [0], [0], [0, 0, 1, 0], [], []>} : vector<128x32xf32>, vector<512x32xf32>, vector<128x512xf32> -> vector<128x512xf32>
    "tpu.trace_stop"() : () -> ()
    %c0_17 = arith.constant 0 : index
    %c0_18 = arith.constant 0 : index
    %39 = vector.load %arg6[%c0_17, %c0_18] : memref<128x512xf32, #tpu.memory_space<vmem>>, vector<128x512xf32>
    %40 = arith.addf %38, %39 : vector<128x512xf32>
    %41 = math.exp %40 : vector<128x512xf32>
    %c0_19 = arith.constant 0 : index
    %c0_20 = arith.constant 0 : index
    %42 = vector.load %arg8[%c0_19, %c0_20] : memref<512x4xf32, #tpu.memory_space<vmem>>, vector<512x4xf32>
    %cst_21 = arith.constant dense<0.000000e+00> : vector<128x4xf32>
    %43 = tpu.matmul %41, %42, %cst_21 {dimension_numbers = #tpu.dot_dimension_numbers<[1], [0], [0], [1], [0, 0, 1, 1], [], []>} : vector<128x512xf32>, vector<512x4xf32>, vector<128x4xf32> -> vector<128x4xf32>
    %44 = tpu.reciprocal %43 : vector<128x4xf32> -> vector<128x4xf32>
    %cst_22 = arith.constant dense<0.000000e+00> : vector<128x32xf32>
    %45 = tpu.matmul %41, %37, %cst_22 {dimension_numbers = #tpu.dot_dimension_numbers<[1], [0], [0], [1], [0, 0, 1, 1], [], []>} : vector<128x512xf32>, vector<512x32xf32>, vector<128x32xf32> -> vector<128x32xf32>
    %c0_23 = arith.constant 0 : index
    %c0_24 = arith.constant 0 : index
    %46 = vector.load %arg9[%c0_23, %c0_24] : memref<4x32xf32, #tpu.memory_space<vmem>>, vector<4x32xf32>
    %cst_25 = arith.constant dense<0.000000e+00> : vector<128x32xf32>
    %47 = tpu.matmul %44, %46, %cst_25 {dimension_numbers = #tpu.dot_dimension_numbers<[1], [0], [0], [1], [0, 0, 1, 1], [], []>} : vector<128x4xf32>, vector<4x32xf32>, vector<128x32xf32> -> vector<128x32xf32>
    %48 = arith.mulf %45, %47 : vector<128x32xf32>
    %c0_26 = arith.constant 0 : index
    %c0_27 = arith.constant 0 : index
    %49 = vector.load %arg10[%c0_26, %c0_27] : memref<32x32xf32, #tpu.memory_space<vmem>>, vector<32x32xf32>
    %cst_28 = arith.constant dense<0.000000e+00> : vector<128x32xf32>
    %50 = tpu.matmul %48, %49, %cst_28 {dimension_numbers = #tpu.dot_dimension_numbers<[1], [0], [0], [1], [0, 0, 1, 1], [], []>} : vector<128x32xf32>, vector<32x32xf32>, vector<128x32xf32> -> vector<128x32xf32>
    %c0_29 = arith.constant 0 : index
    %c0_30 = arith.constant 0 : index
    %51 = vector.load %arg11[%c0_29, %c0_30] : memref<1x32xf32, #tpu.memory_space<vmem>>, vector<1x32xf32>
    %52 = vector.broadcast %51 : vector<1x32xf32> to vector<128x32xf32>
    %53 = arith.addf %50, %52 : vector<128x32xf32>
    %54 = arith.addf %0, %53 : vector<128x32xf32>
    %cst_31 = arith.constant dense<0.000000e+00> : vector<128xf32>
    %55 = vector.multi_reduction <add>, %54, %cst_31 [1] : vector<128x32xf32> to vector<128xf32>
    %56 = vector.shape_cast %55 : vector<128xf32> to vector<128x1xf32>
    %cst_32 = arith.constant 3.200000e+01 : f32
    %57 = vector.broadcast %cst_32 : f32 to vector<128x1xf32>
    %58 = arith.divf %56, %57 : vector<128x1xf32>
    %59 = vector.broadcast %58 : vector<128x1xf32> to vector<128x32xf32>
    %60 = arith.subf %54, %59 : vector<128x32xf32>
    %61 = arith.mulf %60, %60 : vector<128x32xf32>
    %cst_33 = arith.constant dense<0.000000e+00> : vector<128xf32>
    %62 = vector.multi_reduction <add>, %61, %cst_33 [1] : vector<128x32xf32> to vector<128xf32>
    %63 = vector.shape_cast %62 : vector<128xf32> to vector<128x1xf32>
    %cst_34 = arith.constant 3.200000e+01 : f32
    %64 = vector.broadcast %cst_34 : f32 to vector<128x1xf32>
    %65 = arith.divf %63, %64 : vector<128x1xf32>
    %66 = vector.broadcast %58 : vector<128x1xf32> to vector<128x32xf32>
    %67 = arith.subf %54, %66 : vector<128x32xf32>
    %cst_35 = arith.constant 9.99999974E-6 : f32
    %68 = vector.broadcast %cst_35 : f32 to vector<128x1xf32>
    %69 = arith.addf %65, %68 : vector<128x1xf32>
    %70 = math.rsqrt %69 : vector<128x1xf32>
    %71 = vector.broadcast %70 : vector<128x1xf32> to vector<128x32xf32>
    %72 = arith.mulf %67, %71 : vector<128x32xf32>
    %c0_36 = arith.constant 0 : index
    %c0_37 = arith.constant 0 : index
    %73 = vector.load %arg12[%c0_36, %c0_37] : memref<1x32xf32, #tpu.memory_space<vmem>>, vector<1x32xf32>
    %74 = vector.broadcast %73 : vector<1x32xf32> to vector<128x32xf32>
    %75 = arith.mulf %72, %74 : vector<128x32xf32>
    %c0_38 = arith.constant 0 : index
    %c0_39 = arith.constant 0 : index
    %76 = vector.load %arg13[%c0_38, %c0_39] : memref<1x32xf32, #tpu.memory_space<vmem>>, vector<1x32xf32>
    %77 = vector.broadcast %76 : vector<1x32xf32> to vector<128x32xf32>
    %78 = arith.addf %75, %77 : vector<128x32xf32>
    %c0_40 = arith.constant 0 : index
    %c0_41 = arith.constant 0 : index
    %79 = vector.load %arg14[%c0_40, %c0_41] : memref<32x128xf32, #tpu.memory_space<vmem>>, vector<32x128xf32>
    %cst_42 = arith.constant dense<0.000000e+00> : vector<128x128xf32>
    %80 = tpu.matmul %78, %79, %cst_42 {dimension_numbers = #tpu.dot_dimension_numbers<[1], [0], [0], [1], [0, 0, 1, 1], [], []>} : vector<128x32xf32>, vector<32x128xf32>, vector<128x128xf32> -> vector<128x128xf32>
    %c0_43 = arith.constant 0 : index
    %c0_44 = arith.constant 0 : index
    %81 = vector.load %arg15[%c0_43, %c0_44] : memref<1x128xf32, #tpu.memory_space<vmem>>, vector<1x128xf32>
    %82 = vector.broadcast %81 : vector<1x128xf32> to vector<128x128xf32>
    %83 = arith.addf %80, %82 : vector<128x128xf32>
    %84 = arith.mulf %83, %83 : vector<128x128xf32>
    %85 = arith.mulf %83, %84 : vector<128x128xf32>
    %cst_45 = arith.constant 4.471500e-02 : f32
    %86 = vector.broadcast %cst_45 : f32 to vector<128x128xf32>
    %87 = arith.mulf %86, %85 : vector<128x128xf32>
    %88 = arith.addf %83, %87 : vector<128x128xf32>
    %cst_46 = arith.constant 0.797884583 : f32
    %89 = vector.broadcast %cst_46 : f32 to vector<128x128xf32>
    %90 = arith.mulf %89, %88 : vector<128x128xf32>
    %91 = math.tanh %90 : vector<128x128xf32>
    %cst_47 = arith.constant 1.000000e+00 : f32
    %92 = vector.broadcast %cst_47 : f32 to vector<128x128xf32>
    %93 = arith.addf %92, %91 : vector<128x128xf32>
    %cst_48 = arith.constant 5.000000e-01 : f32
    %94 = vector.broadcast %cst_48 : f32 to vector<128x128xf32>
    %95 = arith.mulf %94, %93 : vector<128x128xf32>
    %96 = arith.mulf %83, %95 : vector<128x128xf32>
    %c0_49 = arith.constant 0 : index
    %c0_50 = arith.constant 0 : index
    %97 = vector.load %arg16[%c0_49, %c0_50] : memref<128x32xf32, #tpu.memory_space<vmem>>, vector<128x32xf32>
    %cst_51 = arith.constant dense<0.000000e+00> : vector<128x32xf32>
    %98 = tpu.matmul %96, %97, %cst_51 {dimension_numbers = #tpu.dot_dimension_numbers<[1], [0], [0], [1], [0, 0, 1, 1], [], []>} : vector<128x128xf32>, vector<128x32xf32>, vector<128x32xf32> -> vector<128x32xf32>
    %c0_52 = arith.constant 0 : index
    %c0_53 = arith.constant 0 : index
    %99 = vector.load %arg17[%c0_52, %c0_53] : memref<1x32xf32, #tpu.memory_space<vmem>>, vector<1x32xf32>
    %100 = vector.broadcast %99 : vector<1x32xf32> to vector<128x32xf32>
    %101 = arith.addf %98, %100 : vector<128x32xf32>
    %102 = arith.addf %54, %101 : vector<128x32xf32>
    %c0_54 = arith.constant 0 : index
    %c0_55 = arith.constant 0 : index
    %103 = vector.load %arg18[%c0_54, %c0_55] : memref<128x32xf32, #tpu.memory_space<vmem>>, vector<128x32xf32>
    tpu.vector_store %arg18[%c0_54, %c0_55], %102 {strides = array<i32>} : memref<128x32xf32, #tpu.memory_space<vmem>>, vector<128x32xf32>,
    return
  }
  func.func @transform_0(%arg0: i32) -> (i32, i32) {
    %c0_i32 = arith.constant 0 : i32
    %c0_i32_0 = arith.constant 0 : i32
    %c0_i32_1 = arith.constant 0 : i32
    return %c0_i32, %c0_i32_0 : i32, i32
  }
  func.func @transform_1(%arg0: i32) -> (i32, i32) {
    %c0_i32 = arith.constant 0 : i32
    %c0_i32_0 = arith.constant 0 : i32
    %c0_i32_1 = arith.constant 0 : i32
    return %c0_i32, %c0_i32_0 : i32, i32
  }
  func.func @transform_2(%arg0: i32) -> (i32, i32) {
    %c0_i32 = arith.constant 0 : i32
    %c0_i32_0 = arith.constant 0 : i32
    %c0_i32_1 = arith.constant 0 : i32
    return %c0_i32, %c0_i32_0 : i32, i32
  }
  func.func @transform_3(%arg0: i32) -> (i32, i32) {
    %c0_i32 = arith.constant 0 : i32
    %c0_i32_0 = arith.constant 0 : i32
    %c0_i32_1 = arith.constant 0 : i32
    return %c0_i32, %c0_i32_0 : i32, i32
  }
  func.func @transform_4(%arg0: i32) -> (i32, i32) {
    %c0_i32 = arith.constant 0 : i32
    %c0_i32_0 = arith.constant 0 : i32
    %c0_i32_1 = arith.constant 0 : i32
    return %c0_i32, %c0_i32_0 : i32, i32
  }
  func.func @transform_5(%arg0: i32) -> (i32, i32) {
    %c0_i32 = arith.constant 0 : i32
    %c0_i32_0 = arith.constant 0 : i32
    %c0_i32_1 = arith.constant 0 : i32
    return %c0_i32, %c0_i32_0 : i32, i32
  }
  func.func @transform_6(%arg0: i32) -> (i32, i32) {
    %c0_i32 = arith.constant 0 : i32
    %c0_i32_0 = arith.constant 0 : i32
    %c0_i32_1 = arith.constant 0 : i32
    return %c0_i32, %c0_i32_0 : i32, i32
  }
  func.func @transform_7(%arg0: i32) -> (i32, i32) {
    %c0_i32 = arith.constant 0 : i32
    %c0_i32_0 = arith.constant 0 : i32
    %c0_i32_1 = arith.constant 0 : i32
    return %c0_i32, %c0_i32_0 : i32, i32
  }
  func.func @transform_8(%arg0: i32) -> (i32, i32) {
    %c0_i32 = arith.constant 0 : i32
    %c0_i32_0 = arith.constant 0 : i32
    %c0_i32_1 = arith.constant 0 : i32
    return %c0_i32, %c0_i32_0 : i32, i32
  }
  func.func @transform_9(%arg0: i32) -> (i32, i32) {
    %c0_i32 = arith.constant 0 : i32
    %c0_i32_0 = arith.constant 0 : i32
    %c0_i32_1 = arith.constant 0 : i32
    return %c0_i32, %c0_i32_0 : i32, i32
  }
  func.func @transform_10(%arg0: i32) -> (i32, i32) {
    %c0_i32 = arith.constant 0 : i32
    %c0_i32_0 = arith.constant 0 : i32
    %c0_i32_1 = arith.constant 0 : i32
    return %c0_i32, %c0_i32_0 : i32, i32
  }
  func.func @transform_11(%arg0: i32) -> (i32, i32) {
    %c0_i32 = arith.constant 0 : i32
    %c0_i32_0 = arith.constant 0 : i32
    %c0_i32_1 = arith.constant 0 : i32
    return %c0_i32, %c0_i32_0 : i32, i32
  }
  func.func @transform_12(%arg0: i32) -> (i32, i32) {
    %c0_i32 = arith.constant 0 : i32
    %c0_i32_0 = arith.constant 0 : i32
    %c0_i32_1 = arith.constant 0 : i32
    return %c0_i32, %c0_i32_0 : i32, i32
  }
  func.func @transform_13(%arg0: i32) -> (i32, i32) {
    %c0_i32 = arith.constant 0 : i32
    %c0_i32_0 = arith.constant 0 : i32
    %c0_i32_1 = arith.constant 0 : i32
    return %c0_i32, %c0_i32_0 : i32, i32
  }
  func.func @transform_14(%arg0: i32) -> (i32, i32) {
    %c0_i32 = arith.constant 0 : i32
    %c0_i32_0 = arith.constant 0 : i32
    %c0_i32_1 = arith.constant 0 : i32
    return %c0_i32, %c0_i32_0 : i32, i32
  }
  func.func @transform_15(%arg0: i32) -> (i32, i32) {
    %c0_i32 = arith.constant 0 : i32
    %c0_i32_0 = arith.constant 0 : i32
    %c0_i32_1 = arith.constant 0 : i32
    return %c0_i32, %c0_i32_0 : i32, i32
  }
  func.func @transform_16(%arg0: i32) -> (i32, i32) {
    %c0_i32 = arith.constant 0 : i32
    %c0_i32_0 = arith.constant 0 : i32
    %c0_i32_1 = arith.constant 0 : i32
    return %c0_i32, %c0_i32_0 : i32, i32
  }
  func.func @transform_17(%arg0: i32) -> (i32, i32) {
    %c0_i32 = arith.constant 0 : i32
    %c0_i32_0 = arith.constant 0 : i32
    %c0_i32_1 = arith.constant 0 : i32
    return %c0_i32, %c0_i32_0 : i32, i32
  }
}

</mosaic_0001>

<llo_original>
// kernel: tpu_custom_call.1
$region0: #{tpu_custom_call.1}
  #allocation0 [shape = 'u32[]', space=smem, size = 0x4, offset = 0x4, fixed_abs, tag = 'smem constant byte address 0x4 - core index']
  #allocation1 [shape = 'u32[144,128]{1,0:T(1,128)}', space=vmem, size = 0x12000, scoped, tag = 'internal scratch']
  %s0 = inlined_call_operand.vmem [shape: f32[128,32], index: 0, kind: input, shape index: {}]
  %s1 = inlined_call_operand.vmem [shape: f32[1,32], index: 1, kind: input, shape index: {}]
  %s2 = inlined_call_operand.vmem [shape: f32[1,32], index: 2, kind: input, shape index: {}]
  %s3 = inlined_call_operand.vmem [shape: f32[32,96], index: 3, kind: input, shape index: {}]
  %s4 = inlined_call_operand.vmem [shape: f32[1,96], index: 4, kind: input, shape index: {}]
  %s5 = inlined_call_operand.vmem [shape: f32[128,512], index: 5, kind: input, shape index: {}]
  %s6 = inlined_call_operand.vmem [shape: f32[512,32], index: 6, kind: input, shape index: {}]
  %s7 = inlined_call_operand.vmem [shape: f32[512,4], index: 7, kind: input, shape index: {}]
  %s8 = inlined_call_operand.vmem [shape: f32[4,32], index: 8, kind: input, shape index: {}]
  %s9 = inlined_call_operand.vmem [shape: f32[32,32], index: 9, kind: input, shape index: {}]
  %s10 = inlined_call_operand.vmem [shape: f32[1,32], index: 10, kind: input, shape index: {}]
  %s11 = inlined_call_operand.vmem [shape: f32[1,32], index: 11, kind: input, shape index: {}]
  %s12 = inlined_call_operand.vmem [shape: f32[1,32], index: 12, kind: input, shape index: {}]
  %s13 = inlined_call_operand.vmem [shape: f32[32,128], index: 13, kind: input, shape index: {}]
  %s14 = inlined_call_operand.vmem [shape: f32[1,128], index: 14, kind: input, shape index: {}]
  %s15 = inlined_call_operand.vmem [shape: f32[128,32], index: 15, kind: input, shape index: {}]
  %s16 = inlined_call_operand.vmem [shape: f32[1,32], index: 16, kind: input, shape index: {}]
  %s17 = inlined_call_operand.vmem [shape: f32[128,32], index: 17, kind: output, shape index: {}]
  %s18 = sld [smem:[#allocation0]]
  $region78: #{tpu_custom_call.1} parent=0
    _
  %s20 = ssub.s32 1, %s18
  %s21 = scalar_select 0, %s20, %s18
  // Predicated region
  $region2: #{tpu_custom_call.1} parent=0 // pred_check
    _
  $region3: #{tpu_custom_call.1} parent=0 // pred_check_branch
    %23 = sbr.rel (0) target = $region5
  $region4: #{tpu_custom_call.1} parent=0 // pred_region
    _
  $region5: #{tpu_custom_call.1} parent=0 // pred_fallthru
    _
  // Predicated region
  $region6: #{tpu_custom_call.1} parent=0 // pred_check
    _
  $region7: #{tpu_custom_call.1} parent=0 // pred_check_branch
    %25 = sbr.rel (0) target = $region9
  $region8: #{tpu_custom_call.1} parent=0 // pred_region
    _
  $region9: #{tpu_custom_call.1} parent=0 // pred_fallthru
    _
  // Predicated region
  $region10: #{tpu_custom_call.1} parent=0 // pred_check
    _
  $region11: #{tpu_custom_call.1} parent=0 // pred_check_branch
    %27 = sbr.rel (0) target = $region13
  $region12: #{tpu_custom_call.1} parent=0 // pred_region
    _
  $region13: #{tpu_custom_call.1} parent=0 // pred_fallthru
    _
  // Predicated region
  $region14: #{tpu_custom_call.1} parent=0 // pred_check
    _
  $region15: #{tpu_custom_call.1} parent=0 // pred_check_branch
    %29 = sbr.rel (0) target = $region17
  $region16: #{tpu_custom_call.1} parent=0 // pred_region
    _
  $region17: #{tpu_custom_call.1} parent=0 // pred_fallthru
    _
  // Predicated region
  $region18: #{tpu_custom_call.1} parent=0 // pred_check
    _
  $region19: #{tpu_custom_call.1} parent=0 // pred_check_branch
    %31 = sbr.rel (0) target = $region21
  $region20: #{tpu_custom_call.1} parent=0 // pred_region
    _
  $region21: #{tpu_custom_call.1} parent=0 // pred_fallthru
    _
  // Predicated region
  $region22: #{tpu_custom_call.1} parent=0 // pred_check
    _
  $region23: #{tpu_custom_call.1} parent=0 // pred_check_branch
    %33 = sbr.rel (0) target = $region25
  $region24: #{tpu_custom_call.1} parent=0 // pred_region
    _
  $region25: #{tpu_custom_call.1} parent=0 // pred_fallthru
    _
  // Predicated region
  $region26: #{tpu_custom_call.1} parent=0 // pred_check
    _
  $region27: #{tpu_custom_call.1} parent=0 // pred_check_branch
    %35 = sbr.rel (0) target = $region29
  $region28: #{tpu_custom_call.1} parent=0 // pred_region
    _
  $region29: #{tpu_custom_call.1} parent=0 // pred_fallthru
    _
  // Predicated region
  $region30: #{tpu_custom_call.1} parent=0 // pred_check
    _
  $region31: #{tpu_custom_call.1} parent=0 // pred_check_branch
    %37 = sbr.rel (0) target = $region33
  $region32: #{tpu_custom_call.1} parent=0 // pred_region
    _
  $region33: #{tpu_custom_call.1} parent=0 // pred_fallthru
    _
  // Predicated region
  $region34: #{tpu_custom_call.1} parent=0 // pred_check
    _
  $region35: #{tpu_custom_call.1} parent=0 // pred_check_branch
    %39 = sbr.rel (0) target = $region37
  $region36: #{tpu_custom_call.1} parent=0 // pred_region
    _
  $region37: #{tpu_custom_call.1} parent=0 // pred_fallthru
    _
  // Predicated region
  $region38: #{tpu_custom_call.1} parent=0 // pred_check
    _
  $region39: #{tpu_custom_call.1} parent=0 // pred_check_branch
    %41 = sbr.rel (0) target = $region41
  $region40: #{tpu_custom_call.1} parent=0 // pred_region
    _
  $region41: #{tpu_custom_call.1} parent=0 // pred_fallthru
    _
  // Predicated region
  $region42: #{tpu_custom_call.1} parent=0 // pred_check
    _
  $region43: #{tpu_custom_call.1} parent=0 // pred_check_branch
    %43 = sbr.rel (0) target = $region45
  $region44: #{tpu_custom_call.1} parent=0 // pred_region
    _
  $region45: #{tpu_custom_call.1} parent=0 // pred_fallthru
    _
  // Predicated region
  $region46: #{tpu_custom_call.1} parent=0 // pred_check
    _
  $region47: #{tpu_custom_call.1} parent=0 // pred_check_branch
    %45 = sbr.rel (0) target = $region49
  $region48: #{tpu_custom_call.1} parent=0 // pred_region
    _
  $region49: #{tpu_custom_call.1} parent=0 // pred_fallthru
    _
  // Predicated region
  $region50: #{tpu_custom_call.1} parent=0 // pred_check
    _
  $region51: #{tpu_custom_call.1} parent=0 // pred_check_branch
    %47 = sbr.rel (0) target = $region53
  $region52: #{tpu_custom_call.1} parent=0 // pred_region
    _
  $region53: #{tpu_custom_call.1} parent=0 // pred_fallthru
    _
  // Predicated region
  $region54: #{tpu_custom_call.1} parent=0 // pred_check
    _
  $region55: #{tpu_custom_call.1} parent=0 // pred_check_branch
    %49 = sbr.rel (0) target = $region57
  $region56: #{tpu_custom_call.1} parent=0 // pred_region
    _
  $region57: #{tpu_custom_call.1} parent=0 // pred_fallthru
    _
  // Predicated region
  $region58: #{tpu_custom_call.1} parent=0 // pred_check
    _
  $region59: #{tpu_custom_call.1} parent=0 // pred_check_branch
    %51 = sbr.rel (0) target = $region61
  $region60: #{tpu_custom_call.1} parent=0 // pred_region
    _
  $region61: #{tpu_custom_call.1} parent=0 // pred_fallthru
    _
  // Predicated region
  $region62: #{tpu_custom_call.1} parent=0 // pred_check
    _
  $region63: #{tpu_custom_call.1} parent=0 // pred_check_branch
    %53 = sbr.rel (0) target = $region65
  $region64: #{tpu_custom_call.1} parent=0 // pred_region
    _
  $region65: #{tpu_custom_call.1} parent=0 // pred_fallthru
    _
  // Predicated region
  $region66: #{tpu_custom_call.1} parent=0 // pred_check
    _
  $region67: #{tpu_custom_call.1} parent=0 // pred_check_branch
    %55 = sbr.rel (0) target = $region69
  $region68: #{tpu_custom_call.1} parent=0 // pred_region
    _
  $region69: #{tpu_custom_call.1} parent=0 // pred_fallthru
    _
  %v56 = vld [vmem:[%s0] sm:$0xff]
  %v57 = vld [vmem:[%s0 + $0x8] sm:$0xff]
  %v58 = vld [vmem:[%s0 + $0x10] sm:$0xff]
  %v59 = vld [vmem:[%s0 + $0x18] sm:$0xff]
  %v60 = vld [vmem:[%s0 + $0x20] sm:$0xff]
  %v61 = vld [vmem:[%s0 + $0x28] sm:$0xff]
  %v62 = vld [vmem:[%s0 + $0x30] sm:$0xff]
  %v63 = vld [vmem:[%s0 + $0x38] sm:$0xff]
  %v64 = vld [vmem:[%s0 + $0x40] sm:$0xff]
  %v65 = vld [vmem:[%s0 + $0x48] sm:$0xff]
  %v66 = vld [vmem:[%s0 + $0x50] sm:$0xff]
  %v67 = vld [vmem:[%s0 + $0x58] sm:$0xff]
  %v68 = vld [vmem:[%s0 + $0x60] sm:$0xff]
  %v69 = vld [vmem:[%s0 + $0x68] sm:$0xff]
  %v70 = vld [vmem:[%s0 + $0x70] sm:$0xff]
  %v71 = vld [vmem:[%s0 + $0x78] sm:$0xff]
  %vm72 = vcmask 261120
  %v73 = vsel %vm72, %v56, 0.0
  %74 = vadd.xlane.f32.xlu0 %v73
  %v75 = vpop.xlane.xlu0 %74
  %v76 = vsel %vm72, %v57, 0.0
  %77 = vadd.xlane.f32.xlu0 %v76
  %v78 = vpop.xlane.xlu0 %77
  %v79 = vsel %vm72, %v58, 0.0
  %80 = vadd.xlane.f32.xlu0 %v79
  %v81 = vpop.xlane.xlu0 %80
  %v82 = vsel %vm72, %v59, 0.0
  %83 = vadd.xlane.f32.xlu0 %v82
  %v84 = vpop.xlane.xlu0 %83
  %v85 = vsel %vm72, %v60, 0.0
  %86 = vadd.xlane.f32.xlu0 %v85
  %v87 = vpop.xlane.xlu0 %86
  %v88 = vsel %vm72, %v61, 0.0
  %89 = vadd.xlane.f32.xlu0 %v88
  %v90 = vpop.xlane.xlu0 %89
  %v91 = vsel %vm72, %v62, 0.0
  %92 = vadd.xlane.f32.xlu0 %v91
  %v93 = vpop.xlane.xlu0 %92
  %v94 = vsel %vm72, %v63, 0.0
  %95 = vadd.xlane.f32.xlu0 %v94
  %v96 = vpop.xlane.xlu0 %95
  %v97 = vsel %vm72, %v64, 0.0
  %98 = vadd.xlane.f32.xlu0 %v97
  %v99 = vpop.xlane.xlu0 %98
  %v100 = vsel %vm72, %v65, 0.0
  %101 = vadd.xlane.f32.xlu0 %v100
  %v102 = vpop.xlane.xlu0 %101
  %v103 = vsel %vm72, %v66, 0.0
  %104 = vadd.xlane.f32.xlu0 %v103
  %v105 = vpop.xlane.xlu0 %104
  %v106 = vsel %vm72, %v67, 0.0
  %107 = vadd.xlane.f32.xlu0 %v106
  %v108 = vpop.xlane.xlu0 %107
  %v109 = vsel %vm72, %v68, 0.0
  %110 = vadd.xlane.f32.xlu0 %v109
  %v111 = vpop.xlane.xlu0 %110
  %v112 = vsel %vm72, %v69, 0.0
  %113 = vadd.xlane.f32.xlu0 %v112
  %v114 = vpop.xlane.xlu0 %113
  %v115 = vsel %vm72, %v70, 0.0
  %116 = vadd.xlane.f32.xlu0 %v115
  %v117 = vpop.xlane.xlu0 %116
  %v118 = vsel %vm72, %v71, 0.0
  %119 = vadd.xlane.f32.xlu0 %v118
  %v120 = vpop.xlane.xlu0 %119
  %v121 = vrcp.pop 32.0
  %v122 = vmul.f32 %v75, %v121
  %v123 = vmul.f32 %v78, %v121
  %v124 = vmul.f32 %v81, %v121
  %v125 = vmul.f32 %v84, %v121
  %v126 = vmul.f32 %v87, %v121
  %v127 = vmul.f32 %v90, %v121
  %v128 = vmul.f32 %v93, %v121
  %v129 = vmul.f32 %v96, %v121
  %v130 = vmul.f32 %v99, %v121
  %v131 = vmul.f32 %v102, %v121
  %v132 = vmul.f32 %v105, %v121
  %v133 = vmul.f32 %v108, %v121
  %v134 = vmul.f32 %v111, %v121
  %v135 = vmul.f32 %v114, %v121
  %v136 = vmul.f32 %v117, %v121
  %v137 = vmul.f32 %v120, %v121
  %v138 = vsub.f32 %v56, %v122
  %v139 = vsub.f32 %v57, %v123
  %v140 = vsub.f32 %v58, %v124
  %v141 = vsub.f32 %v59, %v125
  %v142 = vsub.f32 %v60, %v126
  %v143 = vsub.f32 %v61, %v127
  %v144 = vsub.f32 %v62, %v128
  %v145 = vsub.f32 %v63, %v129
  %v146 = vsub.f32 %v64, %v130
  %v147 = vsub.f32 %v65, %v131
  %v148 = vsub.f32 %v66, %v132
  %v149 = vsub.f32 %v67, %v133
  %v150 = vsub.f32 %v68, %v134
  %v151 = vsub.f32 %v69, %v135
  %v152 = vsub.f32 %v70, %v136
  %v153 = vsub.f32 %v71, %v137
  %v154 = vmul.f32 %v138, %v138
  %v155 = vmul.f32 %v139, %v139
  %v156 = vmul.f32 %v140, %v140
  %v157 = vmul.f32 %v141, %v141
  %v158 = vmul.f32 %v142, %v142
  %v159 = vmul.f32 %v143, %v143
  %v160 = vmul.f32 %v144, %v144
  %v161 = vmul.f32 %v145, %v145
  %v162 = vmul.f32 %v146, %v146
  %v163 = vmul.f32 %v147, %v147
  %v164 = vmul.f32 %v148, %v148
  %v165 = vmul.f32 %v149, %v149
  %v166 = vmul.f32 %v150, %v150
  %v167 = vmul.f32 %v151, %v151
  %v168 = vmul.f32 %v152, %v152
  %v169 = vmul.f32 %v153, %v153
  %v170 = vsel %vm72, %v154, 0.0
  %171 = vadd.xlane.f32.xlu0 %v170
  %v172 = vpop.xlane.xlu0 %171
  %v173 = vsel %vm72, %v155, 0.0
  %174 = vadd.xlane.f32.xlu0 %v173
  %v175 = vpop.xlane.xlu0 %174
  %v176 = vsel %vm72, %v156, 0.0
  %177 = vadd.xlane.f32.xlu0 %v176
  %v178 = vpop.xlane.xlu0 %177
  %v179 = vsel %vm72, %v157, 0.0
  %180 = vadd.xlane.f32.xlu0 %v179
  %v181 = vpop.xlane.xlu0 %180
  %v182 = vsel %vm72, %v158, 0.0
  %183 = vadd.xlane.f32.xlu0 %v182
  %v184 = vpop.xlane.xlu0 %183
  %v185 = vsel %vm72, %v159, 0.0
  %186 = vadd.xlane.f32.xlu0 %v185
  %v187 = vpop.xlane.xlu0 %186
  %v188 = vsel %vm72, %v160, 0.0
  %189 = vadd.xlane.f32.xlu0 %v188
  %v190 = vpop.xlane.xlu0 %189
  %v191 = vsel %vm72, %v161, 0.0
  %192 = vadd.xlane.f32.xlu0 %v191
  %v193 = vpop.xlane.xlu0 %192
  %v194 = vsel %vm72, %v162, 0.0
  %195 = vadd.xlane.f32.xlu0 %v194
  %v196 = vpop.xlane.xlu0 %195
  %v197 = vsel %vm72, %v163, 0.0
  %198 = vadd.xlane.f32.xlu0 %v197
  %v199 = vpop.xlane.xlu0 %198
  %v200 = vsel %vm72, %v164, 0.0
  %201 = vadd.xlane.f32.xlu0 %v200
  %v202 = vpop.xlane.xlu0 %201
  %v203 = vsel %vm72, %v165, 0.0
  %204 = vadd.xlane.f32.xlu0 %v203
  %v205 = vpop.xlane.xlu0 %204
  %v206 = vsel %vm72, %v166, 0.0
  %207 = vadd.xlane.f32.xlu0 %v206
  %v208 = vpop.xlane.xlu0 %207
  %v209 = vsel %vm72, %v167, 0.0
  %210 = vadd.xlane.f32.xlu0 %v209
  %v211 = vpop.xlane.xlu0 %210
  %v212 = vsel %vm72, %v168, 0.0
  %213 = vadd.xlane.f32.xlu0 %v212
  %v214 = vpop.xlane.xlu0 %213
  %v215 = vsel %vm72, %v169, 0.0
  %216 = vadd.xlane.f32.xlu0 %v215
  %v217 = vpop.xlane.xlu0 %216
  %v218 = vmul.f32 %v172, %v121
  %v219 = vmul.f32 %v175, %v121
  %v220 = vmul.f32 %v178, %v121
  %v221 = vmul.f32 %v181, %v121
  %v222 = vmul.f32 %v184, %v121
  %v223 = vmul.f32 %v187, %v121
  %v224 = vmul.f32 %v190, %v121
  %v225 = vmul.f32 %v193, %v121
  %v226 = vmul.f32 %v196, %v121
  %v227 = vmul.f32 %v199, %v121
  %v228 = vmul.f32 %v202, %v121
  %v229 = vmul.f32 %v205, %v121
  %v230 = vmul.f32 %v208, %v121
  %v231 = vmul.f32 %v211, %v121
  %v232 = vmul.f32 %v214, %v121
  %v233 = vmul.f32 %v217, %v121
  %v234 = vadd.f32 %v218, 1e-05
  %v235 = vadd.f32 %v219, 1e-05
  %v236 = vadd.f32 %v220, 1e-05
  %v237 = vadd.f32 %v221, 1e-05
  %v238 = vadd.f32 %v222, 1e-05
  %v239 = vadd.f32 %v223, 1e-05
  %v240 = vadd.f32 %v224, 1e-05
  %v241 = vadd.f32 %v225, 1e-05
  %v242 = vadd.f32 %v226, 1e-05
  %v243 = vadd.f32 %v227, 1e-05
  %v244 = vadd.f32 %v228, 1e-05
  %v245 = vadd.f32 %v229, 1e-05
  %v246 = vadd.f32 %v230, 1e-05
  %v247 = vadd.f32 %v231, 1e-05
  %v248 = vadd.f32 %v232, 1e-05
  %v249 = vadd.f32 %v233, 1e-05
  %v250 = vrsqrt.pop %v234
  %v251 = vrsqrt.pop %v235
  %v252 = vrsqrt.pop %v236
  %v253 = vrsqrt.pop %v237
  %v254 = vrsqrt.pop %v238
  %v255 = vrsqrt.pop %v239
  %v256 = vrsqrt.pop %v240
  %v257 = vrsqrt.pop %v241
  %v258 = vrsqrt.pop %v242
  %v259 = vrsqrt.pop %v243
  %v260 = vrsqrt.pop %v244
  %v261 = vrsqrt.pop %v245
  %v262 = vrsqrt.pop %v246
  %v263 = vrsqrt.pop %v247
  %v264 = vrsqrt.pop %v248
  %v265 = vrsqrt.pop %v249
  %v266 = vmul.f32 %v138, %v250
  %v267 = vmul.f32 %v139, %v251
  %v268 = vmul.f32 %v140, %v252
  %v269 = vmul.f32 %v141, %v253
  %v270 = vmul.f32 %v142, %v254
  %v271 = vmul.f32 %v143, %v255
  %v272 = vmul.f32 %v144, %v256
  %v273 = vmul.f32 %v145, %v257
  %v274 = vmul.f32 %v146, %v258
  %v275 = vmul.f32 %v147, %v259
  %v276 = vmul.f32 %v148, %v260
  %v277 = vmul.f32 %v149, %v261
  %v278 = vmul.f32 %v150, %v262
  %v279 = vmul.f32 %v151, %v263
  %v280 = vmul.f32 %v152, %v264
  %v281 = vmul.f32 %v153, %v265
  %v282 = vld [vmem:[%s1] sm:$0x1]
  %v284 = vlaneseq
  %v285 = vshrl.u32 %v284, 7
  %v286 = vsub.s32 0, %v285
  %v287 = vrot.slane %v282, %v286
  %v289 = vmul.f32 %v266, %v287
  %v290 = vmul.f32 %v267, %v287
  %v291 = vmul.f32 %v268, %v287
  %v292 = vmul.f32 %v269, %v287
  %v293 = vmul.f32 %v270, %v287
  %v294 = vmul.f32 %v271, %v287
  %v295 = vmul.f32 %v272, %v287
  %v296 = vmul.f32 %v273, %v287
  %v297 = vmul.f32 %v274, %v287
  %v298 = vmul.f32 %v275, %v287
  %v299 = vmul.f32 %v276, %v287
  %v300 = vmul.f32 %v277, %v287
  %v301 = vmul.f32 %v278, %v287
  %v302 = vmul.f32 %v279, %v287
  %v303 = vmul.f32 %v280, %v287
  %v304 = vmul.f32 %v281, %v287
  %v305 = vld [vmem:[%s2] sm:$0x1]
  %v307 = vlaneseq
  %v308 = vshrl.u32 %v307, 7
  %v309 = vsub.s32 0, %v308
  %v310 = vrot.slane %v305, %v309
  %v312 = vadd.f32 %v289, %v310
  %v313 = vadd.f32 %v290, %v310
  %v314 = vadd.f32 %v291, %v310
  %v315 = vadd.f32 %v292, %v310
  %v316 = vadd.f32 %v293, %v310
  %v317 = vadd.f32 %v294, %v310
  %v318 = vadd.f32 %v295, %v310
  %v319 = vadd.f32 %v296, %v310
  %v320 = vadd.f32 %v297, %v310
  %v321 = vadd.f32 %v298, %v310
  %v322 = vadd.f32 %v299, %v310
  %v323 = vadd.f32 %v300, %v310
  %v324 = vadd.f32 %v301, %v310
  %v325 = vadd.f32 %v302, %v310
  %v326 = vadd.f32 %v303, %v310
  %v327 = vadd.f32 %v304, %v310
  %v328 = vld [vmem:[%s3] sm:$0xff]
  %v329 = vld [vmem:[%s3 + $0x8] sm:$0xff]
  %v330 = vld [vmem:[%s3 + $0x10] sm:$0xff]
  %v331 = vld [vmem:[%s3 + $0x18] sm:$0xff]
  %v332 = vld [vmem:[%s4] sm:$0x1]
  %v334 = vlaneseq
  %v335 = vshrl.u32 %v334, 7
  %v336 = vsub.s32 0, %v335
  %v337 = vrot.slane %v332, %v336
  %v340 = vsel %vm72, %v312, 0
  %v343 = vsel %vm72, %v313, 0
  %v346 = vsel %vm72, %v314, 0
  %v349 = vsel %vm72, %v315, 0
  %v352 = vsel %vm72, %v316, 0
  %v355 = vsel %vm72, %v317, 0
  %v358 = vsel %vm72, %v318, 0
  %v361 = vsel %vm72, %v319, 0
  %v364 = vsel %vm72, %v320, 0
  %v367 = vsel %vm72, %v321, 0
  %v370 = vsel %vm72, %v322, 0
  %v373 = vsel %vm72, %v323, 0
  %v376 = vsel %vm72, %v324, 0
  %v379 = vsel %vm72, %v325, 0
  %v382 = vsel %vm72, %v326, 0
  %v385 = vsel %vm72, %v327, 0
  %387 = vmatprep.subr.mxu0 0.0
  %388 = vmatpush1.msra.mxu0 %v328
  %389 = vmatprep.subr.mxu0 0.0
  %390 = vmatpush1.msra.mxu0 %v329
  %391 = vmatprep.subr.mxu0 0.0
  %392 = vmatpush1.msra.mxu0 %v330
  %393 = vmatprep.subr.mxu0 0.0
  %394 = vmatpush1.msra.mxu0 %v331
  %395 = vmatprep.subr.mxu0 0.0
  %396 = vmatpush1.msra.mxu0 0.0
  %397 = vmatprep.subr.mxu0 0.0
  %398 = vmatpush1.msra.mxu0 0.0
  %399 = vmatprep.subr.mxu0 0.0
  %400 = vmatpush1.msra.mxu0 0.0
  %401 = vmatprep.subr.mxu0 0.0
  %402 = vmatpush1.msra.mxu0 0.0
  %403 = vmatprep.subr.mxu0 0.0
  %404 = vmatpush1.msra.mxu0 0.0
  %405 = vmatprep.subr.mxu0 0.0
  %406 = vmatpush1.msra.mxu0 0.0
  %407 = vmatprep.subr.mxu0 0.0
  %408 = vmatpush1.msra.mxu0 0.0
  %409 = vmatprep.subr.mxu0 0.0
  %410 = vmatpush1.msra.mxu0 0.0
  %411 = vmatprep.subr.mxu0 0.0
  %412 = vmatpush1.msra.mxu0 0.0
  %413 = vmatprep.subr.mxu0 0.0
  %414 = vmatpush1.msra.mxu0 0.0
  %415 = vmatprep.subr.mxu0 0.0
  %416 = vmatpush1.msra.mxu0 0.0
  %417 = vmatprep.subr.mxu0 0.0
  %418 = vmatpush1.msra.mxu0 0.0
  %419 = vmatprep.subr.mxu0 0.0
  %420 = vmatpush1.msra.mxu0 0.0
  %421 = vmatprep.subr.mxu0 0.0
  %422 = vmatpush1.msra.mxu0 0.0
  %423 = vmatprep.subr.mxu0 0.0
  %424 = vmatpush1.msra.mxu0 0.0
  %425 = vmatprep.subr.mxu0 0.0
  %426 = vmatpush1.msra.mxu0 0.0
  %427 = vmatprep.subr.mxu0 0.0
  %428 = vmatpush1.msra.mxu0 0.0
  %429 = vmatprep.subr.mxu0 0.0
  %430 = vmatpush1.msra.mxu0 0.0
  %431 = vmatprep.subr.mxu0 0.0
  %432 = vmatpush1.msra.mxu0 0.0
  %433 = vmatprep.subr.mxu0 0.0
  %434 = vmatpush1.msra.mxu0 0.0
  %435 = vmatprep.subr.mxu0 0.0
  %436 = vmatpush1.msra.mxu0 0.0
  %437 = vmatprep.subr.mxu0 0.0
  %438 = vmatpush1.msra.mxu0 0.0
  %439 = vmatprep.subr.mxu0 0.0
  %440 = vmatpush1.msra.mxu0 0.0
  %441 = vmatprep.subr.mxu0 0.0
  %442 = vmatpush1.msra.mxu0 0.0
  %443 = vmatprep.subr.mxu0 0.0
  %444 = vmatpush1.msra.mxu0 0.0
  %445 = vmatprep.subr.mxu0 0.0
  %446 = vmatpush1.msra.mxu0 0.0
  %447 = vmatprep.subr.mxu0 0.0
  %448 = vmatpush1.msra.mxu0 0.0
  %449 = vmatprep.subr.mxu0 0.0
  %450 = vmatpush1.msra.mxu0 0.0
  %451 = vmatprep.mubr.f32.mxu0 0.0
  %452 = vmatmul.mubr.f32.gmra.mrb[0].mxu0 %v340
  %v453 = vpop.f32.mrb[0].mxu0
  %v454 = vadd.f32 %v337, %v453
  %v455 = vpop.f32.mrb[0].mxu0
  %456 = vmatprep.mubr.f32.mxu0 0.0
  %457 = vmatmul.mubr.f32.gmra.mrb[0].mxu0 %v343
  %v458 = vpop.f32.mrb[0].mxu0
  %v459 = vadd.f32 %v337, %v458
  %v460 = vpop.f32.mrb[0].mxu0
  %461 = vmatprep.mubr.f32.mxu0 0.0
  %462 = vmatmul.mubr.f32.gmra.mrb[0].mxu0 %v346
  %v463 = vpop.f32.mrb[0].mxu0
  %v464 = vadd.f32 %v337, %v463
  %v465 = vpop.f32.mrb[0].mxu0
  %466 = vmatprep.mubr.f32.mxu0 0.0
  %467 = vmatmul.mubr.f32.gmra.mrb[0].mxu0 %v349
  %v468 = vpop.f32.mrb[0].mxu0
  %v469 = vadd.f32 %v337, %v468
  %v470 = vpop.f32.mrb[0].mxu0
  %471 = vmatprep.mubr.f32.mxu0 0.0
  %472 = vmatmul.mubr.f32.gmra.mrb[0].mxu0 %v352
  %v473 = vpop.f32.mrb[0].mxu0
  %v474 = vadd.f32 %v337, %v473
  %v475 = vpop.f32.mrb[0].mxu0
  %476 = vmatprep.mubr.f32.mxu0 0.0
  %477 = vmatmul.mubr.f32.gmra.mrb[0].mxu0 %v355
  %v478 = vpop.f32.mrb[0].mxu0
  %v479 = vadd.f32 %v337, %v478
  %v480 = vpop.f32.mrb[0].mxu0
  %481 = vmatprep.mubr.f32.mxu0 0.0
  %482 = vmatmul.mubr.f32.gmra.mrb[0].mxu0 %v358
  %v483 = vpop.f32.mrb[0].mxu0
  %v484 = vadd.f32 %v337, %v483
  %v485 = vpop.f32.mrb[0].mxu0
  %486 = vmatprep.mubr.f32.mxu0 0.0
  %487 = vmatmul.mubr.f32.gmra.mrb[0].mxu0 %v361
  %v488 = vpop.f32.mrb[0].mxu0
  %v489 = vadd.f32 %v337, %v488
  %v490 = vpop.f32.mrb[0].mxu0
  %491 = vmatprep.mubr.f32.mxu0 0.0
  %492 = vmatmul.mubr.f32.gmra.mrb[0].mxu0 %v364
  %v493 = vpop.f32.mrb[0].mxu0
  %v494 = vadd.f32 %v337, %v493
  %v495 = vpop.f32.mrb[0].mxu0
  %496 = vmatprep.mubr.f32.mxu0 0.0
  %497 = vmatmul.mubr.f32.gmra.mrb[0].mxu0 %v367
  %v498 = vpop.f32.mrb[0].mxu0
  %v499 = vadd.f32 %v337, %v498
  %v500 = vpop.f32.mrb[0].mxu0
  %501 = vmatprep.mubr.f32.mxu0 0.0
  %502 = vmatmul.mubr.f32.gmra.mrb[0].mxu0 %v370
  %v503 = vpop.f32.mrb[0].mxu0
  %v504 = vadd.f32 %v337, %v503
  %v505 = vpop.f32.mrb[0].mxu0
  %506 = vmatprep.mubr.f32.mxu0 0.0
  %507 = vmatmul.mubr.f32.gmra.mrb[0].mxu0 %v373
  %v508 = vpop.f32.mrb[0].mxu0
  %v509 = vadd.f32 %v337, %v508
  %v510 = vpop.f32.mrb[0].mxu0
  %511 = vmatprep.mubr.f32.mxu0 0.0
  %512 = vmatmul.mubr.f32.gmra.mrb[0].mxu0 %v376
  %v513 = vpop.f32.mrb[0].mxu0
  %v514 = vadd.f32 %v337, %v513
  %v515 = vpop.f32.mrb[0].mxu0
  %516 = vmatprep.mubr.f32.mxu0 0.0
  %517 = vmatmul.mubr.f32.gmra.mrb[0].mxu0 %v379
  %v518 = vpop.f32.mrb[0].mxu0
  %v519 = vadd.f32 %v337, %v518
  %v520 = vpop.f32.mrb[0].mxu0
  %521 = vmatprep.mubr.f32.mxu0 0.0
  %522 = vmatmul.mubr.f32.gmra.mrb[0].mxu0 %v382
  %v523 = vpop.f32.mrb[0].mxu0
  %v524 = vadd.f32 %v337, %v523
  %v525 = vpop.f32.mrb[0].mxu0
  %526 = vmatprep.mubr.f32.mxu0 0.0
  %527 = vmatmul.mubr.f32.gmra.mrb[0].mxu0 %v385
  %v528 = vpop.f32.mrb[0].mxu0
  %v529 = vadd.f32 %v337, %v528
  %v530 = vpop.f32.mrb[0].mxu0
  %531 = vdwg.mxu0
  %v532 = vld [vmem:[%s6] sm:$0xff]
  %v533 = vld [vmem:[%s6 + $0x8] sm:$0xff]
  %v534 = vld [vmem:[%s6 + $0x10] sm:$0xff]
  %v535 = vld [vmem:[%s6 + $0x18] sm:$0xff]
  %v536 = vld [vmem:[%s6 + $0x20] sm:$0xff]
  %v537 = vld [vmem:[%s6 + $0x28] sm:$0xff]
  %v538 = vld [vmem:[%s6 + $0x30] sm:$0xff]
  %v539 = vld [vmem:[%s6 + $0x38] sm:$0xff]
  %v540 = vld [vmem:[%s6 + $0x40] sm:$0xff]
  %v541 = vld [vmem:[%s6 + $0x48] sm:$0xff]
  %v542 = vld [vmem:[%s6 + $0x50] sm:$0xff]
  %v543 = vld [vmem:[%s6 + $0x58] sm:$0xff]
  %v544 = vld [vmem:[%s6 + $0x60] sm:$0xff]
  %v545 = vld [vmem:[%s6 + $0x68] sm:$0xff]
  %v546 = vld [vmem:[%s6 + $0x70] sm:$0xff]
  %v547 = vld [vmem:[%s6 + $0x78] sm:$0xff]
  %v548 = vld [vmem:[%s6 + $0x80] sm:$0xff]
  %v549 = vld [vmem:[%s6 + $0x88] sm:$0xff]
  %v550 = vld [vmem:[%s6 + $0x90] sm:$0xff]
  %v551 = vld [vmem:[%s6 + $0x98] sm:$0xff]
  %v552 = vld [vmem:[%s6 + $0xa0] sm:$0xff]
  %v553 = vld [vmem:[%s6 + $0xa8] sm:$0xff]
  %v554 = vld [vmem:[%s6 + $0xb0] sm:$0xff]
  %v555 = vld [vmem:[%s6 + $0xb8] sm:$0xff]
  %v556 = vld [vmem:[%s6 + $0xc0] sm:$0xff]
  %v557 = vld [vmem:[%s6 + $0xc8] sm:$0xff]
  %v558 = vld [vmem:[%s6 + $0xd0] sm:$0xff]
  %v559 = vld [vmem:[%s6 + $0xd8] sm:$0xff]
  %v560 = vld [vmem:[%s6 + $0xe0] sm:$0xff]
  %v561 = vld [vmem:[%s6 + $0xe8] sm:$0xff]
  %v562 = vld [vmem:[%s6 + $0xf0] sm:$0xff]
  %v563 = vld [vmem:[%s6 + $0xf8] sm:$0xff]
  %v564 = vld [vmem:[%s6 + $0x100] sm:$0xff]
  %v565 = vld [vmem:[%s6 + $0x108] sm:$0xff]
  %v566 = vld [vmem:[%s6 + $0x110] sm:$0xff]
  %v567 = vld [vmem:[%s6 + $0x118] sm:$0xff]
  %v568 = vld [vmem:[%s6 + $0x120] sm:$0xff]
  %v569 = vld [vmem:[%s6 + $0x128] sm:$0xff]
  %v570 = vld [vmem:[%s6 + $0x130] sm:$0xff]
  %v571 = vld [vmem:[%s6 + $0x138] sm:$0xff]
  %v572 = vld [vmem:[%s6 + $0x140] sm:$0xff]
  %v573 = vld [vmem:[%s6 + $0x148] sm:$0xff]
  %v574 = vld [vmem:[%s6 + $0x150] sm:$0xff]
  %v575 = vld [vmem:[%s6 + $0x158] sm:$0xff]
  %v576 = vld [vmem:[%s6 + $0x160] sm:$0xff]
  %v577 = vld [vmem:[%s6 + $0x168] sm:$0xff]
  %v578 = vld [vmem:[%s6 + $0x170] sm:$0xff]
  %v579 = vld [vmem:[%s6 + $0x178] sm:$0xff]
  %v580 = vld [vmem:[%s6 + $0x180] sm:$0xff]
  %v581 = vld [vmem:[%s6 + $0x188] sm:$0xff]
  %v582 = vld [vmem:[%s6 + $0x190] sm:$0xff]
  %v583 = vld [vmem:[%s6 + $0x198] sm:$0xff]
  %v584 = vld [vmem:[%s6 + $0x1a0] sm:$0xff]
  %v585 = vld [vmem:[%s6 + $0x1a8] sm:$0xff]
  %v586 = vld [vmem:[%s6 + $0x1b0] sm:$0xff]
  %v587 = vld [vmem:[%s6 + $0x1b8] sm:$0xff]
  %v588 = vld [vmem:[%s6 + $0x1c0] sm:$0xff]
  %v589 = vld [vmem:[%s6 + $0x1c8] sm:$0xff]
  %v590 = vld [vmem:[%s6 + $0x1d0] sm:$0xff]
  %v591 = vld [vmem:[%s6 + $0x1d8] sm:$0xff]
  %v592 = vld [vmem:[%s6 + $0x1e0] sm:$0xff]
  %v593 = vld [vmem:[%s6 + $0x1e8] sm:$0xff]
  %v594 = vld [vmem:[%s6 + $0x1f0] sm:$0xff]
  %v595 = vld [vmem:[%s6 + $0x1f8] sm:$0xff]
  %660 = vrot.lane.b32.xlu0 %v532, 32
  %v661 = vpop.permute.xlu0 %660
  %662 = vrot.lane.b32.xlu0 %v533, 32
  %v663 = vpop.permute.xlu0 %662
  %664 = vrot.lane.b32.xlu0 %v534, 32
  %v665 = vpop.permute.xlu0 %664
  %666 = vrot.lane.b32.xlu0 %v535, 32
  %v667 = vpop.permute.xlu0 %666
  %668 = vrot.lane.b32.xlu0 %v536, 32
  %v669 = vpop.permute.xlu0 %668
  %670 = vrot.lane.b32.xlu0 %v537, 32
  %v671 = vpop.permute.xlu0 %670
  %672 = vrot.lane.b32.xlu0 %v538, 32
  %v673 = vpop.permute.xlu0 %672
  %674 = vrot.lane.b32.xlu0 %v539, 32
  %v675 = vpop.permute.xlu0 %674
  %676 = vrot.lane.b32.xlu0 %v540, 32
  %v677 = vpop.permute.xlu0 %676
  %678 = vrot.lane.b32.xlu0 %v541, 32
  %v679 = vpop.permute.xlu0 %678
  %680 = vrot.lane.b32.xlu0 %v542, 32
  %v681 = vpop.permute.xlu0 %680
  %682 = vrot.lane.b32.xlu0 %v543, 32
  %v683 = vpop.permute.xlu0 %682
  %684 = vrot.lane.b32.xlu0 %v544, 32
  %v685 = vpop.permute.xlu0 %684
  %686 = vrot.lane.b32.xlu0 %v545, 32
  %v687 = vpop.permute.xlu0 %686
  %688 = vrot.lane.b32.xlu0 %v546, 32
  %v689 = vpop.permute.xlu0 %688
  %690 = vrot.lane.b32.xlu0 %v547, 32
  %v691 = vpop.permute.xlu0 %690
  %692 = vrot.lane.b32.xlu0 %v548, 32
  %v693 = vpop.permute.xlu0 %692
  %694 = vrot.lane.b32.xlu0 %v549, 32
  %v695 = vpop.permute.xlu0 %694
  %696 = vrot.lane.b32.xlu0 %v550, 32
  %v697 = vpop.permute.xlu0 %696
  %698 = vrot.lane.b32.xlu0 %v551, 32
  %v699 = vpop.permute.xlu0 %698
  %700 = vrot.lane.b32.xlu0 %v552, 32
  %v701 = vpop.permute.xlu0 %700
  %702 = vrot.lane.b32.xlu0 %v553, 32
  %v703 = vpop.permute.xlu0 %702
  %704 = vrot.lane.b32.xlu0 %v554, 32
  %v705 = vpop.permute.xlu0 %704
  %706 = vrot.lane.b32.xlu0 %v555, 32
  %v707 = vpop.permute.xlu0 %706
  %708 = vrot.lane.b32.xlu0 %v556, 32
  %v709 = vpop.permute.xlu0 %708
  %710 = vrot.lane.b32.xlu0 %v557, 32
  %v711 = vpop.permute.xlu0 %710
  %712 = vrot.lane.b32.xlu0 %v558, 32
  %v713 = vpop.permute.xlu0 %712
  %714 = vrot.lane.b32.xlu0 %v559, 32
  %v715 = vpop.permute.xlu0 %714
  %716 = vrot.lane.b32.xlu0 %v560, 32
  %v717 = vpop.permute.xlu0 %716
  %718 = vrot.lane.b32.xlu0 %v561, 32
  %v719 = vpop.permute.xlu0 %718
  %720 = vrot.lane.b32.xlu0 %v562, 32
  %v721 = vpop.permute.xlu0 %720
  %722 = vrot.lane.b32.xlu0 %v563, 32
  %v723 = vpop.permute.xlu0 %722
  %724 = vrot.lane.b32.xlu0 %v564, 32
  %v725 = vpop.permute.xlu0 %724
  %726 = vrot.lane.b32.xlu0 %v565, 32
  %v727 = vpop.permute.xlu0 %726
  %728 = vrot.lane.b32.xlu0 %v566, 32
  %v729 = vpop.permute.xlu0 %728
  %730 = vrot.lane.b32.xlu0 %v567, 32
  %v731 = vpop.permute.xlu0 %730
  %732 = vrot.lane.b32.xlu0 %v568, 32
  %v733 = vpop.permute.xlu0 %732
  %734 = vrot.lane.b32.xlu0 %v569, 32
  %v735 = vpop.permute.xlu0 %734
  %736 = vrot.lane.b32.xlu0 %v570, 32
  %v737 = vpop.permute.xlu0 %736
  %738 = vrot.lane.b32.xlu0 %v571, 32
  %v739 = vpop.permute.xlu0 %738
  %740 = vrot.lane.b32.xlu0 %v572, 32
  %v741 = vpop.permute.xlu0 %740
  %742 = vrot.lane.b32.xlu0 %v573, 32
  %v743 = vpop.permute.xlu0 %742
  %744 = vrot.lane.b32.xlu0 %v574, 32
  %v745 = vpop.permute.xlu0 %744
  %746 = vrot.lane.b32.xlu0 %v575, 32
  %v747 = vpop.permute.xlu0 %746
  %748 = vrot.lane.b32.xlu0 %v576, 32
  %v749 = vpop.permute.xlu0 %748
  %750 = vrot.lane.b32.xlu0 %v577, 32
  %v751 = vpop.permute.xlu0 %750
  %752 = vrot.lane.b32.xlu0 %v578, 32
  %v753 = vpop.permute.xlu0 %752
  %754 = vrot.lane.b32.xlu0 %v579, 32
  %v755 = vpop.permute.xlu0 %754
  %756 = vrot.lane.b32.xlu0 %v580, 32
  %v757 = vpop.permute.xlu0 %756
  %758 = vrot.lane.b32.xlu0 %v581, 32
  %v759 = vpop.permute.xlu0 %758
  %760 = vrot.lane.b32.xlu0 %v582, 32
  %v761 = vpop.permute.xlu0 %760
  %762 = vrot.lane.b32.xlu0 %v583, 32
  %v763 = vpop.permute.xlu0 %762
  %764 = vrot.lane.b32.xlu0 %v584, 32
  %v765 = vpop.permute.xlu0 %764
  %766 = vrot.lane.b32.xlu0 %v585, 32
  %v767 = vpop.permute.xlu0 %766
  %768 = vrot.lane.b32.xlu0 %v586, 32
  %v769 = vpop.permute.xlu0 %768
  %770 = vrot.lane.b32.xlu0 %v587, 32
  %v771 = vpop.permute.xlu0 %770
  %772 = vrot.lane.b32.xlu0 %v588, 32
  %v773 = vpop.permute.xlu0 %772
  %774 = vrot.lane.b32.xlu0 %v589, 32
  %v775 = vpop.permute.xlu0 %774
  %776 = vrot.lane.b32.xlu0 %v590, 32
  %v777 = vpop.permute.xlu0 %776
  %778 = vrot.lane.b32.xlu0 %v591, 32
  %v779 = vpop.permute.xlu0 %778
  %780 = vrot.lane.b32.xlu0 %v592, 32
  %v781 = vpop.permute.xlu0 %780
  %782 = vrot.lane.b32.xlu0 %v593, 32
  %v783 = vpop.permute.xlu0 %782
  %784 = vrot.lane.b32.xlu0 %v594, 32
  %v785 = vpop.permute.xlu0 %784
  %786 = vrot.lane.b32.xlu0 %v595, 32
  %v787 = vpop.permute.xlu0 %786
  %v852 = vmul.f32 %v454, %v661
  %v853 = vmul.f32 %v459, %v663
  %v854 = vmul.f32 %v464, %v665
  %v855 = vmul.f32 %v469, %v667
  %v856 = vmul.f32 %v474, %v669
  %v857 = vmul.f32 %v479, %v671
  %v858 = vmul.f32 %v484, %v673
  %v859 = vmul.f32 %v489, %v675
  %v860 = vmul.f32 %v494, %v677
  %v861 = vmul.f32 %v499, %v679
  %v862 = vmul.f32 %v504, %v681
  %v863 = vmul.f32 %v509, %v683
  %v864 = vmul.f32 %v514, %v685
  %v865 = vmul.f32 %v519, %v687
  %v866 = vmul.f32 %v524, %v689
  %v867 = vmul.f32 %v529, %v691
  %v868 = vmul.f32 %v454, %v693
  %v869 = vmul.f32 %v459, %v695
  %v870 = vmul.f32 %v464, %v697
  %v871 = vmul.f32 %v469, %v699
  %v872 = vmul.f32 %v474, %v701
  %v873 = vmul.f32 %v479, %v703
  %v874 = vmul.f32 %v484, %v705
  %v875 = vmul.f32 %v489, %v707
  %v876 = vmul.f32 %v494, %v709
  %v877 = vmul.f32 %v499, %v711
  %v878 = vmul.f32 %v504, %v713
  %v879 = vmul.f32 %v509, %v715
  %v880 = vmul.f32 %v514, %v717
  %v881 = vmul.f32 %v519, %v719
  %v882 = vmul.f32 %v524, %v721
  %v883 = vmul.f32 %v529, %v723
  %v884 = vmul.f32 %v454, %v725
  %v885 = vmul.f32 %v459, %v727
  %v886 = vmul.f32 %v464, %v729
  %v887 = vmul.f32 %v469, %v731
  %v888 = vmul.f32 %v474, %v733
  %v889 = vmul.f32 %v479, %v735
  %v890 = vmul.f32 %v484, %v737
  %v891 = vmul.f32 %v489, %v739
  %v892 = vmul.f32 %v494, %v741
  %v893 = vmul.f32 %v499, %v743
  %v894 = vmul.f32 %v504, %v745
  %v895 = vmul.f32 %v509, %v747
  %v896 = vmul.f32 %v514, %v749
  %v897 = vmul.f32 %v519, %v751
  %v898 = vmul.f32 %v524, %v753
  %v899 = vmul.f32 %v529, %v755
  %v900 = vmul.f32 %v454, %v757
  %v901 = vmul.f32 %v459, %v759
  %v902 = vmul.f32 %v464, %v761
  %v903 = vmul.f32 %v469, %v763
  %v904 = vmul.f32 %v474, %v765
  %v905 = vmul.f32 %v479, %v767
  %v906 = vmul.f32 %v484, %v769
  %v907 = vmul.f32 %v489, %v771
  %v908 = vmul.f32 %v494, %v773
  %v909 = vmul.f32 %v499, %v775
  %v910 = vmul.f32 %v504, %v777
  %v911 = vmul.f32 %v509, %v779
  %v912 = vmul.f32 %v514, %v781
  %v913 = vmul.f32 %v519, %v783
  %v914 = vmul.f32 %v524, %v785
  %v915 = vmul.f32 %v529, %v787
  %916 = vrot.lane.b32.xlu0 %v532, 64
  %v917 = vpop.permute.xlu0 %916
  %918 = vrot.lane.b32.xlu0 %v533, 64
  %v919 = vpop.permute.xlu0 %918
  %920 = vrot.lane.b32.xlu0 %v534, 64
  %v921 = vpop.permute.xlu0 %920
  %922 = vrot.lane.b32.xlu0 %v535, 64
  %v923 = vpop.permute.xlu0 %922
  %924 = vrot.lane.b32.xlu0 %v536, 64
  %v925 = vpop.permute.xlu0 %924
  %926 = vrot.lane.b32.xlu0 %v537, 64
  %v927 = vpop.permute.xlu0 %926
  %928 = vrot.lane.b32.xlu0 %v538, 64
  %v929 = vpop.permute.xlu0 %928
  %930 = vrot.lane.b32.xlu0 %v539, 64
  %v931 = vpop.permute.xlu0 %930
  %932 = vrot.lane.b32.xlu0 %v540, 64
  %v933 = vpop.permute.xlu0 %932
  %934 = vrot.lane.b32.xlu0 %v541, 64
  %v935 = vpop.permute.xlu0 %934
  %936 = vrot.lane.b32.xlu0 %v542, 64
  %v937 = vpop.permute.xlu0 %936
  %938 = vrot.lane.b32.xlu0 %v543, 64
  %v939 = vpop.permute.xlu0 %938
  %940 = vrot.lane.b32.xlu0 %v544, 64
  %v941 = vpop.permute.xlu0 %940
  %942 = vrot.lane.b32.xlu0 %v545, 64
  %v943 = vpop.permute.xlu0 %942
  %944 = vrot.lane.b32.xlu0 %v546, 64
  %v945 = vpop.permute.xlu0 %944
  %946 = vrot.lane.b32.xlu0 %v547, 64
  %v947 = vpop.permute.xlu0 %946
  %948 = vrot.lane.b32.xlu0 %v548, 64
  %v949 = vpop.permute.xlu0 %948
  %950 = vrot.lane.b32.xlu0 %v549, 64
  %v951 = vpop.permute.xlu0 %950
  %952 = vrot.lane.b32.xlu0 %v550, 64
  %v953 = vpop.permute.xlu0 %952
  %954 = vrot.lane.b32.xlu0 %v551, 64
  %v955 = vpop.permute.xlu0 %954
  %956 = vrot.lane.b32.xlu0 %v552, 64
  %v957 = vpop.permute.xlu0 %956
  %958 = vrot.lane.b32.xlu0 %v553, 64
  %v959 = vpop.permute.xlu0 %958
  %960 = vrot.lane.b32.xlu0 %v554, 64
  %v961 = vpop.permute.xlu0 %960
  %962 = vrot.lane.b32.xlu0 %v555, 64
  %v963 = vpop.permute.xlu0 %962
  %964 = vrot.lane.b32.xlu0 %v556, 64
  %v965 = vpop.permute.xlu0 %964
  %966 = vrot.lane.b32.xlu0 %v557, 64
  %v967 = vpop.permute.xlu0 %966
  %968 = vrot.lane.b32.xlu0 %v558, 64
  %v969 = vpop.permute.xlu0 %968
  %970 = vrot.lane.b32.xlu0 %v559, 64
  %v971 = vpop.permute.xlu0 %970
  %972 = vrot.lane.b32.xlu0 %v560, 64
  %v973 = vpop.permute.xlu0 %972
  %974 = vrot.lane.b32.xlu0 %v561, 64
  %v975 = vpop.permute.xlu0 %974
  %976 = vrot.lane.b32.xlu0 %v562, 64
  %v977 = vpop.permute.xlu0 %976
  %978 = vrot.lane.b32.xlu0 %v563, 64
  %v979 = vpop.permute.xlu0 %978
  %980 = vrot.lane.b32.xlu0 %v564, 64
  %v981 = vpop.permute.xlu0 %980
  %982 = vrot.lane.b32.xlu0 %v565, 64
  %v983 = vpop.permute.xlu0 %982
  %984 = vrot.lane.b32.xlu0 %v566, 64
  %v985 = vpop.permute.xlu0 %984
  %986 = vrot.lane.b32.xlu0 %v567, 64
  %v987 = vpop.permute.xlu0 %986
  %988 = vrot.lane.b32.xlu0 %v568, 64
  %v989 = vpop.permute.xlu0 %988
  %990 = vrot.lane.b32.xlu0 %v569, 64
  %v991 = vpop.permute.xlu0 %990
  %992 = vrot.lane.b32.xlu0 %v570, 64
  %v993 = vpop.permute.xlu0 %992
  %994 = vrot.lane.b32.xlu0 %v571, 64
  %v995 = vpop.permute.xlu0 %994
  %996 = vrot.lane.b32.xlu0 %v572, 64
  %v997 = vpop.permute.xlu0 %996
  %998 = vrot.lane.b32.xlu0 %v573, 64
  %v999 = vpop.permute.xlu0 %998
  %1000 = vrot.lane.b32.xlu0 %v574, 64
  %v1001 = vpop.permute.xlu0 %1000
  %1002 = vrot.lane.b32.xlu0 %v575, 64
  %v1003 = vpop.permute.xlu0 %1002
  %1004 = vrot.lane.b32.xlu0 %v576, 64
  %v1005 = vpop.permute.xlu0 %1004
  %1006 = vrot.lane.b32.xlu0 %v577, 64
  %v1007 = vpop.permute.xlu0 %1006
  %1008 = vrot.lane.b32.xlu0 %v578, 64
  %v1009 = vpop.permute.xlu0 %1008
  %1010 = vrot.lane.b32.xlu0 %v579, 64
  %v1011 = vpop.permute.xlu0 %1010
  %1012 = vrot.lane.b32.xlu0 %v580, 64
  %v1013 = vpop.permute.xlu0 %1012
  %1014 = vrot.lane.b32.xlu0 %v581, 64
  %v1015 = vpop.permute.xlu0 %1014
  %1016 = vrot.lane.b32.xlu0 %v582, 64
  %v1017 = vpop.permute.xlu0 %1016
  %1018 = vrot.lane.b32.xlu0 %v583, 64
  %v1019 = vpop.permute.xlu0 %1018
  %1020 = vrot.lane.b32.xlu0 %v584, 64
  %v1021 = vpop.permute.xlu0 %1020
  %1022 = vrot.lane.b32.xlu0 %v585, 64
  %v1023 = vpop.permute.xlu0 %1022
  %1024 = vrot.lane.b32.xlu0 %v586, 64
  %v1025 = vpop.permute.xlu0 %1024
  %1026 = vrot.lane.b32.xlu0 %v587, 64
  %v1027 = vpop.permute.xlu0 %1026
  %1028 = vrot.lane.b32.xlu0 %v588, 64
  %v1029 = vpop.permute.xlu0 %1028
  %1030 = vrot.lane.b32.xlu0 %v589, 64
  %v1031 = vpop.permute.xlu0 %1030
  %1032 = vrot.lane.b32.xlu0 %v590, 64
  %v1033 = vpop.permute.xlu0 %1032
  %1034 = vrot.lane.b32.xlu0 %v591, 64
  %v1035 = vpop.permute.xlu0 %1034
  %1036 = vrot.lane.b32.xlu0 %v592, 64
  %v1037 = vpop.permute.xlu0 %1036
  %1038 = vrot.lane.b32.xlu0 %v593, 64
  %v1039 = vpop.permute.xlu0 %1038
  %1040 = vrot.lane.b32.xlu0 %v594, 64
  %v1041 = vpop.permute.xlu0 %1040
  %1042 = vrot.lane.b32.xlu0 %v595, 64
  %v1043 = vpop.permute.xlu0 %1042
  %v1108 = vmul.f32 %v454, %v917
  %v1109 = vmul.f32 %v459, %v919
  %v1110 = vmul.f32 %v464, %v921
  %v1111 = vmul.f32 %v469, %v923
  %v1112 = vmul.f32 %v474, %v925
  %v1113 = vmul.f32 %v479, %v927
  %v1114 = vmul.f32 %v484, %v929
  %v1115 = vmul.f32 %v489, %v931
  %v1116 = vmul.f32 %v494, %v933
  %v1117 = vmul.f32 %v499, %v935
  %v1118 = vmul.f32 %v504, %v937
  %v1119 = vmul.f32 %v509, %v939
  %v1120 = vmul.f32 %v514, %v941
  %v1121 = vmul.f32 %v519, %v943
  %v1122 = vmul.f32 %v524, %v945
  %v1123 = vmul.f32 %v529, %v947
  %v1124 = vmul.f32 %v454, %v949
  %v1125 = vmul.f32 %v459, %v951
  %v1126 = vmul.f32 %v464, %v953
  %v1127 = vmul.f32 %v469, %v955
  %v1128 = vmul.f32 %v474, %v957
  %v1129 = vmul.f32 %v479, %v959
  %v1130 = vmul.f32 %v484, %v961
  %v1131 = vmul.f32 %v489, %v963
  %v1132 = vmul.f32 %v494, %v965
  %v1133 = vmul.f32 %v499, %v967
  %v1134 = vmul.f32 %v504, %v969
  %v1135 = vmul.f32 %v509, %v971
  %v1136 = vmul.f32 %v514, %v973
  %v1137 = vmul.f32 %v519, %v975
  %v1138 = vmul.f32 %v524, %v977
  %v1139 = vmul.f32 %v529, %v979
  %v1140 = vmul.f32 %v454, %v981
  %v1141 = vmul.f32 %v459, %v983
  %v1142 = vmul.f32 %v464, %v985
  %v1143 = vmul.f32 %v469, %v987
  %v1144 = vmul.f32 %v474, %v989
  %v1145 = vmul.f32 %v479, %v991
  %v1146 = vmul.f32 %v484, %v993
  %v1147 = vmul.f32 %v489, %v995
  %v1148 = vmul.f32 %v494, %v997
  %v1149 = vmul.f32 %v499, %v999
  %v1150 = vmul.f32 %v504, %v1001
  %v1151 = vmul.f32 %v509, %v1003
  %v1152 = vmul.f32 %v514, %v1005
  %v1153 = vmul.f32 %v519, %v1007
  %v1154 = vmul.f32 %v524, %v1009
  %v1155 = vmul.f32 %v529, %v1011
  %v1156 = vmul.f32 %v454, %v1013
  %v1157 = vmul.f32 %v459, %v1015
  %v1158 = vmul.f32 %v464, %v1017
  %v1159 = vmul.f32 %v469, %v1019
  %v1160 = vmul.f32 %v474, %v1021
  %v1161 = vmul.f32 %v479, %v1023
  %v1162 = vmul.f32 %v484, %v1025
  %v1163 = vmul.f32 %v489, %v1027
  %v1164 = vmul.f32 %v494, %v1029
  %v1165 = vmul.f32 %v499, %v1031
  %v1166 = vmul.f32 %v504, %v1033
  %v1167 = vmul.f32 %v509, %v1035
  %v1168 = vmul.f32 %v514, %v1037
  %v1169 = vmul.f32 %v519, %v1039
  %v1170 = vmul.f32 %v524, %v1041
  %v1171 = vmul.f32 %v529, %v1043
  %v1172 = vld [vmem:[%s5] sm:$0xff]
  %v1173 = vld [vmem:[%s5 + $0x8] sm:$0xff]
  %v1174 = vld [vmem:[%s5 + $0x10] sm:$0xff]
  %v1175 = vld [vmem:[%s5 + $0x18] sm:$0xff]
  %v1176 = vld [vmem:[%s5 + $0x20] sm:$0xff]
  %v1177 = vld [vmem:[%s5 + $0x28] sm:$0xff]
  %v1178 = vld [vmem:[%s5 + $0x30] sm:$0xff]
  %v1179 = vld [vmem:[%s5 + $0x38] sm:$0xff]
  %v1180 = vld [vmem:[%s5 + $0x40] sm:$0xff]
  %v1181 = vld [vmem:[%s5 + $0x48] sm:$0xff]
  %v1182 = vld [vmem:[%s5 + $0x50] sm:$0xff]
  %v1183 = vld [vmem:[%s5 + $0x58] sm:$0xff]
  %v1184 = vld [vmem:[%s5 + $0x60] sm:$0xff]
  %v1185 = vld [vmem:[%s5 + $0x68] sm:$0xff]
  %v1186 = vld [vmem:[%s5 + $0x70] sm:$0xff]
  %v1187 = vld [vmem:[%s5 + $0x78] sm:$0xff]
  %v1188 = vld [vmem:[%s5 + $0x80] sm:$0xff]
  %v1189 = vld [vmem:[%s5 + $0x88] sm:$0xff]
  %v1190 = vld [vmem:[%s5 + $0x90] sm:$0xff]
  %v1191 = vld [vmem:[%s5 + $0x98] sm:$0xff]
  %v1192 = vld [vmem:[%s5 + $0xa0] sm:$0xff]
  %v1193 = vld [vmem:[%s5 + $0xa8] sm:$0xff]
  %v1194 = vld [vmem:[%s5 + $0xb0] sm:$0xff]
  %v1195 = vld [vmem:[%s5 + $0xb8] sm:$0xff]
  %v1196 = vld [vmem:[%s5 + $0xc0] sm:$0xff]
  %v1197 = vld [vmem:[%s5 + $0xc8] sm:$0xff]
  %v1198 = vld [vmem:[%s5 + $0xd0] sm:$0xff]
  %v1199 = vld [vmem:[%s5 + $0xd8] sm:$0xff]
  %v1200 = vld [vmem:[%s5 + $0xe0] sm:$0xff]
  %v1201 = vld [vmem:[%s5 + $0xe8] sm:$0xff]
  %v1202 = vld [vmem:[%s5 + $0xf0] sm:$0xff]
  %v1203 = vld [vmem:[%s5 + $0xf8] sm:$0xff]
  %v1204 = vld [vmem:[%s5 + $0x100] sm:$0xff]
  %v1205 = vld [vmem:[%s5 + $0x108] sm:$0xff]
  %v1206 = vld [vmem:[%s5 + $0x110] sm:$0xff]
  %v1207 = vld [vmem:[%s5 + $0x118] sm:$0xff]
  %v1208 = vld [vmem:[%s5 + $0x120] sm:$0xff]
  %v1209 = vld [vmem:[%s5 + $0x128] sm:$0xff]
  %v1210 = vld [vmem:[%s5 + $0x130] sm:$0xff]
  %v1211 = vld [vmem:[%s5 + $0x138] sm:$0xff]
  %v1212 = vld [vmem:[%s5 + $0x140] sm:$0xff]
  %v1213 = vld [vmem:[%s5 + $0x148] sm:$0xff]
  %v1214 = vld [vmem:[%s5 + $0x150] sm:$0xff]
  %v1215 = vld [vmem:[%s5 + $0x158] sm:$0xff]
  %v1216 = vld [vmem:[%s5 + $0x160] sm:$0xff]
  %v1217 = vld [vmem:[%s5 + $0x168] sm:$0xff]
  %v1218 = vld [vmem:[%s5 + $0x170] sm:$0xff]
  %v1219 = vld [vmem:[%s5 + $0x178] sm:$0xff]
  %v1220 = vld [vmem:[%s5 + $0x180] sm:$0xff]
  %v1221 = vld [vmem:[%s5 + $0x188] sm:$0xff]
  %v1222 = vld [vmem:[%s5 + $0x190] sm:$0xff]
  %v1223 = vld [vmem:[%s5 + $0x198] sm:$0xff]
  %v1224 = vld [vmem:[%s5 + $0x1a0] sm:$0xff]
  %v1225 = vld [vmem:[%s5 + $0x1a8] sm:$0xff]
  %v1226 = vld [vmem:[%s5 + $0x1b0] sm:$0xff]
  %v1227 = vld [vmem:[%s5 + $0x1b8] sm:$0xff]
  %v1228 = vld [vmem:[%s5 + $0x1c0] sm:$0xff]
  %v1229 = vld [vmem:[%s5 + $0x1c8] sm:$0xff]
  %v1230 = vld [vmem:[%s5 + $0x1d0] sm:$0xff]
  %v1231 = vld [vmem:[%s5 + $0x1d8] sm:$0xff]
  %v1232 = vld [vmem:[%s5 + $0x1e0] sm:$0xff]
  %v1233 = vld [vmem:[%s5 + $0x1e8] sm:$0xff]
  %v1234 = vld [vmem:[%s5 + $0x1f0] sm:$0xff]
  %v1235 = vld [vmem:[%s5 + $0x1f8] sm:$0xff]
  %1300 = vrot.lane.b32.xlu0 %v852, 96
  %v1301 = vpop.permute.xlu0 %1300
  %1302 = vrot.lane.b32.xlu0 %v853, 96
  %v1303 = vpop.permute.xlu0 %1302
  %1304 = vrot.lane.b32.xlu0 %v854, 96
  %v1305 = vpop.permute.xlu0 %1304
  %1306 = vrot.lane.b32.xlu0 %v855, 96
  %v1307 = vpop.permute.xlu0 %1306
  %1308 = vrot.lane.b32.xlu0 %v856, 96
  %v1309 = vpop.permute.xlu0 %1308
  %1310 = vrot.lane.b32.xlu0 %v857, 96
  %v1311 = vpop.permute.xlu0 %1310
  %1312 = vrot.lane.b32.xlu0 %v858, 96
  %v1313 = vpop.permute.xlu0 %1312
  %1314 = vrot.lane.b32.xlu0 %v859, 96
  %v1315 = vpop.permute.xlu0 %1314
  %1316 = vrot.lane.b32.xlu0 %v860, 96
  %v1317 = vpop.permute.xlu0 %1316
  %1318 = vrot.lane.b32.xlu0 %v861, 96
  %v1319 = vpop.permute.xlu0 %1318
  %1320 = vrot.lane.b32.xlu0 %v862, 96
  %v1321 = vpop.permute.xlu0 %1320
  %1322 = vrot.lane.b32.xlu0 %v863, 96
  %v1323 = vpop.permute.xlu0 %1322
  %1324 = vrot.lane.b32.xlu0 %v864, 96
  %v1325 = vpop.permute.xlu0 %1324
  %1326 = vrot.lane.b32.xlu0 %v865, 96
  %v1327 = vpop.permute.xlu0 %1326
  %1328 = vrot.lane.b32.xlu0 %v866, 96
  %v1329 = vpop.permute.xlu0 %1328
  %1330 = vrot.lane.b32.xlu0 %v867, 96
  %v1331 = vpop.permute.xlu0 %1330
  %1332 = vrot.lane.b32.xlu0 %v868, 96
  %v1333 = vpop.permute.xlu0 %1332
  %1334 = vrot.lane.b32.xlu0 %v869, 96
  %v1335 = vpop.permute.xlu0 %1334
  %1336 = vrot.lane.b32.xlu0 %v870, 96
  %v1337 = vpop.permute.xlu0 %1336
  %1338 = vrot.lane.b32.xlu0 %v871, 96
  %v1339 = vpop.permute.xlu0 %1338
  %1340 = vrot.lane.b32.xlu0 %v872, 96
  %v1341 = vpop.permute.xlu0 %1340
  %1342 = vrot.lane.b32.xlu0 %v873, 96
  %v1343 = vpop.permute.xlu0 %1342
  %1344 = vrot.lane.b32.xlu0 %v874, 96
  %v1345 = vpop.permute.xlu0 %1344
  %1346 = vrot.lane.b32.xlu0 %v875, 96
  %v1347 = vpop.permute.xlu0 %1346
  %1348 = vrot.lane.b32.xlu0 %v876, 96
  %v1349 = vpop.permute.xlu0 %1348
  %1350 = vrot.lane.b32.xlu0 %v877, 96
  %v1351 = vpop.permute.xlu0 %1350
  %1352 = vrot.lane.b32.xlu0 %v878, 96
  %v1353 = vpop.permute.xlu0 %1352
  %1354 = vrot.lane.b32.xlu0 %v879, 96
  %v1355 = vpop.permute.xlu0 %1354
  %1356 = vrot.lane.b32.xlu0 %v880, 96
  %v1357 = vpop.permute.xlu0 %1356
  %1358 = vrot.lane.b32.xlu0 %v881, 96
  %v1359 = vpop.permute.xlu0 %1358
  %1360 = vrot.lane.b32.xlu0 %v882, 96
  %v1361 = vpop.permute.xlu0 %1360
  %1362 = vrot.lane.b32.xlu0 %v883, 96
  %v1363 = vpop.permute.xlu0 %1362
  %1364 = vrot.lane.b32.xlu0 %v884, 96
  %v1365 = vpop.permute.xlu0 %1364
  %1366 = vrot.lane.b32.xlu0 %v885, 96
  %v1367 = vpop.permute.xlu0 %1366
  %1368 = vrot.lane.b32.xlu0 %v886, 96
  %v1369 = vpop.permute.xlu0 %1368
  %1370 = vrot.lane.b32.xlu0 %v887, 96
  %v1371 = vpop.permute.xlu0 %1370
  %1372 = vrot.lane.b32.xlu0 %v888, 96
  %v1373 = vpop.permute.xlu0 %1372
  %1374 = vrot.lane.b32.xlu0 %v889, 96
  %v1375 = vpop.permute.xlu0 %1374
  %1376 = vrot.lane.b32.xlu0 %v890, 96
  %v1377 = vpop.permute.xlu0 %1376
  %1378 = vrot.lane.b32.xlu0 %v891, 96
  %v1379 = vpop.permute.xlu0 %1378
  %1380 = vrot.lane.b32.xlu0 %v892, 96
  %v1381 = vpop.permute.xlu0 %1380
  %1382 = vrot.lane.b32.xlu0 %v893, 96
  %v1383 = vpop.permute.xlu0 %1382
  %1384 = vrot.lane.b32.xlu0 %v894, 96
  %v1385 = vpop.permute.xlu0 %1384
  %1386 = vrot.lane.b32.xlu0 %v895, 96
  %v1387 = vpop.permute.xlu0 %1386
  %1388 = vrot.lane.b32.xlu0 %v896, 96
  %v1389 = vpop.permute.xlu0 %1388
  %1390 = vrot.lane.b32.xlu0 %v897, 96
  %v1391 = vpop.permute.xlu0 %1390
  %1392 = vrot.lane.b32.xlu0 %v898, 96
  %v1393 = vpop.permute.xlu0 %1392
  %1394 = vrot.lane.b32.xlu0 %v899, 96
  %v1395 = vpop.permute.xlu0 %1394
  %1396 = vrot.lane.b32.xlu0 %v900, 96
  %v1397 = vpop.permute.xlu0 %1396
  %1398 = vrot.lane.b32.xlu0 %v901, 96
  %v1399 = vpop.permute.xlu0 %1398
  %1400 = vrot.lane.b32.xlu0 %v902, 96
  %v1401 = vpop.permute.xlu0 %1400
  %1402 = vrot.lane.b32.xlu0 %v903, 96
  %v1403 = vpop.permute.xlu0 %1402
  %1404 = vrot.lane.b32.xlu0 %v904, 96
  %v1405 = vpop.permute.xlu0 %1404
  %1406 = vrot.lane.b32.xlu0 %v905, 96
  %v1407 = vpop.permute.xlu0 %1406
  %1408 = vrot.lane.b32.xlu0 %v906, 96
  %v1409 = vpop.permute.xlu0 %1408
  %1410 = vrot.lane.b32.xlu0 %v907, 96
  %v1411 = vpop.permute.xlu0 %1410
  %1412 = vrot.lane.b32.xlu0 %v908, 96
  %v1413 = vpop.permute.xlu0 %1412
  %1414 = vrot.lane.b32.xlu0 %v909, 96
  %v1415 = vpop.permute.xlu0 %1414
  %1416 = vrot.lane.b32.xlu0 %v910, 96
  %v1417 = vpop.permute.xlu0 %1416
  %1418 = vrot.lane.b32.xlu0 %v911, 96
  %v1419 = vpop.permute.xlu0 %1418
  %1420 = vrot.lane.b32.xlu0 %v912, 96
  %v1421 = vpop.permute.xlu0 %1420
  %1422 = vrot.lane.b32.xlu0 %v913, 96
  %v1423 = vpop.permute.xlu0 %1422
  %1424 = vrot.lane.b32.xlu0 %v914, 96
  %v1425 = vpop.permute.xlu0 %1424
  %1426 = vrot.lane.b32.xlu0 %v915, 96
  %v1427 = vpop.permute.xlu0 %1426
  %v1429 = vsel %vm72, %v454, 0
  %v1432 = vsel %vm72, %v459, 0
  %v1435 = vsel %vm72, %v464, 0
  %v1438 = vsel %vm72, %v469, 0
  %v1441 = vsel %vm72, %v474, 0
  %v1444 = vsel %vm72, %v479, 0
  %v1447 = vsel %vm72, %v484, 0
  %v1450 = vsel %vm72, %v489, 0
  %v1453 = vsel %vm72, %v494, 0
  %v1456 = vsel %vm72, %v499, 0
  %v1459 = vsel %vm72, %v504, 0
  %v1462 = vsel %vm72, %v509, 0
  %v1465 = vsel %vm72, %v514, 0
  %v1468 = vsel %vm72, %v519, 0
  %v1471 = vsel %vm72, %v524, 0
  %v1474 = vsel %vm72, %v529, 0
  %v1476 = vsel %vm72, %v1301, 0
  %v1478 = vsel %vm72, %v1303, 0
  %v1480 = vsel %vm72, %v1305, 0
  %v1482 = vsel %vm72, %v1307, 0
  %v1484 = vsel %vm72, %v1309, 0
  %v1486 = vsel %vm72, %v1311, 0
  %v1488 = vsel %vm72, %v1313, 0
  %v1490 = vsel %vm72, %v1315, 0
  %v1492 = vsel %vm72, %v1317, 0
  %v1494 = vsel %vm72, %v1319, 0
  %v1496 = vsel %vm72, %v1321, 0
  %v1498 = vsel %vm72, %v1323, 0
  %v1500 = vsel %vm72, %v1325, 0
  %v1502 = vsel %vm72, %v1327, 0
  %v1504 = vsel %vm72, %v1329, 0
  %v1506 = vsel %vm72, %v1331, 0
  %v1508 = vsel %vm72, %v1333, 0
  %v1510 = vsel %vm72, %v1335, 0
  %v1512 = vsel %vm72, %v1337, 0
  %v1514 = vsel %vm72, %v1339, 0
  %v1516 = vsel %vm72, %v1341, 0
  %v1518 = vsel %vm72, %v1343, 0
  %v1520 = vsel %vm72, %v1345, 0
  %v1522 = vsel %vm72, %v1347, 0
  %v1524 = vsel %vm72, %v1349, 0
  %v1526 = vsel %vm72, %v1351, 0
  %v1528 = vsel %vm72, %v1353, 0
  %v1530 = vsel %vm72, %v1355, 0
  %v1532 = vsel %vm72, %v1357, 0
  %v1534 = vsel %vm72, %v1359, 0
  %v1536 = vsel %vm72, %v1361, 0
  %v1538 = vsel %vm72, %v1363, 0
  %v1540 = vsel %vm72, %v1365, 0
  %v1542 = vsel %vm72, %v1367, 0
  %v1544 = vsel %vm72, %v1369, 0
  %v1546 = vsel %vm72, %v1371, 0
  %v1548 = vsel %vm72, %v1373, 0
  %v1550 = vsel %vm72, %v1375, 0
  %v1552 = vsel %vm72, %v1377, 0
  %v1554 = vsel %vm72, %v1379, 0
  %v1556 = vsel %vm72, %v1381, 0
  %v1558 = vsel %vm72, %v1383, 0
  %v1560 = vsel %vm72, %v1385, 0
  %v1562 = vsel %vm72, %v1387, 0
  %v1564 = vsel %vm72, %v1389, 0
  %v1566 = vsel %vm72, %v1391, 0
  %v1568 = vsel %vm72, %v1393, 0
  %v1570 = vsel %vm72, %v1395, 0
  %v1572 = vsel %vm72, %v1397, 0
  %v1574 = vsel %vm72, %v1399, 0
  %v1576 = vsel %vm72, %v1401, 0
  %v1578 = vsel %vm72, %v1403, 0
  %v1580 = vsel %vm72, %v1405, 0
  %v1582 = vsel %vm72, %v1407, 0
  %v1584 = vsel %vm72, %v1409, 0
  %v1586 = vsel %vm72, %v1411, 0
  %v1588 = vsel %vm72, %v1413, 0
  %v1590 = vsel %vm72, %v1415, 0
  %v1592 = vsel %vm72, %v1417, 0
  %v1594 = vsel %vm72, %v1419, 0
  %v1596 = vsel %vm72, %v1421, 0
  %v1598 = vsel %vm72, %v1423, 0
  %v1600 = vsel %vm72, %v1425, 0
  %v1602 = vsel %vm72, %v1427, 0
  %1604 = vmatprep.subr.mxu0 0.0
  %1605 = vmatpush1.xpose.msra.mxu0 %v1476
  %1606 = vmatprep.subr.mxu0 0.0
  %1607 = vmatpush1.xpose.msra.mxu0 %v1478
  %1608 = vmatprep.subr.mxu0 0.0
  %1609 = vmatpush1.xpose.msra.mxu0 %v1480
  %1610 = vmatprep.subr.mxu0 0.0
  %1611 = vmatpush1.xpose.msra.mxu0 %v1482
  %1612 = vmatprep.subr.mxu0 0.0
  %1613 = vmatpush1.xpose.msra.mxu0 %v1484
  %1614 = vmatprep.subr.mxu0 0.0
  %1615 = vmatpush1.xpose.msra.mxu0 %v1486
  %1616 = vmatprep.subr.mxu0 0.0
  %1617 = vmatpush1.xpose.msra.mxu0 %v1488
  %1618 = vmatprep.subr.mxu0 0.0
  %1619 = vmatpush1.xpose.msra.mxu0 %v1490
  %1620 = vmatprep.subr.mxu0 0.0
  %1621 = vmatpush1.xpose.msra.mxu0 %v1492
  %1622 = vmatprep.subr.mxu0 0.0
  %1623 = vmatpush1.xpose.msra.mxu0 %v1494
  %1624 = vmatprep.subr.mxu0 0.0
  %1625 = vmatpush1.xpose.msra.mxu0 %v1496
  %1626 = vmatprep.subr.mxu0 0.0
  %1627 = vmatpush1.xpose.msra.mxu0 %v1498
  %1628 = vmatprep.subr.mxu0 0.0
  %1629 = vmatpush1.xpose.msra.mxu0 %v1500
  %1630 = vmatprep.subr.mxu0 0.0
  %1631 = vmatpush1.xpose.msra.mxu0 %v1502
  %1632 = vmatprep.subr.mxu0 0.0
  %1633 = vmatpush1.xpose.msra.mxu0 %v1504
  %1634 = vmatprep.subr.mxu0 0.0
  %1635 = vmatpush1.xpose.msra.mxu0 %v1506
  %1636 = vmatprep.subr.mxu0 0.0
  %1637 = vmatpush1.xpose.msra.mxu0 %v1508
  %1638 = vmatprep.subr.mxu0 0.0
  %1639 = vmatpush1.xpose.msra.mxu0 %v1510
  %1640 = vmatprep.subr.mxu0 0.0
  %1641 = vmatpush1.xpose.msra.mxu0 %v1512
  %1642 = vmatprep.subr.mxu0 0.0
  %1643 = vmatpush1.xpose.msra.mxu0 %v1514
  %1644 = vmatprep.subr.mxu0 0.0
  %1645 = vmatpush1.xpose.msra.mxu0 %v1516
  %1646 = vmatprep.subr.mxu0 0.0
  %1647 = vmatpush1.xpose.msra.mxu0 %v1518
  %1648 = vmatprep.subr.mxu0 0.0
  %1649 = vmatpush1.xpose.msra.mxu0 %v1520
  %1650 = vmatprep.subr.mxu0 0.0
  %1651 = vmatpush1.xpose.msra.mxu0 %v1522
  %1652 = vmatprep.subr.mxu0 0.0
  %1653 = vmatpush1.xpose.msra.mxu0 %v1524
  %1654 = vmatprep.subr.mxu0 0.0
  %1655 = vmatpush1.xpose.msra.mxu0 %v1526
  %1656 = vmatprep.subr.mxu0 0.0
  %1657 = vmatpush1.xpose.msra.mxu0 %v1528
  %1658 = vmatprep.subr.mxu0 0.0
  %1659 = vmatpush1.xpose.msra.mxu0 %v1530
  %1660 = vmatprep.subr.mxu0 0.0
  %1661 = vmatpush1.xpose.msra.mxu0 %v1532
  %1662 = vmatprep.subr.mxu0 0.0
  %1663 = vmatpush1.xpose.msra.mxu0 %v1534
  %1664 = vmatprep.subr.mxu0 0.0
  %1665 = vmatpush1.xpose.msra.mxu0 %v1536
  %1666 = vmatprep.subr.mxu0 0.0
  %1667 = vmatpush1.xpose.msra.mxu0 %v1538
  %1668 = vmatprep.mubr.f32.mxu0 0.0
  %1669 = vmatmul.mubr.f32.gmra.mrb[0].mxu0 %v1429
  %v1670 = vpop.f32.mrb[0].mxu0
  %v1671 = vadd.f32 %v1172, %v1670
  %v1672 = vpop.f32.mrb[0].mxu0
  %v1673 = vadd.f32 %v1173, %v1672
  %1674 = vmatprep.mubr.f32.mxu0 0.0
  %1675 = vmatmul.mubr.f32.gmra.mrb[0].mxu0 %v1432
  %v1676 = vpop.f32.mrb[0].mxu0
  %v1677 = vadd.f32 %v1176, %v1676
  %v1678 = vpop.f32.mrb[0].mxu0
  %v1679 = vadd.f32 %v1177, %v1678
  %1680 = vmatprep.mubr.f32.mxu0 0.0
  %1681 = vmatmul.mubr.f32.gmra.mrb[0].mxu0 %v1435
  %v1682 = vpop.f32.mrb[0].mxu0
  %v1683 = vadd.f32 %v1180, %v1682
  %v1684 = vpop.f32.mrb[0].mxu0
  %v1685 = vadd.f32 %v1181, %v1684
  %1686 = vmatprep.mubr.f32.mxu0 0.0
  %1687 = vmatmul.mubr.f32.gmra.mrb[0].mxu0 %v1438
  %v1688 = vpop.f32.mrb[0].mxu0
  %v1689 = vadd.f32 %v1184, %v1688
  %v1690 = vpop.f32.mrb[0].mxu0
  %v1691 = vadd.f32 %v1185, %v1690
  %1692 = vmatprep.mubr.f32.mxu0 0.0
  %1693 = vmatmul.mubr.f32.gmra.mrb[0].mxu0 %v1441
  %v1694 = vpop.f32.mrb[0].mxu0
  %v1695 = vadd.f32 %v1188, %v1694
  %v1696 = vpop.f32.mrb[0].mxu0
  %v1697 = vadd.f32 %v1189, %v1696
  %1698 = vmatprep.mubr.f32.mxu0 0.0
  %1699 = vmatmul.mubr.f32.gmra.mrb[0].mxu0 %v1444
  %v1700 = vpop.f32.mrb[0].mxu0
  %v1701 = vadd.f32 %v1192, %v1700
  %v1702 = vpop.f32.mrb[0].mxu0
  %v1703 = vadd.f32 %v1193, %v1702
  %1704 = vmatprep.mubr.f32.mxu0 0.0
  %1705 = vmatmul.mubr.f32.gmra.mrb[0].mxu0 %v1447
  %v1706 = vpop.f32.mrb[0].mxu0
  %v1707 = vadd.f32 %v1196, %v1706
  %v1708 = vpop.f32.mrb[0].mxu0
  %v1709 = vadd.f32 %v1197, %v1708
  %1710 = vmatprep.mubr.f32.mxu0 0.0
  %1711 = vmatmul.mubr.f32.gmra.mrb[0].mxu0 %v1450
  %v1712 = vpop.f32.mrb[0].mxu0
  %v1713 = vadd.f32 %v1200, %v1712
  %v1714 = vpop.f32.mrb[0].mxu0
  %v1715 = vadd.f32 %v1201, %v1714
  %1716 = vmatprep.mubr.f32.mxu0 0.0
  %1717 = vmatmul.mubr.f32.gmra.mrb[0].mxu0 %v1453
  %v1718 = vpop.f32.mrb[0].mxu0
  %v1719 = vadd.f32 %v1204, %v1718
  %v1720 = vpop.f32.mrb[0].mxu0
  %v1721 = vadd.f32 %v1205, %v1720
  %1722 = vmatprep.mubr.f32.mxu0 0.0
  %1723 = vmatmul.mubr.f32.gmra.mrb[0].mxu0 %v1456
  %v1724 = vpop.f32.mrb[0].mxu0
  %v1725 = vadd.f32 %v1208, %v1724
  %v1726 = vpop.f32.mrb[0].mxu0
  %v1727 = vadd.f32 %v1209, %v1726
  %1728 = vmatprep.mubr.f32.mxu0 0.0
  %1729 = vmatmul.mubr.f32.gmra.mrb[0].mxu0 %v1459
  %v1730 = vpop.f32.mrb[0].mxu0
  %v1731 = vadd.f32 %v1212, %v1730
  %v1732 = vpop.f32.mrb[0].mxu0
  %v1733 = vadd.f32 %v1213, %v1732
  %1734 = vmatprep.mubr.f32.mxu0 0.0
  %1735 = vmatmul.mubr.f32.gmra.mrb[0].mxu0 %v1462
  %v1736 = vpop.f32.mrb[0].mxu0
  %v1737 = vadd.f32 %v1216, %v1736
  %v1738 = vpop.f32.mrb[0].mxu0
  %v1739 = vadd.f32 %v1217, %v1738
  %1740 = vmatprep.mubr.f32.mxu0 0.0
  %1741 = vmatmul.mubr.f32.gmra.mrb[0].mxu0 %v1465
  %v1742 = vpop.f32.mrb[0].mxu0
  %v1743 = vadd.f32 %v1220, %v1742
  %v1744 = vpop.f32.mrb[0].mxu0
  %v1745 = vadd.f32 %v1221, %v1744
  %1746 = vmatprep.mubr.f32.mxu0 0.0
  %1747 = vmatmul.mubr.f32.gmra.mrb[0].mxu0 %v1468
  %v1748 = vpop.f32.mrb[0].mxu0
  %v1749 = vadd.f32 %v1224, %v1748
  %v1750 = vpop.f32.mrb[0].mxu0
  %v1751 = vadd.f32 %v1225, %v1750
  %1752 = vmatprep.mubr.f32.mxu0 0.0
  %1753 = vmatmul.mubr.f32.gmra.mrb[0].mxu0 %v1471
  %v1754 = vpop.f32.mrb[0].mxu0
  %v1755 = vadd.f32 %v1228, %v1754
  %v1756 = vpop.f32.mrb[0].mxu0
  %v1757 = vadd.f32 %v1229, %v1756
  %1758 = vmatprep.mubr.f32.mxu0 0.0
  %1759 = vmatmul.mubr.f32.gmra.mrb[0].mxu0 %v1474
  %v1760 = vpop.f32.mrb[0].mxu0
  %v1761 = vadd.f32 %v1232, %v1760
  %v1762 = vpop.f32.mrb[0].mxu0
  %v1763 = vadd.f32 %v1233, %v1762
  %1764 = vdwg.mxu0
  %1765 = vmatprep.subr.mxu0 0.0
  %1766 = vmatpush1.xpose.msra.mxu0 %v1540
  %1767 = vmatprep.subr.mxu0 0.0
  %1768 = vmatpush1.xpose.msra.mxu0 %v1542
  %1769 = vmatprep.subr.mxu0 0.0
  %1770 = vmatpush1.xpose.msra.mxu0 %v1544
  %1771 = vmatprep.subr.mxu0 0.0
  %1772 = vmatpush1.xpose.msra.mxu0 %v1546
  %1773 = vmatprep.subr.mxu0 0.0
  %1774 = vmatpush1.xpose.msra.mxu0 %v1548
  %1775 = vmatprep.subr.mxu0 0.0
  %1776 = vmatpush1.xpose.msra.mxu0 %v1550
  %1777 = vmatprep.subr.mxu0 0.0
  %1778 = vmatpush1.xpose.msra.mxu0 %v1552
  %1779 = vmatprep.subr.mxu0 0.0
  %1780 = vmatpush1.xpose.msra.mxu0 %v1554
  %1781 = vmatprep.subr.mxu0 0.0
  %1782 = vmatpush1.xpose.msra.mxu0 %v1556
  %1783 = vmatprep.subr.mxu0 0.0
  %1784 = vmatpush1.xpose.msra.mxu0 %v1558
  %1785 = vmatprep.subr.mxu0 0.0
  %1786 = vmatpush1.xpose.msra.mxu0 %v1560
  %1787 = vmatprep.subr.mxu0 0.0
  %1788 = vmatpush1.xpose.msra.mxu0 %v1562
  %1789 = vmatprep.subr.mxu0 0.0
  %1790 = vmatpush1.xpose.msra.mxu0 %v1564
  %1791 = vmatprep.subr.mxu0 0.0
  %1792 = vmatpush1.xpose.msra.mxu0 %v1566
  %1793 = vmatprep.subr.mxu0 0.0
  %1794 = vmatpush1.xpose.msra.mxu0 %v1568
  %1795 = vmatprep.subr.mxu0 0.0
  %1796 = vmatpush1.xpose.msra.mxu0 %v1570
  %1797 = vmatprep.subr.mxu0 0.0
  %1798 = vmatpush1.xpose.msra.mxu0 %v1572
  %1799 = vmatprep.subr.mxu0 0.0
  %1800 = vmatpush1.xpose.msra.mxu0 %v1574
  %1801 = vmatprep.subr.mxu0 0.0
  %1802 = vmatpush1.xpose.msra.mxu0 %v1576
  %1803 = vmatprep.subr.mxu0 0.0
  %1804 = vmatpush1.xpose.msra.mxu0 %v1578
  %1805 = vmatprep.subr.mxu0 0.0
  %1806 = vmatpush1.xpose.msra.mxu0 %v1580
  %1807 = vmatprep.subr.mxu0 0.0
  %1808 = vmatpush1.xpose.msra.mxu0 %v1582
  %1809 = vmatprep.subr.mxu0 0.0
  %1810 = vmatpush1.xpose.msra.mxu0 %v1584
  %1811 = vmatprep.subr.mxu0 0.0
  %1812 = vmatpush1.xpose.msra.mxu0 %v1586
  %1813 = vmatprep.subr.mxu0 0.0
  %1814 = vmatpush1.xpose.msra.mxu0 %v1588
  %1815 = vmatprep.subr.mxu0 0.0
  %1816 = vmatpush1.xpose.msra.mxu0 %v1590
  %1817 = vmatprep.subr.mxu0 0.0
  %1818 = vmatpush1.xpose.msra.mxu0 %v1592
  %1819 = vmatprep.subr.mxu0 0.0
  %1820 = vmatpush1.xpose.msra.mxu0 %v1594
  %1821 = vmatprep.subr.mxu0 0.0
  %1822 = vmatpush1.xpose.msra.mxu0 %v1596
  %1823 = vmatprep.subr.mxu0 0.0
  %1824 = vmatpush1.xpose.msra.mxu0 %v1598
  %1825 = vmatprep.subr.mxu0 0.0
  %1826 = vmatpush1.xpose.msra.mxu0 %v1600
  %1827 = vmatprep.subr.mxu0 0.0
  %1828 = vmatpush1.xpose.msra.mxu0 %v1602
  %1829 = vmatprep.mubr.f32.mxu0 0.0
  %1830 = vmatmul.mubr.f32.gmra.mrb[0].mxu0 %v1429
  %v1831 = vpop.f32.mrb[0].mxu0
  %v1832 = vadd.f32 %v1174, %v1831
  %v1833 = vpop.f32.mrb[0].mxu0
  %v1834 = vadd.f32 %v1175, %v1833
  %1835 = vmatprep.mubr.f32.mxu0 0.0
  %1836 = vmatmul.mubr.f32.gmra.mrb[0].mxu0 %v1432
  %v1837 = vpop.f32.mrb[0].mxu0
  %v1838 = vadd.f32 %v1178, %v1837
  %v1839 = vpop.f32.mrb[0].mxu0
  %v1840 = vadd.f32 %v1179, %v1839
  %1841 = vmatprep.mubr.f32.mxu0 0.0
  %1842 = vmatmul.mubr.f32.gmra.mrb[0].mxu0 %v1435
  %v1843 = vpop.f32.mrb[0].mxu0
  %v1844 = vadd.f32 %v1182, %v1843
  %v1845 = vpop.f32.mrb[0].mxu0
  %v1846 = vadd.f32 %v1183, %v1845
  %1847 = vmatprep.mubr.f32.mxu0 0.0
  %1848 = vmatmul.mubr.f32.gmra.mrb[0].mxu0 %v1438
  %v1849 = vpop.f32.mrb[0].mxu0
  %v1850 = vadd.f32 %v1186, %v1849
  %v1851 = vpop.f32.mrb[0].mxu0
  %v1852 = vadd.f32 %v1187, %v1851
  %1853 = vmatprep.mubr.f32.mxu0 0.0
  %1854 = vmatmul.mubr.f32.gmra.mrb[0].mxu0 %v1441
  %v1855 = vpop.f32.mrb[0].mxu0
  %v1856 = vadd.f32 %v1190, %v1855
  %v1857 = vpop.f32.mrb[0].mxu0
  %v1858 = vadd.f32 %v1191, %v1857
  %1859 = vmatprep.mubr.f32.mxu0 0.0
  %1860 = vmatmul.mubr.f32.gmra.mrb[0].mxu0 %v1444
  %v1861 = vpop.f32.mrb[0].mxu0
  %v1862 = vadd.f32 %v1194, %v1861
  %v1863 = vpop.f32.mrb[0].mxu0
  %v1864 = vadd.f32 %v1195, %v1863
  %1865 = vmatprep.mubr.f32.mxu0 0.0
  %1866 = vmatmul.mubr.f32.gmra.mrb[0].mxu0 %v1447
  %v1867 = vpop.f32.mrb[0].mxu0
  %v1868 = vadd.f32 %v1198, %v1867
  %v1869 = vpop.f32.mrb[0].mxu0
  %v1870 = vadd.f32 %v1199, %v1869
  %1871 = vmatprep.mubr.f32.mxu0 0.0
  %1872 = vmatmul.mubr.f32.gmra.mrb[0].mxu0 %v1450
  %v1873 = vpop.f32.mrb[0].mxu0
  %v1874 = vadd.f32 %v1202, %v1873
  %v1875 = vpop.f32.mrb[0].mxu0
  %v1876 = vadd.f32 %v1203, %v1875
  %1877 = vmatprep.mubr.f32.mxu0 0.0
  %1878 = vmatmul.mubr.f32.gmra.mrb[0].mxu0 %v1453
  %v1879 = vpop.f32.mrb[0].mxu0
  %v1880 = vadd.f32 %v1206, %v1879
  %v1881 = vpop.f32.mrb[0].mxu0
  %v1882 = vadd.f32 %v1207, %v1881
  %1883 = vmatprep.mubr.f32.mxu0 0.0
  %1884 = vmatmul.mubr.f32.gmra.mrb[0].mxu0 %v1456
  %v1885 = vpop.f32.mrb[0].mxu0
  %v1886 = vadd.f32 %v1210, %v1885
  %v1887 = vpop.f32.mrb[0].mxu0
  %v1888 = vadd.f32 %v1211, %v1887
  %1889 = vmatprep.mubr.f32.mxu0 0.0
  %1890 = vmatmul.mubr.f32.gmra.mrb[0].mxu0 %v1459
  %v1891 = vpop.f32.mrb[0].mxu0
  %v1892 = vadd.f32 %v1214, %v1891
  %v1893 = vpop.f32.mrb[0].mxu0
  %v1894 = vadd.f32 %v1215, %v1893
  %1895 = vmatprep.mubr.f32.mxu0 0.0
  %1896 = vmatmul.mubr.f32.gmra.mrb[0].mxu0 %v1462
  %v1897 = vpop.f32.mrb[0].mxu0
  %v1898 = vadd.f32 %v1218, %v1897
  %v1899 = vpop.f32.mrb[0].mxu0
  %v1900 = vadd.f32 %v1219, %v1899
  %1901 = vmatprep.mubr.f32.mxu0 0.0
  %1902 = vmatmul.mubr.f32.gmra.mrb[0].mxu0 %v1465
  %v1903 = vpop.f32.mrb[0].mxu0
  %v1904 = vadd.f32 %v1222, %v1903
  %v1905 = vpop.f32.mrb[0].mxu0
  %v1906 = vadd.f32 %v1223, %v1905
  %1907 = vmatprep.mubr.f32.mxu0 0.0
  %1908 = vmatmul.mubr.f32.gmra.mrb[0].mxu0 %v1468
  %v1909 = vpop.f32.mrb[0].mxu0
  %v1910 = vadd.f32 %v1226, %v1909
  %v1911 = vpop.f32.mrb[0].mxu0
  %v1912 = vadd.f32 %v1227, %v1911
  %1913 = vmatprep.mubr.f32.mxu0 0.0
  %1914 = vmatmul.mubr.f32.gmra.mrb[0].mxu0 %v1471
  %v1915 = vpop.f32.mrb[0].mxu0
  %v1916 = vadd.f32 %v1230, %v1915
  %v1917 = vpop.f32.mrb[0].mxu0
  %v1918 = vadd.f32 %v1231, %v1917
  %1919 = vmatprep.mubr.f32.mxu0 0.0
  %1920 = vmatmul.mubr.f32.gmra.mrb[0].mxu0 %v1474
  %v1921 = vpop.f32.mrb[0].mxu0
  %v1922 = vadd.f32 %v1234, %v1921
  %v1923 = vpop.f32.mrb[0].mxu0
  %v1924 = vadd.f32 %v1235, %v1923
  %1925 = vdwg.mxu0
  %v1926 = vmul.f32 %v1671, 1.442695
  %v1927 = vpow.pop %v1926
  %v1928 = vmul.f32 %v1673, 1.442695
  %v1929 = vpow.pop %v1928
  %v1930 = vmul.f32 %v1832, 1.442695
  %v1931 = vpow.pop %v1930
  %v1932 = vmul.f32 %v1834, 1.442695
  %v1933 = vpow.pop %v1932
  %v1934 = vmul.f32 %v1677, 1.442695
  %v1935 = vpow.pop %v1934
  %v1936 = vmul.f32 %v1679, 1.442695
  %v1937 = vpow.pop %v1936
  %v1938 = vmul.f32 %v1838, 1.442695
  %v1939 = vpow.pop %v1938
  %v1940 = vmul.f32 %v1840, 1.442695
  %v1941 = vpow.pop %v1940
  %v1942 = vmul.f32 %v1683, 1.442695
  %v1943 = vpow.pop %v1942
  %v1944 = vmul.f32 %v1685, 1.442695
  %v1945 = vpow.pop %v1944
  %v1946 = vmul.f32 %v1844, 1.442695
  %v1947 = vpow.pop %v1946
  %v1948 = vmul.f32 %v1846, 1.442695
  %v1949 = vpow.pop %v1948
  %v1950 = vmul.f32 %v1689, 1.442695
  %v1951 = vpow.pop %v1950
  %v1952 = vmul.f32 %v1691, 1.442695
  %v1953 = vpow.pop %v1952
  %v1954 = vmul.f32 %v1850, 1.442695
  %v1955 = vpow.pop %v1954
  %v1956 = vmul.f32 %v1852, 1.442695
  %v1957 = vpow.pop %v1956
  %v1958 = vmul.f32 %v1695, 1.442695
  %v1959 = vpow.pop %v1958
  %v1960 = vmul.f32 %v1697, 1.442695
  %v1961 = vpow.pop %v1960
  %v1962 = vmul.f32 %v1856, 1.442695
  %v1963 = vpow.pop %v1962
  %v1964 = vmul.f32 %v1858, 1.442695
  %v1965 = vpow.pop %v1964
  %v1966 = vmul.f32 %v1701, 1.442695
  %v1967 = vpow.pop %v1966
  %v1968 = vmul.f32 %v1703, 1.442695
  %v1969 = vpow.pop %v1968
  %v1970 = vmul.f32 %v1862, 1.442695
  %v1971 = vpow.pop %v1970
  %v1972 = vmul.f32 %v1864, 1.442695
  %v1973 = vpow.pop %v1972
  %v1974 = vmul.f32 %v1707, 1.442695
  %v1975 = vpow.pop %v1974
  %v1976 = vmul.f32 %v1709, 1.442695
  %v1977 = vpow.pop %v1976
  %v1978 = vmul.f32 %v1868, 1.442695
  %v1979 = vpow.pop %v1978
  %v1980 = vmul.f32 %v1870, 1.442695
  %v1981 = vpow.pop %v1980
  %v1982 = vmul.f32 %v1713, 1.442695
  %v1983 = vpow.pop %v1982
  %v1984 = vmul.f32 %v1715, 1.442695
  %v1985 = vpow.pop %v1984
  %v1986 = vmul.f32 %v1874, 1.442695
  %v1987 = vpow.pop %v1986
  %v1988 = vmul.f32 %v1876, 1.442695
  %v1989 = vpow.pop %v1988
  %v1990 = vmul.f32 %v1719, 1.442695
  %v1991 = vpow.pop %v1990
  %v1992 = vmul.f32 %v1721, 1.442695
  %v1993 = vpow.pop %v1992
  %v1994 = vmul.f32 %v1880, 1.442695
  %v1995 = vpow.pop %v1994
  %v1996 = vmul.f32 %v1882, 1.442695
  %v1997 = vpow.pop %v1996
  %v1998 = vmul.f32 %v1725, 1.442695
  %v1999 = vpow.pop %v1998
  %v2000 = vmul.f32 %v1727, 1.442695
  %v2001 = vpow.pop %v2000
  %v2002 = vmul.f32 %v1886, 1.442695
  %v2003 = vpow.pop %v2002
  %v2004 = vmul.f32 %v1888, 1.442695
  %v2005 = vpow.pop %v2004
  %v2006 = vmul.f32 %v1731, 1.442695
  %v2007 = vpow.pop %v2006
  %v2008 = vmul.f32 %v1733, 1.442695
  %v2009 = vpow.pop %v2008
  %v2010 = vmul.f32 %v1892, 1.442695
  %v2011 = vpow.pop %v2010
  %v2012 = vmul.f32 %v1894, 1.442695
  %v2013 = vpow.pop %v2012
  %v2014 = vmul.f32 %v1737, 1.442695
  %v2015 = vpow.pop %v2014
  %v2016 = vmul.f32 %v1739, 1.442695
  %v2017 = vpow.pop %v2016
  %v2018 = vmul.f32 %v1898, 1.442695
  %v2019 = vpow.pop %v2018
  %v2020 = vmul.f32 %v1900, 1.442695
  %v2021 = vpow.pop %v2020
  %v2022 = vmul.f32 %v1743, 1.442695
  %v2023 = vpow.pop %v2022
  %v2024 = vmul.f32 %v1745, 1.442695
  %v2025 = vpow.pop %v2024
  %v2026 = vmul.f32 %v1904, 1.442695
  %v2027 = vpow.pop %v2026
  %v2028 = vmul.f32 %v1906, 1.442695
  %v2029 = vpow.pop %v2028
  %v2030 = vmul.f32 %v1749, 1.442695
  %v2031 = vpow.pop %v2030
  %v2032 = vmul.f32 %v1751, 1.442695
  %v2033 = vpow.pop %v2032
  %v2034 = vmul.f32 %v1910, 1.442695
  %v2035 = vpow.pop %v2034
  %v2036 = vmul.f32 %v1912, 1.442695
  %v2037 = vpow.pop %v2036
  %v2038 = vmul.f32 %v1755, 1.442695
  %v2039 = vpow.pop %v2038
  %v2040 = vmul.f32 %v1757, 1.442695
  %v2041 = vpow.pop %v2040
  %v2042 = vmul.f32 %v1916, 1.442695
  %v2043 = vpow.pop %v2042
  %v2044 = vmul.f32 %v1918, 1.442695
  %v2045 = vpow.pop %v2044
  %v2046 = vmul.f32 %v1761, 1.442695
  %v2047 = vpow.pop %v2046
  %v2048 = vmul.f32 %v1763, 1.442695
  %v2049 = vpow.pop %v2048
  %v2050 = vmul.f32 %v1922, 1.442695
  %v2051 = vpow.pop %v2050
  %v2052 = vmul.f32 %v1924, 1.442695
  %v2053 = vpow.pop %v2052
  %v2054 = vld [vmem:[%s7] sm:$0xff]
  %v2055 = vld [vmem:[%s7 + $0x8] sm:$0xff]
  %v2056 = vld [vmem:[%s7 + $0x10] sm:$0xff]
  %v2057 = vld [vmem:[%s7 + $0x18] sm:$0xff]
  %v2058 = vld [vmem:[%s7 + $0x20] sm:$0xff]
  %v2059 = vld [vmem:[%s7 + $0x28] sm:$0xff]
  %v2060 = vld [vmem:[%s7 + $0x30] sm:$0xff]
  %v2061 = vld [vmem:[%s7 + $0x38] sm:$0xff]
  %v2062 = vld [vmem:[%s7 + $0x40] sm:$0xff]
  %v2063 = vld [vmem:[%s7 + $0x48] sm:$0xff]
  %v2064 = vld [vmem:[%s7 + $0x50] sm:$0xff]
  %v2065 = vld [vmem:[%s7 + $0x58] sm:$0xff]
  %v2066 = vld [vmem:[%s7 + $0x60] sm:$0xff]
  %v2067 = vld [vmem:[%s7 + $0x68] sm:$0xff]
  %v2068 = vld [vmem:[%s7 + $0x70] sm:$0xff]
  %v2069 = vld [vmem:[%s7 + $0x78] sm:$0xff]
  %v2070 = vld [vmem:[%s7 + $0x80] sm:$0xff]
  %v2071 = vld [vmem:[%s7 + $0x88] sm:$0xff]
  %v2072 = vld [vmem:[%s7 + $0x90] sm:$0xff]
  %v2073 = vld [vmem:[%s7 + $0x98] sm:$0xff]
  %v2074 = vld [vmem:[%s7 + $0xa0] sm:$0xff]
  %v2075 = vld [vmem:[%s7 + $0xa8] sm:$0xff]
  %v2076 = vld [vmem:[%s7 + $0xb0] sm:$0xff]
  %v2077 = vld [vmem:[%s7 + $0xb8] sm:$0xff]
  %v2078 = vld [vmem:[%s7 + $0xc0] sm:$0xff]
  %v2079 = vld [vmem:[%s7 + $0xc8] sm:$0xff]
  %v2080 = vld [vmem:[%s7 + $0xd0] sm:$0xff]
  %v2081 = vld [vmem:[%s7 + $0xd8] sm:$0xff]
  %v2082 = vld [vmem:[%s7 + $0xe0] sm:$0xff]
  %v2083 = vld [vmem:[%s7 + $0xe8] sm:$0xff]
  %v2084 = vld [vmem:[%s7 + $0xf0] sm:$0xff]
  %v2085 = vld [vmem:[%s7 + $0xf8] sm:$0xff]
  %v2086 = vld [vmem:[%s7 + $0x100] sm:$0xff]
  %v2087 = vld [vmem:[%s7 + $0x108] sm:$0xff]
  %v2088 = vld [vmem:[%s7 + $0x110] sm:$0xff]
  %v2089 = vld [vmem:[%s7 + $0x118] sm:$0xff]
  %v2090 = vld [vmem:[%s7 + $0x120] sm:$0xff]
  %v2091 = vld [vmem:[%s7 + $0x128] sm:$0xff]
  %v2092 = vld [vmem:[%s7 + $0x130] sm:$0xff]
  %v2093 = vld [vmem:[%s7 + $0x138] sm:$0xff]
  %v2094 = vld [vmem:[%s7 + $0x140] sm:$0xff]
  %v2095 = vld [vmem:[%s7 + $0x148] sm:$0xff]
  %v2096 = vld [vmem:[%s7 + $0x150] sm:$0xff]
  %v2097 = vld [vmem:[%s7 + $0x158] sm:$0xff]
  %v2098 = vld [vmem:[%s7 + $0x160] sm:$0xff]
  %v2099 = vld [vmem:[%s7 + $0x168] sm:$0xff]
  %v2100 = vld [vmem:[%s7 + $0x170] sm:$0xff]
  %v2101 = vld [vmem:[%s7 + $0x178] sm:$0xff]
  %v2102 = vld [vmem:[%s7 + $0x180] sm:$0xff]
  %v2103 = vld [vmem:[%s7 + $0x188] sm:$0xff]
  %v2104 = vld [vmem:[%s7 + $0x190] sm:$0xff]
  %v2105 = vld [vmem:[%s7 + $0x198] sm:$0xff]
  %v2106 = vld [vmem:[%s7 + $0x1a0] sm:$0xff]
  %v2107 = vld [vmem:[%s7 + $0x1a8] sm:$0xff]
  %v2108 = vld [vmem:[%s7 + $0x1b0] sm:$0xff]
  %v2109 = vld [vmem:[%s7 + $0x1b8] sm:$0xff]
  %v2110 = vld [vmem:[%s7 + $0x1c0] sm:$0xff]
  %v2111 = vld [vmem:[%s7 + $0x1c8] sm:$0xff]
  %v2112 = vld [vmem:[%s7 + $0x1d0] sm:$0xff]
  %v2113 = vld [vmem:[%s7 + $0x1d8] sm:$0xff]
  %v2114 = vld [vmem:[%s7 + $0x1e0] sm:$0xff]
  %v2115 = vld [vmem:[%s7 + $0x1e8] sm:$0xff]
  %v2116 = vld [vmem:[%s7 + $0x1f0] sm:$0xff]
  %v2117 = vld [vmem:[%s7 + $0x1f8] sm:$0xff]
  %2118 = vmatprep.subr.mxu0 0.0
  %2119 = vmatpush1.msra.mxu0 %v2054
  %2120 = vmatprep.subr.mxu0 0.0
  %2121 = vmatpush1.msra.mxu0 %v2055
  %2122 = vmatprep.subr.mxu0 0.0
  %2123 = vmatpush1.msra.mxu0 %v2056
  %2124 = vmatprep.subr.mxu0 0.0
  %2125 = vmatpush1.msra.mxu0 %v2057
  %2126 = vmatprep.subr.mxu0 0.0
  %2127 = vmatpush1.msra.mxu0 %v2058
  %2128 = vmatprep.subr.mxu0 0.0
  %2129 = vmatpush1.msra.mxu0 %v2059
  %2130 = vmatprep.subr.mxu0 0.0
  %2131 = vmatpush1.msra.mxu0 %v2060
  %2132 = vmatprep.subr.mxu0 0.0
  %2133 = vmatpush1.msra.mxu0 %v2061
  %2134 = vmatprep.subr.mxu0 0.0
  %2135 = vmatpush1.msra.mxu0 %v2062
  %2136 = vmatprep.subr.mxu0 0.0
  %2137 = vmatpush1.msra.mxu0 %v2063
  %2138 = vmatprep.subr.mxu0 0.0
  %2139 = vmatpush1.msra.mxu0 %v2064
  %2140 = vmatprep.subr.mxu0 0.0
  %2141 = vmatpush1.msra.mxu0 %v2065
  %2142 = vmatprep.subr.mxu0 0.0
  %2143 = vmatpush1.msra.mxu0 %v2066
  %2144 = vmatprep.subr.mxu0 0.0
  %2145 = vmatpush1.msra.mxu0 %v2067
  %2146 = vmatprep.subr.mxu0 0.0
  %2147 = vmatpush1.msra.mxu0 %v2068
  %2148 = vmatprep.subr.mxu0 0.0
  %2149 = vmatpush1.msra.mxu0 %v2069
  %2150 = vmatprep.subr.mxu0 0.0
  %2151 = vmatpush1.msra.mxu0 %v2070
  %2152 = vmatprep.subr.mxu0 0.0
  %2153 = vmatpush1.msra.mxu0 %v2071
  %2154 = vmatprep.subr.mxu0 0.0
  %2155 = vmatpush1.msra.mxu0 %v2072
  %2156 = vmatprep.subr.mxu0 0.0
  %2157 = vmatpush1.msra.mxu0 %v2073
  %2158 = vmatprep.subr.mxu0 0.0
  %2159 = vmatpush1.msra.mxu0 %v2074
  %2160 = vmatprep.subr.mxu0 0.0
  %2161 = vmatpush1.msra.mxu0 %v2075
  %2162 = vmatprep.subr.mxu0 0.0
  %2163 = vmatpush1.msra.mxu0 %v2076
  %2164 = vmatprep.subr.mxu0 0.0
  %2165 = vmatpush1.msra.mxu0 %v2077
  %2166 = vmatprep.subr.mxu0 0.0
  %2167 = vmatpush1.msra.mxu0 %v2078
  %2168 = vmatprep.subr.mxu0 0.0
  %2169 = vmatpush1.msra.mxu0 %v2079
  %2170 = vmatprep.subr.mxu0 0.0
  %2171 = vmatpush1.msra.mxu0 %v2080
  %2172 = vmatprep.subr.mxu0 0.0
  %2173 = vmatpush1.msra.mxu0 %v2081
  %2174 = vmatprep.subr.mxu0 0.0
  %2175 = vmatpush1.msra.mxu0 %v2082
  %2176 = vmatprep.subr.mxu0 0.0
  %2177 = vmatpush1.msra.mxu0 %v2083
  %2178 = vmatprep.subr.mxu0 0.0
  %2179 = vmatpush1.msra.mxu0 %v2084
  %2180 = vmatprep.subr.mxu0 0.0
  %2181 = vmatpush1.msra.mxu0 %v2085
  %2182 = vmatprep.mubr.f32.mxu0 %v1929
  %2183 = vmatmul.mubr.f32.gmra.mrb[0].mxu0 %v1927
  %v2184 = vpop.f32.mrb[0].mxu0
  %v2185 = vadd.f32 0.0, %v2184
  %v2186 = vpop.f32.mrb[0].mxu0
  %2187 = vmatprep.mubr.f32.mxu0 %v1937
  %2188 = vmatmul.mubr.f32.gmra.mrb[0].mxu0 %v1935
  %v2189 = vpop.f32.mrb[0].mxu0
  %v2190 = vadd.f32 0.0, %v2189
  %v2191 = vpop.f32.mrb[0].mxu0
  %2192 = vmatprep.mubr.f32.mxu0 %v1945
  %2193 = vmatmul.mubr.f32.gmra.mrb[0].mxu0 %v1943
  %v2194 = vpop.f32.mrb[0].mxu0
  %v2195 = vadd.f32 0.0, %v2194
  %v2196 = vpop.f32.mrb[0].mxu0
  %2197 = vmatprep.mubr.f32.mxu0 %v1953
  %2198 = vmatmul.mubr.f32.gmra.mrb[0].mxu0 %v1951
  %v2199 = vpop.f32.mrb[0].mxu0
  %v2200 = vadd.f32 0.0, %v2199
  %v2201 = vpop.f32.mrb[0].mxu0
  %2202 = vmatprep.mubr.f32.mxu0 %v1961
  %2203 = vmatmul.mubr.f32.gmra.mrb[0].mxu0 %v1959
  %v2204 = vpop.f32.mrb[0].mxu0
  %v2205 = vadd.f32 0.0, %v2204
  %v2206 = vpop.f32.mrb[0].mxu0
  %2207 = vmatprep.mubr.f32.mxu0 %v1969
  %2208 = vmatmul.mubr.f32.gmra.mrb[0].mxu0 %v1967
  %v2209 = vpop.f32.mrb[0].mxu0
  %v2210 = vadd.f32 0.0, %v2209
  %v2211 = vpop.f32.mrb[0].mxu0
  %2212 = vmatprep.mubr.f32.mxu0 %v1977
  %2213 = vmatmul.mubr.f32.gmra.mrb[0].mxu0 %v1975
  %v2214 = vpop.f32.mrb[0].mxu0
  %v2215 = vadd.f32 0.0, %v2214
  %v2216 = vpop.f32.mrb[0].mxu0
  %2217 = vmatprep.mubr.f32.mxu0 %v1985
  %2218 = vmatmul.mubr.f32.gmra.mrb[0].mxu0 %v1983
  %v2219 = vpop.f32.mrb[0].mxu0
  %v2220 = vadd.f32 0.0, %v2219
  %v2221 = vpop.f32.mrb[0].mxu0
  %2222 = vmatprep.mubr.f32.mxu0 %v1993
  %2223 = vmatmul.mubr.f32.gmra.mrb[0].mxu0 %v1991
  %v2224 = vpop.f32.mrb[0].mxu0
  %v2225 = vadd.f32 0.0, %v2224
  %v2226 = vpop.f32.mrb[0].mxu0
  %2227 = vmatprep.mubr.f32.mxu0 %v2001
  %2228 = vmatmul.mubr.f32.gmra.mrb[0].mxu0 %v1999
  %v2229 = vpop.f32.mrb[0].mxu0
  %v2230 = vadd.f32 0.0, %v2229
  %v2231 = vpop.f32.mrb[0].mxu0
  %2232 = vmatprep.mubr.f32.mxu0 %v2009
  %2233 = vmatmul.mubr.f32.gmra.mrb[0].mxu0 %v2007
  %v2234 = vpop.f32.mrb[0].mxu0
  %v2235 = vadd.f32 0.0, %v2234
  %v2236 = vpop.f32.mrb[0].mxu0
  %2237 = vmatprep.mubr.f32.mxu0 %v2017
  %2238 = vmatmul.mubr.f32.gmra.mrb[0].mxu0 %v2015
  %v2239 = vpop.f32.mrb[0].mxu0
  %v2240 = vadd.f32 0.0, %v2239
  %v2241 = vpop.f32.mrb[0].mxu0
  %2242 = vmatprep.mubr.f32.mxu0 %v2025
  %2243 = vmatmul.mubr.f32.gmra.mrb[0].mxu0 %v2023
  %v2244 = vpop.f32.mrb[0].mxu0
  %v2245 = vadd.f32 0.0, %v2244
  %v2246 = vpop.f32.mrb[0].mxu0
  %2247 = vmatprep.mubr.f32.mxu0 %v2033
  %2248 = vmatmul.mubr.f32.gmra.mrb[0].mxu0 %v2031
  %v2249 = vpop.f32.mrb[0].mxu0
  %v2250 = vadd.f32 0.0, %v2249
  %v2251 = vpop.f32.mrb[0].mxu0
  %2252 = vmatprep.mubr.f32.mxu0 %v2041
  %2253 = vmatmul.mubr.f32.gmra.mrb[0].mxu0 %v2039
  %v2254 = vpop.f32.mrb[0].mxu0
  %v2255 = vadd.f32 0.0, %v2254
  %v2256 = vpop.f32.mrb[0].mxu0
  %2257 = vmatprep.mubr.f32.mxu0 %v2049
  %2258 = vmatmul.mubr.f32.gmra.mrb[0].mxu0 %v2047
  %v2259 = vpop.f32.mrb[0].mxu0
  %v2260 = vadd.f32 0.0, %v2259
  %v2261 = vpop.f32.mrb[0].mxu0
  %2262 = vdwg.mxu0
  %2263 = vmatprep.subr.mxu0 0.0
  %2264 = vmatpush1.msra.mxu0 %v2086
  %2265 = vmatprep.subr.mxu0 0.0
  %2266 = vmatpush1.msra.mxu0 %v2087
  %2267 = vmatprep.subr.mxu0 0.0
  %2268 = vmatpush1.msra.mxu0 %v2088
  %2269 = vmatprep.subr.mxu0 0.0
  %2270 = vmatpush1.msra.mxu0 %v2089
  %2271 = vmatprep.subr.mxu0 0.0
  %2272 = vmatpush1.msra.mxu0 %v2090
  %2273 = vmatprep.subr.mxu0 0.0
  %2274 = vmatpush1.msra.mxu0 %v2091
  %2275 = vmatprep.subr.mxu0 0.0
  %2276 = vmatpush1.msra.mxu0 %v2092
  %2277 = vmatprep.subr.mxu0 0.0
  %2278 = vmatpush1.msra.mxu0 %v2093
  %2279 = vmatprep.subr.mxu0 0.0
  %2280 = vmatpush1.msra.mxu0 %v2094
  %2281 = vmatprep.subr.mxu0 0.0
  %2282 = vmatpush1.msra.mxu0 %v2095
  %2283 = vmatprep.subr.mxu0 0.0
  %2284 = vmatpush1.msra.mxu0 %v2096
  %2285 = vmatprep.subr.mxu0 0.0
  %2286 = vmatpush1.msra.mxu0 %v2097
  %2287 = vmatprep.subr.mxu0 0.0
  %2288 = vmatpush1.msra.mxu0 %v2098
  %2289 = vmatprep.subr.mxu0 0.0
  %2290 = vmatpush1.msra.mxu0 %v2099
  %2291 = vmatprep.subr.mxu0 0.0
  %2292 = vmatpush1.msra.mxu0 %v2100
  %2293 = vmatprep.subr.mxu0 0.0
  %2294 = vmatpush1.msra.mxu0 %v2101
  %2295 = vmatprep.subr.mxu0 0.0
  %2296 = vmatpush1.msra.mxu0 %v2102
  %2297 = vmatprep.subr.mxu0 0.0
  %2298 = vmatpush1.msra.mxu0 %v2103
  %2299 = vmatprep.subr.mxu0 0.0
  %2300 = vmatpush1.msra.mxu0 %v2104
  %2301 = vmatprep.subr.mxu0 0.0
  %2302 = vmatpush1.msra.mxu0 %v2105
  %2303 = vmatprep.subr.mxu0 0.0
  %2304 = vmatpush1.msra.mxu0 %v2106
  %2305 = vmatprep.subr.mxu0 0.0
  %2306 = vmatpush1.msra.mxu0 %v2107
  %2307 = vmatprep.subr.mxu0 0.0
  %2308 = vmatpush1.msra.mxu0 %v2108
  %2309 = vmatprep.subr.mxu0 0.0
  %2310 = vmatpush1.msra.mxu0 %v2109
  %2311 = vmatprep.subr.mxu0 0.0
  %2312 = vmatpush1.msra.mxu0 %v2110
  %2313 = vmatprep.subr.mxu0 0.0
  %2314 = vmatpush1.msra.mxu0 %v2111
  %2315 = vmatprep.subr.mxu0 0.0
  %2316 = vmatpush1.msra.mxu0 %v2112
  %2317 = vmatprep.subr.mxu0 0.0
  %2318 = vmatpush1.msra.mxu0 %v2113
  %2319 = vmatprep.subr.mxu0 0.0
  %2320 = vmatpush1.msra.mxu0 %v2114
  %2321 = vmatprep.subr.mxu0 0.0
  %2322 = vmatpush1.msra.mxu0 %v2115
  %2323 = vmatprep.subr.mxu0 0.0
  %2324 = vmatpush1.msra.mxu0 %v2116
  %2325 = vmatprep.subr.mxu0 0.0
  %2326 = vmatpush1.msra.mxu0 %v2117
  %2327 = vmatprep.mubr.f32.mxu0 %v1933
  %2328 = vmatmul.mubr.f32.gmra.mrb[0].mxu0 %v1931
  %v2329 = vpop.f32.mrb[0].mxu0
  %v2330 = vadd.f32 %v2185, %v2329
  %v2331 = vpop.f32.mrb[0].mxu0
  %2332 = vmatprep.mubr.f32.mxu0 %v1941
  %2333 = vmatmul.mubr.f32.gmra.mrb[0].mxu0 %v1939
  %v2334 = vpop.f32.mrb[0].mxu0
  %v2335 = vadd.f32 %v2190, %v2334
  %v2336 = vpop.f32.mrb[0].mxu0
  %2337 = vmatprep.mubr.f32.mxu0 %v1949
  %2338 = vmatmul.mubr.f32.gmra.mrb[0].mxu0 %v1947
  %v2339 = vpop.f32.mrb[0].mxu0
  %v2340 = vadd.f32 %v2195, %v2339
  %v2341 = vpop.f32.mrb[0].mxu0
  %2342 = vmatprep.mubr.f32.mxu0 %v1957
  %2343 = vmatmul.mubr.f32.gmra.mrb[0].mxu0 %v1955
  %v2344 = vpop.f32.mrb[0].mxu0
  %v2345 = vadd.f32 %v2200, %v2344
  %v2346 = vpop.f32.mrb[0].mxu0
  %2347 = vmatprep.mubr.f32.mxu0 %v1965
  %2348 = vmatmul.mubr.f32.gmra.mrb[0].mxu0 %v1963
  %v2349 = vpop.f32.mrb[0].mxu0
  %v2350 = vadd.f32 %v2205, %v2349
  %v2351 = vpop.f32.mrb[0].mxu0
  %2352 = vmatprep.mubr.f32.mxu0 %v1973
  %2353 = vmatmul.mubr.f32.gmra.mrb[0].mxu0 %v1971
  %v2354 = vpop.f32.mrb[0].mxu0
  %v2355 = vadd.f32 %v2210, %v2354
  %v2356 = vpop.f32.mrb[0].mxu0
  %2357 = vmatprep.mubr.f32.mxu0 %v1981
  %2358 = vmatmul.mubr.f32.gmra.mrb[0].mxu0 %v1979
  %v2359 = vpop.f32.mrb[0].mxu0
  %v2360 = vadd.f32 %v2215, %v2359
  %v2361 = vpop.f32.mrb[0].mxu0
  %2362 = vmatprep.mubr.f32.mxu0 %v1989
  %2363 = vmatmul.mubr.f32.gmra.mrb[0].mxu0 %v1987
  %v2364 = vpop.f32.mrb[0].mxu0
  %v2365 = vadd.f32 %v2220, %v2364
  %v2366 = vpop.f32.mrb[0].mxu0
  %2367 = vmatprep.mubr.f32.mxu0 %v1997
  %2368 = vmatmul.mubr.f32.gmra.mrb[0].mxu0 %v1995
  %v2369 = vpop.f32.mrb[0].mxu0
  %v2370 = vadd.f32 %v2225, %v2369
  %v2371 = vpop.f32.mrb[0].mxu0
  %2372 = vmatprep.mubr.f32.mxu0 %v2005
  %2373 = vmatmul.mubr.f32.gmra.mrb[0].mxu0 %v2003
  %v2374 = vpop.f32.mrb[0].mxu0
  %v2375 = vadd.f32 %v2230, %v2374
  %v2376 = vpop.f32.mrb[0].mxu0
  %2377 = vmatprep.mubr.f32.mxu0 %v2013
  %2378 = vmatmul.mubr.f32.gmra.mrb[0].mxu0 %v2011
  %v2379 = vpop.f32.mrb[0].mxu0
  %v2380 = vadd.f32 %v2235, %v2379
  %v2381 = vpop.f32.mrb[0].mxu0
  %2382 = vmatprep.mubr.f32.mxu0 %v2021
  %2383 = vmatmul.mubr.f32.gmra.mrb[0].mxu0 %v2019
  %v2384 = vpop.f32.mrb[0].mxu0
  %v2385 = vadd.f32 %v2240, %v2384
  %v2386 = vpop.f32.mrb[0].mxu0
  %2387 = vmatprep.mubr.f32.mxu0 %v2029
  %2388 = vmatmul.mubr.f32.gmra.mrb[0].mxu0 %v2027
  %v2389 = vpop.f32.mrb[0].mxu0
  %v2390 = vadd.f32 %v2245, %v2389
  %v2391 = vpop.f32.mrb[0].mxu0
  %2392 = vmatprep.mubr.f32.mxu0 %v2037
  %2393 = vmatmul.mubr.f32.gmra.mrb[0].mxu0 %v2035
  %v2394 = vpop.f32.mrb[0].mxu0
  %v2395 = vadd.f32 %v2250, %v2394
  %v2396 = vpop.f32.mrb[0].mxu0
  %2397 = vmatprep.mubr.f32.mxu0 %v2045
  %2398 = vmatmul.mubr.f32.gmra.mrb[0].mxu0 %v2043
  %v2399 = vpop.f32.mrb[0].mxu0
  %v2400 = vadd.f32 %v2255, %v2399
  %v2401 = vpop.f32.mrb[0].mxu0
  %2402 = vmatprep.mubr.f32.mxu0 %v2053
  %2403 = vmatmul.mubr.f32.gmra.mrb[0].mxu0 %v2051
  %v2404 = vpop.f32.mrb[0].mxu0
  %v2405 = vadd.f32 %v2260, %v2404
  %v2406 = vpop.f32.mrb[0].mxu0
  %2407 = vdwg.mxu0
  %v2408 = vrcp.pop %v2330
  %v2409 = vrcp.pop %v2335
  %v2410 = vrcp.pop %v2340
  %v2411 = vrcp.pop %v2345
  %v2412 = vrcp.pop %v2350
  %v2413 = vrcp.pop %v2355
  %v2414 = vrcp.pop %v2360
  %v2415 = vrcp.pop %v2365
  %v2416 = vrcp.pop %v2370
  %v2417 = vrcp.pop %v2375
  %v2418 = vrcp.pop %v2380
  %v2419 = vrcp.pop %v2385
  %v2420 = vrcp.pop %v2390
  %v2421 = vrcp.pop %v2395
  %v2422 = vrcp.pop %v2400
  %v2423 = vrcp.pop %v2405
  %2488 = vrot.lane.b32.xlu0 %v1108, 64
  %v2489 = vpop.permute.xlu0 %2488
  %2490 = vrot.lane.b32.xlu0 %v1109, 64
  %v2491 = vpop.permute.xlu0 %2490
  %2492 = vrot.lane.b32.xlu0 %v1110, 64
  %v2493 = vpop.permute.xlu0 %2492
  %2494 = vrot.lane.b32.xlu0 %v1111, 64
  %v2495 = vpop.permute.xlu0 %2494
  %2496 = vrot.lane.b32.xlu0 %v1112, 64
  %v2497 = vpop.permute.xlu0 %2496
  %2498 = vrot.lane.b32.xlu0 %v1113, 64
  %v2499 = vpop.permute.xlu0 %2498
  %2500 = vrot.lane.b32.xlu0 %v1114, 64
  %v2501 = vpop.permute.xlu0 %2500
  %2502 = vrot.lane.b32.xlu0 %v1115, 64
  %v2503 = vpop.permute.xlu0 %2502
  %2504 = vrot.lane.b32.xlu0 %v1116, 64
  %v2505 = vpop.permute.xlu0 %2504
  %2506 = vrot.lane.b32.xlu0 %v1117, 64
  %v2507 = vpop.permute.xlu0 %2506
  %2508 = vrot.lane.b32.xlu0 %v1118, 64
  %v2509 = vpop.permute.xlu0 %2508
  %2510 = vrot.lane.b32.xlu0 %v1119, 64
  %v2511 = vpop.permute.xlu0 %2510
  %2512 = vrot.lane.b32.xlu0 %v1120, 64
  %v2513 = vpop.permute.xlu0 %2512
  %2514 = vrot.lane.b32.xlu0 %v1121, 64
  %v2515 = vpop.permute.xlu0 %2514
  %2516 = vrot.lane.b32.xlu0 %v1122, 64
  %v2517 = vpop.permute.xlu0 %2516
  %2518 = vrot.lane.b32.xlu0 %v1123, 64
  %v2519 = vpop.permute.xlu0 %2518
  %2520 = vrot.lane.b32.xlu0 %v1124, 64
  %v2521 = vpop.permute.xlu0 %2520
  %2522 = vrot.lane.b32.xlu0 %v1125, 64
  %v2523 = vpop.permute.xlu0 %2522
  %2524 = vrot.lane.b32.xlu0 %v1126, 64
  %v2525 = vpop.permute.xlu0 %2524
  %2526 = vrot.lane.b32.xlu0 %v1127, 64
  %v2527 = vpop.permute.xlu0 %2526
  %2528 = vrot.lane.b32.xlu0 %v1128, 64
  %v2529 = vpop.permute.xlu0 %2528
  %2530 = vrot.lane.b32.xlu0 %v1129, 64
  %v2531 = vpop.permute.xlu0 %2530
  %2532 = vrot.lane.b32.xlu0 %v1130, 64
  %v2533 = vpop.permute.xlu0 %2532
  %2534 = vrot.lane.b32.xlu0 %v1131, 64
  %v2535 = vpop.permute.xlu0 %2534
  %2536 = vrot.lane.b32.xlu0 %v1132, 64
  %v2537 = vpop.permute.xlu0 %2536
  %2538 = vrot.lane.b32.xlu0 %v1133, 64
  %v2539 = vpop.permute.xlu0 %2538
  %2540 = vrot.lane.b32.xlu0 %v1134, 64
  %v2541 = vpop.permute.xlu0 %2540
  %2542 = vrot.lane.b32.xlu0 %v1135, 64
  %v2543 = vpop.permute.xlu0 %2542
  %2544 = vrot.lane.b32.xlu0 %v1136, 64
  %v2545 = vpop.permute.xlu0 %2544
  %2546 = vrot.lane.b32.xlu0 %v1137, 64
  %v2547 = vpop.permute.xlu0 %2546
  %2548 = vrot.lane.b32.xlu0 %v1138, 64
  %v2549 = vpop.permute.xlu0 %2548
  %2550 = vrot.lane.b32.xlu0 %v1139, 64
  %v2551 = vpop.permute.xlu0 %2550
  %2552 = vrot.lane.b32.xlu0 %v1140, 64
  %v2553 = vpop.permute.xlu0 %2552
  %2554 = vrot.lane.b32.xlu0 %v1141, 64
  %v2555 = vpop.permute.xlu0 %2554
  %2556 = vrot.lane.b32.xlu0 %v1142, 64
  %v2557 = vpop.permute.xlu0 %2556
  %2558 = vrot.lane.b32.xlu0 %v1143, 64
  %v2559 = vpop.permute.xlu0 %2558
  %2560 = vrot.lane.b32.xlu0 %v1144, 64
  %v2561 = vpop.permute.xlu0 %2560
  %2562 = vrot.lane.b32.xlu0 %v1145, 64
  %v2563 = vpop.permute.xlu0 %2562
  %2564 = vrot.lane.b32.xlu0 %v1146, 64
  %v2565 = vpop.permute.xlu0 %2564
  %2566 = vrot.lane.b32.xlu0 %v1147, 64
  %v2567 = vpop.permute.xlu0 %2566
  %2568 = vrot.lane.b32.xlu0 %v1148, 64
  %v2569 = vpop.permute.xlu0 %2568
  %2570 = vrot.lane.b32.xlu0 %v1149, 64
  %v2571 = vpop.permute.xlu0 %2570
  %2572 = vrot.lane.b32.xlu0 %v1150, 64
  %v2573 = vpop.permute.xlu0 %2572
  %2574 = vrot.lane.b32.xlu0 %v1151, 64
  %v2575 = vpop.permute.xlu0 %2574
  %2576 = vrot.lane.b32.xlu0 %v1152, 64
  %v2577 = vpop.permute.xlu0 %2576
  %2578 = vrot.lane.b32.xlu0 %v1153, 64
  %v2579 = vpop.permute.xlu0 %2578
  %2580 = vrot.lane.b32.xlu0 %v1154, 64
  %v2581 = vpop.permute.xlu0 %2580
  %2582 = vrot.lane.b32.xlu0 %v1155, 64
  %v2583 = vpop.permute.xlu0 %2582
  %2584 = vrot.lane.b32.xlu0 %v1156, 64
  %v2585 = vpop.permute.xlu0 %2584
  %2586 = vrot.lane.b32.xlu0 %v1157, 64
  %v2587 = vpop.permute.xlu0 %2586
  %2588 = vrot.lane.b32.xlu0 %v1158, 64
  %v2589 = vpop.permute.xlu0 %2588
  %2590 = vrot.lane.b32.xlu0 %v1159, 64
  %v2591 = vpop.permute.xlu0 %2590
  %2592 = vrot.lane.b32.xlu0 %v1160, 64
  %v2593 = vpop.permute.xlu0 %2592
  %2594 = vrot.lane.b32.xlu0 %v1161, 64
  %v2595 = vpop.permute.xlu0 %2594
  %2596 = vrot.lane.b32.xlu0 %v1162, 64
  %v2597 = vpop.permute.xlu0 %2596
  %2598 = vrot.lane.b32.xlu0 %v1163, 64
  %v2599 = vpop.permute.xlu0 %2598
  %2600 = vrot.lane.b32.xlu0 %v1164, 64
  %v2601 = vpop.permute.xlu0 %2600
  %2602 = vrot.lane.b32.xlu0 %v1165, 64
  %v2603 = vpop.permute.xlu0 %2602
  %2604 = vrot.lane.b32.xlu0 %v1166, 64
  %v2605 = vpop.permute.xlu0 %2604
  %2606 = vrot.lane.b32.xlu0 %v1167, 64
  %v2607 = vpop.permute.xlu0 %2606
  %2608 = vrot.lane.b32.xlu0 %v1168, 64
  %v2609 = vpop.permute.xlu0 %2608
  %2610 = vrot.lane.b32.xlu0 %v1169, 64
  %v2611 = vpop.permute.xlu0 %2610
  %2612 = vrot.lane.b32.xlu0 %v1170, 64
  %v2613 = vpop.permute.xlu0 %2612
  %2614 = vrot.lane.b32.xlu0 %v1171, 64
  %v2615 = vpop.permute.xlu0 %2614
  %2680 = vmatprep.subr.mxu0 0.0
  %2681 = vmatpush1.msra.mxu0 %v2489
  %2682 = vmatprep.subr.mxu0 0.0
  %2683 = vmatpush1.msra.mxu0 %v2491
  %2684 = vmatprep.subr.mxu0 0.0
  %2685 = vmatpush1.msra.mxu0 %v2493
  %2686 = vmatprep.subr.mxu0 0.0
  %2687 = vmatpush1.msra.mxu0 %v2495
  %2688 = vmatprep.subr.mxu0 0.0
  %2689 = vmatpush1.msra.mxu0 %v2497
  %2690 = vmatprep.subr.mxu0 0.0
  %2691 = vmatpush1.msra.mxu0 %v2499
  %2692 = vmatprep.subr.mxu0 0.0
  %2693 = vmatpush1.msra.mxu0 %v2501
  %2694 = vmatprep.subr.mxu0 0.0
  %2695 = vmatpush1.msra.mxu0 %v2503
  %2696 = vmatprep.subr.mxu0 0.0
  %2697 = vmatpush1.msra.mxu0 %v2505
  %2698 = vmatprep.subr.mxu0 0.0
  %2699 = vmatpush1.msra.mxu0 %v2507
  %2700 = vmatprep.subr.mxu0 0.0
  %2701 = vmatpush1.msra.mxu0 %v2509
  %2702 = vmatprep.subr.mxu0 0.0
  %2703 = vmatpush1.msra.mxu0 %v2511
  %2704 = vmatprep.subr.mxu0 0.0
  %2705 = vmatpush1.msra.mxu0 %v2513
  %2706 = vmatprep.subr.mxu0 0.0
  %2707 = vmatpush1.msra.mxu0 %v2515
  %2708 = vmatprep.subr.mxu0 0.0
  %2709 = vmatpush1.msra.mxu0 %v2517
  %2710 = vmatprep.subr.mxu0 0.0
  %2711 = vmatpush1.msra.mxu0 %v2519
  %2712 = vmatprep.subr.mxu0 0.0
  %2713 = vmatpush1.msra.mxu0 %v2521
  %2714 = vmatprep.subr.mxu0 0.0
  %2715 = vmatpush1.msra.mxu0 %v2523
  %2716 = vmatprep.subr.mxu0 0.0
  %2717 = vmatpush1.msra.mxu0 %v2525
  %2718 = vmatprep.subr.mxu0 0.0
  %2719 = vmatpush1.msra.mxu0 %v2527
  %2720 = vmatprep.subr.mxu0 0.0
  %2721 = vmatpush1.msra.mxu0 %v2529
  %2722 = vmatprep.subr.mxu0 0.0
  %2723 = vmatpush1.msra.mxu0 %v2531
  %2724 = vmatprep.subr.mxu0 0.0
  %2725 = vmatpush1.msra.mxu0 %v2533
  %2726 = vmatprep.subr.mxu0 0.0
  %2727 = vmatpush1.msra.mxu0 %v2535
  %2728 = vmatprep.subr.mxu0 0.0
  %2729 = vmatpush1.msra.mxu0 %v2537
  %2730 = vmatprep.subr.mxu0 0.0
  %2731 = vmatpush1.msra.mxu0 %v2539
  %2732 = vmatprep.subr.mxu0 0.0
  %2733 = vmatpush1.msra.mxu0 %v2541
  %2734 = vmatprep.subr.mxu0 0.0
  %2735 = vmatpush1.msra.mxu0 %v2543
  %2736 = vmatprep.subr.mxu0 0.0
  %2737 = vmatpush1.msra.mxu0 %v2545
  %2738 = vmatprep.subr.mxu0 0.0
  %2739 = vmatpush1.msra.mxu0 %v2547
  %2740 = vmatprep.subr.mxu0 0.0
  %2741 = vmatpush1.msra.mxu0 %v2549
  %2742 = vmatprep.subr.mxu0 0.0
  %2743 = vmatpush1.msra.mxu0 %v2551
  %2744 = vmatprep.mubr.f32.mxu0 %v1929
  %2745 = vmatmul.mubr.f32.gmra.mrb[0].mxu0 %v1927
  %v2746 = vpop.f32.mrb[0].mxu0
  %v2747 = vadd.f32 0.0, %v2746
  %v2748 = vpop.f32.mrb[0].mxu0
  %2749 = vmatprep.mubr.f32.mxu0 %v1937
  %2750 = vmatmul.mubr.f32.gmra.mrb[0].mxu0 %v1935
  %v2751 = vpop.f32.mrb[0].mxu0
  %v2752 = vadd.f32 0.0, %v2751
  %v2753 = vpop.f32.mrb[0].mxu0
  %2754 = vmatprep.mubr.f32.mxu0 %v1945
  %2755 = vmatmul.mubr.f32.gmra.mrb[0].mxu0 %v1943
  %v2756 = vpop.f32.mrb[0].mxu0
  %v2757 = vadd.f32 0.0, %v2756
  %v2758 = vpop.f32.mrb[0].mxu0
  %2759 = vmatprep.mubr.f32.mxu0 %v1953
  %2760 = vmatmul.mubr.f32.gmra.mrb[0].mxu0 %v1951
  %v2761 = vpop.f32.mrb[0].mxu0
  %v2762 = vadd.f32 0.0, %v2761
  %v2763 = vpop.f32.mrb[0].mxu0
  %2764 = vmatprep.mubr.f32.mxu0 %v1961
  %2765 = vmatmul.mubr.f32.gmra.mrb[0].mxu0 %v1959
  %v2766 = vpop.f32.mrb[0].mxu0
  %v2767 = vadd.f32 0.0, %v2766
  %v2768 = vpop.f32.mrb[0].mxu0
  %2769 = vmatprep.mubr.f32.mxu0 %v1969
  %2770 = vmatmul.mubr.f32.gmra.mrb[0].mxu0 %v1967
  %v2771 = vpop.f32.mrb[0].mxu0
  %v2772 = vadd.f32 0.0, %v2771
  %v2773 = vpop.f32.mrb[0].mxu0
  %2774 = vmatprep.mubr.f32.mxu0 %v1977
  %2775 = vmatmul.mubr.f32.gmra.mrb[0].mxu0 %v1975
  %v2776 = vpop.f32.mrb[0].mxu0
  %v2777 = vadd.f32 0.0, %v2776
  %v2778 = vpop.f32.mrb[0].mxu0
  %2779 = vmatprep.mubr.f32.mxu0 %v1985
  %2780 = vmatmul.mubr.f32.gmra.mrb[0].mxu0 %v1983
  %v2781 = vpop.f32.mrb[0].mxu0
  %v2782 = vadd.f32 0.0, %v2781
  %v2783 = vpop.f32.mrb[0].mxu0
  %2784 = vmatprep.mubr.f32.mxu0 %v1993
  %2785 = vmatmul.mubr.f32.gmra.mrb[0].mxu0 %v1991
  %v2786 = vpop.f32.mrb[0].mxu0
  %v2787 = vadd.f32 0.0, %v2786
  %v2788 = vpop.f32.mrb[0].mxu0
  %2789 = vmatprep.mubr.f32.mxu0 %v2001
  %2790 = vmatmul.mubr.f32.gmra.mrb[0].mxu0 %v1999
  %v2791 = vpop.f32.mrb[0].mxu0
  %v2792 = vadd.f32 0.0, %v2791
  %v2793 = vpop.f32.mrb[0].mxu0
  %2794 = vmatprep.mubr.f32.mxu0 %v2009
  %2795 = vmatmul.mubr.f32.gmra.mrb[0].mxu0 %v2007
  %v2796 = vpop.f32.mrb[0].mxu0
  %v2797 = vadd.f32 0.0, %v2796
  %v2798 = vpop.f32.mrb[0].mxu0
  %2799 = vmatprep.mubr.f32.mxu0 %v2017
  %2800 = vmatmul.mubr.f32.gmra.mrb[0].mxu0 %v2015
  %v2801 = vpop.f32.mrb[0].mxu0
  %v2802 = vadd.f32 0.0, %v2801
  %v2803 = vpop.f32.mrb[0].mxu0
  %2804 = vmatprep.mubr.f32.mxu0 %v2025
  %2805 = vmatmul.mubr.f32.gmra.mrb[0].mxu0 %v2023
  %v2806 = vpop.f32.mrb[0].mxu0
  %v2807 = vadd.f32 0.0, %v2806
  %v2808 = vpop.f32.mrb[0].mxu0
  %2809 = vmatprep.mubr.f32.mxu0 %v2033
  %2810 = vmatmul.mubr.f32.gmra.mrb[0].mxu0 %v2031
  %v2811 = vpop.f32.mrb[0].mxu0
  %v2812 = vadd.f32 0.0, %v2811
  %v2813 = vpop.f32.mrb[0].mxu0
  %2814 = vmatprep.mubr.f32.mxu0 %v2041
  %2815 = vmatmul.mubr.f32.gmra.mrb[0].mxu0 %v2039
  %v2816 = vpop.f32.mrb[0].mxu0
  %v2817 = vadd.f32 0.0, %v2816
  %v2818 = vpop.f32.mrb[0].mxu0
  %2819 = vmatprep.mubr.f32.mxu0 %v2049
  %2820 = vmatmul.mubr.f32.gmra.mrb[0].mxu0 %v2047
  %v2821 = vpop.f32.mrb[0].mxu0
  %v2822 = vadd.f32 0.0, %v2821
  %v2823 = vpop.f32.mrb[0].mxu0
  %2824 = vdwg.mxu0
  %2825 = vmatprep.subr.mxu0 0.0
  %2826 = vmatpush1.msra.mxu0 %v2553
  %2827 = vmatprep.subr.mxu0 0.0
  %2828 = vmatpush1.msra.mxu0 %v2555
  %2829 = vmatprep.subr.mxu0 0.0
  %2830 = vmatpush1.msra.mxu0 %v2557
  %2831 = vmatprep.subr.mxu0 0.0
  %2832 = vmatpush1.msra.mxu0 %v2559
  %2833 = vmatprep.subr.mxu0 0.0
  %2834 = vmatpush1.msra.mxu0 %v2561
  %2835 = vmatprep.subr.mxu0 0.0
  %2836 = vmatpush1.msra.mxu0 %v2563
  %2837 = vmatprep.subr.mxu0 0.0
  %2838 = vmatpush1.msra.mxu0 %v2565
  %2839 = vmatprep.subr.mxu0 0.0
  %2840 = vmatpush1.msra.mxu0 %v2567
  %2841 = vmatprep.subr.mxu0 0.0
  %2842 = vmatpush1.msra.mxu0 %v2569
  %2843 = vmatprep.subr.mxu0 0.0
  %2844 = vmatpush1.msra.mxu0 %v2571
  %2845 = vmatprep.subr.mxu0 0.0
  %2846 = vmatpush1.msra.mxu0 %v2573
  %2847 = vmatprep.subr.mxu0 0.0
  %2848 = vmatpush1.msra.mxu0 %v2575
  %2849 = vmatprep.subr.mxu0 0.0
  %2850 = vmatpush1.msra.mxu0 %v2577
  %2851 = vmatprep.subr.mxu0 0.0
  %2852 = vmatpush1.msra.mxu0 %v2579
  %2853 = vmatprep.subr.mxu0 0.0
  %2854 = vmatpush1.msra.mxu0 %v2581
  %2855 = vmatprep.subr.mxu0 0.0
  %2856 = vmatpush1.msra.mxu0 %v2583
  %2857 = vmatprep.subr.mxu0 0.0
  %2858 = vmatpush1.msra.mxu0 %v2585
  %2859 = vmatprep.subr.mxu0 0.0
  %2860 = vmatpush1.msra.mxu0 %v2587
  %2861 = vmatprep.subr.mxu0 0.0
  %2862 = vmatpush1.msra.mxu0 %v2589
  %2863 = vmatprep.subr.mxu0 0.0
  %2864 = vmatpush1.msra.mxu0 %v2591
  %2865 = vmatprep.subr.mxu0 0.0
  %2866 = vmatpush1.msra.mxu0 %v2593
  %2867 = vmatprep.subr.mxu0 0.0
  %2868 = vmatpush1.msra.mxu0 %v2595
  %2869 = vmatprep.subr.mxu0 0.0
  %2870 = vmatpush1.msra.mxu0 %v2597
  %2871 = vmatprep.subr.mxu0 0.0
  %2872 = vmatpush1.msra.mxu0 %v2599
  %2873 = vmatprep.subr.mxu0 0.0
  %2874 = vmatpush1.msra.mxu0 %v2601
  %2875 = vmatprep.subr.mxu0 0.0
  %2876 = vmatpush1.msra.mxu0 %v2603
  %2877 = vmatprep.subr.mxu0 0.0
  %2878 = vmatpush1.msra.mxu0 %v2605
  %2879 = vmatprep.subr.mxu0 0.0
  %2880 = vmatpush1.msra.mxu0 %v2607
  %2881 = vmatprep.subr.mxu0 0.0
  %2882 = vmatpush1.msra.mxu0 %v2609
  %2883 = vmatprep.subr.mxu0 0.0
  %2884 = vmatpush1.msra.mxu0 %v2611
  %2885 = vmatprep.subr.mxu0 0.0
  %2886 = vmatpush1.msra.mxu0 %v2613
  %2887 = vmatprep.subr.mxu0 0.0
  %2888 = vmatpush1.msra.mxu0 %v2615
  %2889 = vmatprep.mubr.f32.mxu0 %v1933
  %2890 = vmatmul.mubr.f32.gmra.mrb[0].mxu0 %v1931
  %v2891 = vpop.f32.mrb[0].mxu0
  %v2892 = vadd.f32 %v2747, %v2891
  %v2893 = vpop.f32.mrb[0].mxu0
  %2894 = vmatprep.mubr.f32.mxu0 %v1941
  %2895 = vmatmul.mubr.f32.gmra.mrb[0].mxu0 %v1939
  %v2896 = vpop.f32.mrb[0].mxu0
  %v2897 = vadd.f32 %v2752, %v2896
  %v2898 = vpop.f32.mrb[0].mxu0
  %2899 = vmatprep.mubr.f32.mxu0 %v1949
  %2900 = vmatmul.mubr.f32.gmra.mrb[0].mxu0 %v1947
  %v2901 = vpop.f32.mrb[0].mxu0
  %v2902 = vadd.f32 %v2757, %v2901
  %v2903 = vpop.f32.mrb[0].mxu0
  %2904 = vmatprep.mubr.f32.mxu0 %v1957
  %2905 = vmatmul.mubr.f32.gmra.mrb[0].mxu0 %v1955
  %v2906 = vpop.f32.mrb[0].mxu0
  %v2907 = vadd.f32 %v2762, %v2906
  %v2908 = vpop.f32.mrb[0].mxu0
  %2909 = vmatprep.mubr.f32.mxu0 %v1965
  %2910 = vmatmul.mubr.f32.gmra.mrb[0].mxu0 %v1963
  %v2911 = vpop.f32.mrb[0].mxu0
  %v2912 = vadd.f32 %v2767, %v2911
  %v2913 = vpop.f32.mrb[0].mxu0
  %2914 = vmatprep.mubr.f32.mxu0 %v1973
  %2915 = vmatmul.mubr.f32.gmra.mrb[0].mxu0 %v1971
  %v2916 = vpop.f32.mrb[0].mxu0
  %v2917 = vadd.f32 %v2772, %v2916
  %v2918 = vpop.f32.mrb[0].mxu0
  %2919 = vmatprep.mubr.f32.mxu0 %v1981
  %2920 = vmatmul.mubr.f32.gmra.mrb[0].mxu0 %v1979
  %v2921 = vpop.f32.mrb[0].mxu0
  %v2922 = vadd.f32 %v2777, %v2921
  %v2923 = vpop.f32.mrb[0].mxu0
  %2924 = vmatprep.mubr.f32.mxu0 %v1989
  %2925 = vmatmul.mubr.f32.gmra.mrb[0].mxu0 %v1987
  %v2926 = vpop.f32.mrb[0].mxu0
  %v2927 = vadd.f32 %v2782, %v2926
  %v2928 = vpop.f32.mrb[0].mxu0
  %2929 = vmatprep.mubr.f32.mxu0 %v1997
  %2930 = vmatmul.mubr.f32.gmra.mrb[0].mxu0 %v1995
  %v2931 = vpop.f32.mrb[0].mxu0
  %v2932 = vadd.f32 %v2787, %v2931
  %v2933 = vpop.f32.mrb[0].mxu0
  %2934 = vmatprep.mubr.f32.mxu0 %v2005
  %2935 = vmatmul.mubr.f32.gmra.mrb[0].mxu0 %v2003
  %v2936 = vpop.f32.mrb[0].mxu0
  %v2937 = vadd.f32 %v2792, %v2936
  %v2938 = vpop.f32.mrb[0].mxu0
  %2939 = vmatprep.mubr.f32.mxu0 %v2013
  %2940 = vmatmul.mubr.f32.gmra.mrb[0].mxu0 %v2011
  %v2941 = vpop.f32.mrb[0].mxu0
  %v2942 = vadd.f32 %v2797, %v2941
  %v2943 = vpop.f32.mrb[0].mxu0
  %2944 = vmatprep.mubr.f32.mxu0 %v2021
  %2945 = vmatmul.mubr.f32.gmra.mrb[0].mxu0 %v2019
  %v2946 = vpop.f32.mrb[0].mxu0
  %v2947 = vadd.f32 %v2802, %v2946
  %v2948 = vpop.f32.mrb[0].mxu0
  %2949 = vmatprep.mubr.f32.mxu0 %v2029
  %2950 = vmatmul.mubr.f32.gmra.mrb[0].mxu0 %v2027
  %v2951 = vpop.f32.mrb[0].mxu0
  %v2952 = vadd.f32 %v2807, %v2951
  %v2953 = vpop.f32.mrb[0].mxu0
  %2954 = vmatprep.mubr.f32.mxu0 %v2037
  %2955 = vmatmul.mubr.f32.gmra.mrb[0].mxu0 %v2035
  %v2956 = vpop.f32.mrb[0].mxu0
  %v2957 = vadd.f32 %v2812, %v2956
  %v2958 = vpop.f32.mrb[0].mxu0
  %2959 = vmatprep.mubr.f32.mxu0 %v2045
  %2960 = vmatmul.mubr.f32.gmra.mrb[0].mxu0 %v2043
  %v2961 = vpop.f32.mrb[0].mxu0
  %v2962 = vadd.f32 %v2817, %v2961
  %v2963 = vpop.f32.mrb[0].mxu0
  %2964 = vmatprep.mubr.f32.mxu0 %v2053
  %2965 = vmatmul.mubr.f32.gmra.mrb[0].mxu0 %v2051
  %v2966 = vpop.f32.mrb[0].mxu0
  %v2967 = vadd.f32 %v2822, %v2966
  %v2968 = vpop.f32.mrb[0].mxu0
  %2969 = vdwg.mxu0
  %v2970 = vld [vmem:[%s8] sm:$0xf]
  %vm2971 = vcmask 31744
  %v2973 = vsel %vm2971, %v2408, 0
  %v2976 = vsel %vm2971, %v2409, 0
  %v2979 = vsel %vm2971, %v2410, 0
  %v2982 = vsel %vm2971, %v2411, 0
  %v2985 = vsel %vm2971, %v2412, 0
  %v2988 = vsel %vm2971, %v2413, 0
  %v2991 = vsel %vm2971, %v2414, 0
  %v2994 = vsel %vm2971, %v2415, 0
  %v2997 = vsel %vm2971, %v2416, 0
  %v3000 = vsel %vm2971, %v2417, 0
  %v3003 = vsel %vm2971, %v2418, 0
  %v3006 = vsel %vm2971, %v2419, 0
  %v3009 = vsel %vm2971, %v2420, 0
  %v3012 = vsel %vm2971, %v2421, 0
  %v3015 = vsel %vm2971, %v2422, 0
  %v3018 = vsel %vm2971, %v2423, 0
  %vm3020 = vcmask 1043456
  %v3022 = vsel %vm3020, %v2970, 0
  %3024 = vmatprep.subr.mxu0 0.0
  %3025 = vmatpush1.msra.mxu0 %v3022
  %3026 = vmatprep.subr.mxu0 0.0
  %3027 = vmatpush1.msra.mxu0 0.0
  %3028 = vmatprep.subr.mxu0 0.0
  %3029 = vmatpush1.msra.mxu0 0.0
  %3030 = vmatprep.subr.mxu0 0.0
  %3031 = vmatpush1.msra.mxu0 0.0
  %3032 = vmatprep.subr.mxu0 0.0
  %3033 = vmatpush1.msra.mxu0 0.0
  %3034 = vmatprep.subr.mxu0 0.0
  %3035 = vmatpush1.msra.mxu0 0.0
  %3036 = vmatprep.subr.mxu0 0.0
  %3037 = vmatpush1.msra.mxu0 0.0
  %3038 = vmatprep.subr.mxu0 0.0
  %3039 = vmatpush1.msra.mxu0 0.0
  %3040 = vmatprep.subr.mxu0 0.0
  %3041 = vmatpush1.msra.mxu0 0.0
  %3042 = vmatprep.subr.mxu0 0.0
  %3043 = vmatpush1.msra.mxu0 0.0
  %3044 = vmatprep.subr.mxu0 0.0
  %3045 = vmatpush1.msra.mxu0 0.0
  %3046 = vmatprep.subr.mxu0 0.0
  %3047 = vmatpush1.msra.mxu0 0.0
  %3048 = vmatprep.subr.mxu0 0.0
  %3049 = vmatpush1.msra.mxu0 0.0
  %3050 = vmatprep.subr.mxu0 0.0
  %3051 = vmatpush1.msra.mxu0 0.0
  %3052 = vmatprep.subr.mxu0 0.0
  %3053 = vmatpush1.msra.mxu0 0.0
  %3054 = vmatprep.subr.mxu0 0.0
  %3055 = vmatpush1.msra.mxu0 0.0
  %3056 = vmatprep.subr.mxu0 0.0
  %3057 = vmatpush1.msra.mxu0 0.0
  %3058 = vmatprep.subr.mxu0 0.0
  %3059 = vmatpush1.msra.mxu0 0.0
  %3060 = vmatprep.subr.mxu0 0.0
  %3061 = vmatpush1.msra.mxu0 0.0
  %3062 = vmatprep.subr.mxu0 0.0
  %3063 = vmatpush1.msra.mxu0 0.0
  %3064 = vmatprep.subr.mxu0 0.0
  %3065 = vmatpush1.msra.mxu0 0.0
  %3066 = vmatprep.subr.mxu0 0.0
  %3067 = vmatpush1.msra.mxu0 0.0
  %3068 = vmatprep.subr.mxu0 0.0
  %3069 = vmatpush1.msra.mxu0 0.0
  %3070 = vmatprep.subr.mxu0 0.0
  %3071 = vmatpush1.msra.mxu0 0.0
  %3072 = vmatprep.subr.mxu0 0.0
  %3073 = vmatpush1.msra.mxu0 0.0
  %3074 = vmatprep.subr.mxu0 0.0
  %3075 = vmatpush1.msra.mxu0 0.0
  %3076 = vmatprep.subr.mxu0 0.0
  %3077 = vmatpush1.msra.mxu0 0.0
  %3078 = vmatprep.subr.mxu0 0.0
  %3079 = vmatpush1.msra.mxu0 0.0
  %3080 = vmatprep.subr.mxu0 0.0
  %3081 = vmatpush1.msra.mxu0 0.0
  %3082 = vmatprep.subr.mxu0 0.0
  %3083 = vmatpush1.msra.mxu0 0.0
  %3084 = vmatprep.subr.mxu0 0.0
  %3085 = vmatpush1.msra.mxu0 0.0
  %3086 = vmatprep.subr.mxu0 0.0
  %3087 = vmatpush1.msra.mxu0 0.0
  %3088 = vmatprep.mubr.f32.mxu0 0.0
  %3089 = vmatmul.mubr.f32.gmra.mrb[0].mxu0 %v2973
  %v3090 = vpop.f32.mrb[0].mxu0
  %v3091 = vadd.f32 0.0, %v3090
  %v3092 = vpop.f32.mrb[0].mxu0
  %3093 = vmatprep.mubr.f32.mxu0 0.0
  %3094 = vmatmul.mubr.f32.gmra.mrb[0].mxu0 %v2976
  %v3095 = vpop.f32.mrb[0].mxu0
  %v3096 = vadd.f32 0.0, %v3095
  %v3097 = vpop.f32.mrb[0].mxu0
  %3098 = vmatprep.mubr.f32.mxu0 0.0
  %3099 = vmatmul.mubr.f32.gmra.mrb[0].mxu0 %v2979
  %v3100 = vpop.f32.mrb[0].mxu0
  %v3101 = vadd.f32 0.0, %v3100
  %v3102 = vpop.f32.mrb[0].mxu0
  %3103 = vmatprep.mubr.f32.mxu0 0.0
  %3104 = vmatmul.mubr.f32.gmra.mrb[0].mxu0 %v2982
  %v3105 = vpop.f32.mrb[0].mxu0
  %v3106 = vadd.f32 0.0, %v3105
  %v3107 = vpop.f32.mrb[0].mxu0
  %3108 = vmatprep.mubr.f32.mxu0 0.0
  %3109 = vmatmul.mubr.f32.gmra.mrb[0].mxu0 %v2985
  %v3110 = vpop.f32.mrb[0].mxu0
  %v3111 = vadd.f32 0.0, %v3110
  %v3112 = vpop.f32.mrb[0].mxu0
  %3113 = vmatprep.mubr.f32.mxu0 0.0
  %3114 = vmatmul.mubr.f32.gmra.mrb[0].mxu0 %v2988
  %v3115 = vpop.f32.mrb[0].mxu0
  %v3116 = vadd.f32 0.0, %v3115
  %v3117 = vpop.f32.mrb[0].mxu0
  %3118 = vmatprep.mubr.f32.mxu0 0.0
  %3119 = vmatmul.mubr.f32.gmra.mrb[0].mxu0 %v2991
  %v3120 = vpop.f32.mrb[0].mxu0
  %v3121 = vadd.f32 0.0, %v3120
  %v3122 = vpop.f32.mrb[0].mxu0
  %3123 = vmatprep.mubr.f32.mxu0 0.0
  %3124 = vmatmul.mubr.f32.gmra.mrb[0].mxu0 %v2994
  %v3125 = vpop.f32.mrb[0].mxu0
  %v3126 = vadd.f32 0.0, %v3125
  %v3127 = vpop.f32.mrb[0].mxu0
  %3128 = vmatprep.mubr.f32.mxu0 0.0
  %3129 = vmatmul.mubr.f32.gmra.mrb[0].mxu0 %v2997
  %v3130 = vpop.f32.mrb[0].mxu0
  %v3131 = vadd.f32 0.0, %v3130
  %v3132 = vpop.f32.mrb[0].mxu0
  %3133 = vmatprep.mubr.f32.mxu0 0.0
  %3134 = vmatmul.mubr.f32.gmra.mrb[0].mxu0 %v3000
  %v3135 = vpop.f32.mrb[0].mxu0
  %v3136 = vadd.f32 0.0, %v3135
  %v3137 = vpop.f32.mrb[0].mxu0
  %3138 = vmatprep.mubr.f32.mxu0 0.0
  %3139 = vmatmul.mubr.f32.gmra.mrb[0].mxu0 %v3003
  %v3140 = vpop.f32.mrb[0].mxu0
  %v3141 = vadd.f32 0.0, %v3140
  %v3142 = vpop.f32.mrb[0].mxu0
  %3143 = vmatprep.mubr.f32.mxu0 0.0
  %3144 = vmatmul.mubr.f32.gmra.mrb[0].mxu0 %v3006
  %v3145 = vpop.f32.mrb[0].mxu0
  %v3146 = vadd.f32 0.0, %v3145
  %v3147 = vpop.f32.mrb[0].mxu0
  %3148 = vmatprep.mubr.f32.mxu0 0.0
  %3149 = vmatmul.mubr.f32.gmra.mrb[0].mxu0 %v3009
  %v3150 = vpop.f32.mrb[0].mxu0
  %v3151 = vadd.f32 0.0, %v3150
  %v3152 = vpop.f32.mrb[0].mxu0
  %3153 = vmatprep.mubr.f32.mxu0 0.0
  %3154 = vmatmul.mubr.f32.gmra.mrb[0].mxu0 %v3012
  %v3155 = vpop.f32.mrb[0].mxu0
  %v3156 = vadd.f32 0.0, %v3155
  %v3157 = vpop.f32.mrb[0].mxu0
  %3158 = vmatprep.mubr.f32.mxu0 0.0
  %3159 = vmatmul.mubr.f32.gmra.mrb[0].mxu0 %v3015
  %v3160 = vpop.f32.mrb[0].mxu0
  %v3161 = vadd.f32 0.0, %v3160
  %v3162 = vpop.f32.mrb[0].mxu0
  %3163 = vmatprep.mubr.f32.mxu0 0.0
  %3164 = vmatmul.mubr.f32.gmra.mrb[0].mxu0 %v3018
  %v3165 = vpop.f32.mrb[0].mxu0
  %v3166 = vadd.f32 0.0, %v3165
  %v3167 = vpop.f32.mrb[0].mxu0
  %3168 = vdwg.mxu0
  %v3169 = vmul.f32 %v2892, %v3091
  %v3170 = vmul.f32 %v2897, %v3096
  %v3171 = vmul.f32 %v2902, %v3101
  %v3172 = vmul.f32 %v2907, %v3106
  %v3173 = vmul.f32 %v2912, %v3111
  %v3174 = vmul.f32 %v2917, %v3116
  %v3175 = vmul.f32 %v2922, %v3121
  %v3176 = vmul.f32 %v2927, %v3126
  %v3177 = vmul.f32 %v2932, %v3131
  %v3178 = vmul.f32 %v2937, %v3136
  %v3179 = vmul.f32 %v2942, %v3141
  %v3180 = vmul.f32 %v2947, %v3146
  %v3181 = vmul.f32 %v2952, %v3151
  %v3182 = vmul.f32 %v2957, %v3156
  %v3183 = vmul.f32 %v2962, %v3161
  %v3184 = vmul.f32 %v2967, %v3166
  %v3185 = vld [vmem:[%s9] sm:$0xff]
  %v3186 = vld [vmem:[%s9 + $0x8] sm:$0xff]
  %v3187 = vld [vmem:[%s9 + $0x10] sm:$0xff]
  %v3188 = vld [vmem:[%s9 + $0x18] sm:$0xff]
  %v3189 = vld [vmem:[%s10] sm:$0x1]
  %v3191 = vlaneseq
  %v3192 = vshrl.u32 %v3191, 7
  %v3193 = vsub.s32 0, %v3192
  %v3194 = vrot.slane %v3189, %v3193
  %v3197 = vsel %vm72, %v3169, 0
  %v3200 = vsel %vm72, %v3170, 0
  %v3203 = vsel %vm72, %v3171, 0
  %v3206 = vsel %vm72, %v3172, 0
  %v3209 = vsel %vm72, %v3173, 0
  %v3212 = vsel %vm72, %v3174, 0
  %v3215 = vsel %vm72, %v3175, 0
  %v3218 = vsel %vm72, %v3176, 0
  %v3221 = vsel %vm72, %v3177, 0
  %v3224 = vsel %vm72, %v3178, 0
  %v3227 = vsel %vm72, %v3179, 0
  %v3230 = vsel %vm72, %v3180, 0
  %v3233 = vsel %vm72, %v3181, 0
  %v3236 = vsel %vm72, %v3182, 0
  %v3239 = vsel %vm72, %v3183, 0
  %v3242 = vsel %vm72, %v3184, 0
  %3244 = vmatprep.subr.mxu0 0.0
  %3245 = vmatpush1.msra.mxu0 %v3185
  %3246 = vmatprep.subr.mxu0 0.0
  %3247 = vmatpush1.msra.mxu0 %v3186
  %3248 = vmatprep.subr.mxu0 0.0
  %3249 = vmatpush1.msra.mxu0 %v3187
  %3250 = vmatprep.subr.mxu0 0.0
  %3251 = vmatpush1.msra.mxu0 %v3188
  %3252 = vmatprep.subr.mxu0 0.0
  %3253 = vmatpush1.msra.mxu0 0.0
  %3254 = vmatprep.subr.mxu0 0.0
  %3255 = vmatpush1.msra.mxu0 0.0
  %3256 = vmatprep.subr.mxu0 0.0
  %3257 = vmatpush1.msra.mxu0 0.0
  %3258 = vmatprep.subr.mxu0 0.0
  %3259 = vmatpush1.msra.mxu0 0.0
  %3260 = vmatprep.subr.mxu0 0.0
  %3261 = vmatpush1.msra.mxu0 0.0
  %3262 = vmatprep.subr.mxu0 0.0
  %3263 = vmatpush1.msra.mxu0 0.0
  %3264 = vmatprep.subr.mxu0 0.0
  %3265 = vmatpush1.msra.mxu0 0.0
  %3266 = vmatprep.subr.mxu0 0.0
  %3267 = vmatpush1.msra.mxu0 0.0
  %3268 = vmatprep.subr.mxu0 0.0
  %3269 = vmatpush1.msra.mxu0 0.0
  %3270 = vmatprep.subr.mxu0 0.0
  %3271 = vmatpush1.msra.mxu0 0.0
  %3272 = vmatprep.subr.mxu0 0.0
  %3273 = vmatpush1.msra.mxu0 0.0
  %3274 = vmatprep.subr.mxu0 0.0
  %3275 = vmatpush1.msra.mxu0 0.0
  %3276 = vmatprep.subr.mxu0 0.0
  %3277 = vmatpush1.msra.mxu0 0.0
  %3278 = vmatprep.subr.mxu0 0.0
  %3279 = vmatpush1.msra.mxu0 0.0
  %3280 = vmatprep.subr.mxu0 0.0
  %3281 = vmatpush1.msra.mxu0 0.0
  %3282 = vmatprep.subr.mxu0 0.0
  %3283 = vmatpush1.msra.mxu0 0.0
  %3284 = vmatprep.subr.mxu0 0.0
  %3285 = vmatpush1.msra.mxu0 0.0
  %3286 = vmatprep.subr.mxu0 0.0
  %3287 = vmatpush1.msra.mxu0 0.0
  %3288 = vmatprep.subr.mxu0 0.0
  %3289 = vmatpush1.msra.mxu0 0.0
  %3290 = vmatprep.subr.mxu0 0.0
  %3291 = vmatpush1.msra.mxu0 0.0
  %3292 = vmatprep.subr.mxu0 0.0
  %3293 = vmatpush1.msra.mxu0 0.0
  %3294 = vmatprep.subr.mxu0 0.0
  %3295 = vmatpush1.msra.mxu0 0.0
  %3296 = vmatprep.subr.mxu0 0.0
  %3297 = vmatpush1.msra.mxu0 0.0
  %3298 = vmatprep.subr.mxu0 0.0
  %3299 = vmatpush1.msra.mxu0 0.0
  %3300 = vmatprep.subr.mxu0 0.0
  %3301 = vmatpush1.msra.mxu0 0.0
  %3302 = vmatprep.subr.mxu0 0.0
  %3303 = vmatpush1.msra.mxu0 0.0
  %3304 = vmatprep.subr.mxu0 0.0
  %3305 = vmatpush1.msra.mxu0 0.0
  %3306 = vmatprep.subr.mxu0 0.0
  %3307 = vmatpush1.msra.mxu0 0.0
  %3308 = vmatprep.mubr.f32.mxu0 0.0
  %3309 = vmatmul.mubr.f32.gmra.mrb[0].mxu0 %v3197
  %v3310 = vpop.f32.mrb[0].mxu0
  %v3311 = vadd.f32 %v3194, %v3310
  %v3312 = vpop.f32.mrb[0].mxu0
  %3313 = vmatprep.mubr.f32.mxu0 0.0
  %3314 = vmatmul.mubr.f32.gmra.mrb[0].mxu0 %v3200
  %v3315 = vpop.f32.mrb[0].mxu0
  %v3316 = vadd.f32 %v3194, %v3315
  %v3317 = vpop.f32.mrb[0].mxu0
  %3318 = vmatprep.mubr.f32.mxu0 0.0
  %3319 = vmatmul.mubr.f32.gmra.mrb[0].mxu0 %v3203
  %v3320 = vpop.f32.mrb[0].mxu0
  %v3321 = vadd.f32 %v3194, %v3320
  %v3322 = vpop.f32.mrb[0].mxu0
  %3323 = vmatprep.mubr.f32.mxu0 0.0
  %3324 = vmatmul.mubr.f32.gmra.mrb[0].mxu0 %v3206
  %v3325 = vpop.f32.mrb[0].mxu0
  %v3326 = vadd.f32 %v3194, %v3325
  %v3327 = vpop.f32.mrb[0].mxu0
  %3328 = vmatprep.mubr.f32.mxu0 0.0
  %3329 = vmatmul.mubr.f32.gmra.mrb[0].mxu0 %v3209
  %v3330 = vpop.f32.mrb[0].mxu0
  %v3331 = vadd.f32 %v3194, %v3330
  %v3332 = vpop.f32.mrb[0].mxu0
  %3333 = vmatprep.mubr.f32.mxu0 0.0
  %3334 = vmatmul.mubr.f32.gmra.mrb[0].mxu0 %v3212
  %v3335 = vpop.f32.mrb[0].mxu0
  %v3336 = vadd.f32 %v3194, %v3335
  %v3337 = vpop.f32.mrb[0].mxu0
  %3338 = vmatprep.mubr.f32.mxu0 0.0
  %3339 = vmatmul.mubr.f32.gmra.mrb[0].mxu0 %v3215
  %v3340 = vpop.f32.mrb[0].mxu0
  %v3341 = vadd.f32 %v3194, %v3340
  %v3342 = vpop.f32.mrb[0].mxu0
  %3343 = vmatprep.mubr.f32.mxu0 0.0
  %3344 = vmatmul.mubr.f32.gmra.mrb[0].mxu0 %v3218
  %v3345 = vpop.f32.mrb[0].mxu0
  %v3346 = vadd.f32 %v3194, %v3345
  %v3347 = vpop.f32.mrb[0].mxu0
  %3348 = vmatprep.mubr.f32.mxu0 0.0
  %3349 = vmatmul.mubr.f32.gmra.mrb[0].mxu0 %v3221
  %v3350 = vpop.f32.mrb[0].mxu0
  %v3351 = vadd.f32 %v3194, %v3350
  %v3352 = vpop.f32.mrb[0].mxu0
  %3353 = vmatprep.mubr.f32.mxu0 0.0
  %3354 = vmatmul.mubr.f32.gmra.mrb[0].mxu0 %v3224
  %v3355 = vpop.f32.mrb[0].mxu0
  %v3356 = vadd.f32 %v3194, %v3355
  %v3357 = vpop.f32.mrb[0].mxu0
  %3358 = vmatprep.mubr.f32.mxu0 0.0
  %3359 = vmatmul.mubr.f32.gmra.mrb[0].mxu0 %v3227
  %v3360 = vpop.f32.mrb[0].mxu0
  %v3361 = vadd.f32 %v3194, %v3360
  %v3362 = vpop.f32.mrb[0].mxu0
  %3363 = vmatprep.mubr.f32.mxu0 0.0
  %3364 = vmatmul.mubr.f32.gmra.mrb[0].mxu0 %v3230
  %v3365 = vpop.f32.mrb[0].mxu0
  %v3366 = vadd.f32 %v3194, %v3365
  %v3367 = vpop.f32.mrb[0].mxu0
  %3368 = vmatprep.mubr.f32.mxu0 0.0
  %3369 = vmatmul.mubr.f32.gmra.mrb[0].mxu0 %v3233
  %v3370 = vpop.f32.mrb[0].mxu0
  %v3371 = vadd.f32 %v3194, %v3370
  %v3372 = vpop.f32.mrb[0].mxu0
  %3373 = vmatprep.mubr.f32.mxu0 0.0
  %3374 = vmatmul.mubr.f32.gmra.mrb[0].mxu0 %v3236
  %v3375 = vpop.f32.mrb[0].mxu0
  %v3376 = vadd.f32 %v3194, %v3375
  %v3377 = vpop.f32.mrb[0].mxu0
  %3378 = vmatprep.mubr.f32.mxu0 0.0
  %3379 = vmatmul.mubr.f32.gmra.mrb[0].mxu0 %v3239
  %v3380 = vpop.f32.mrb[0].mxu0
  %v3381 = vadd.f32 %v3194, %v3380
  %v3382 = vpop.f32.mrb[0].mxu0
  %3383 = vmatprep.mubr.f32.mxu0 0.0
  %3384 = vmatmul.mubr.f32.gmra.mrb[0].mxu0 %v3242
  %v3385 = vpop.f32.mrb[0].mxu0
  %v3386 = vadd.f32 %v3194, %v3385
  %v3387 = vpop.f32.mrb[0].mxu0
  %3388 = vdwg.mxu0
  %v3389 = vadd.f32 %v56, %v3311
  %v3390 = vadd.f32 %v57, %v3316
  %v3391 = vadd.f32 %v58, %v3321
  %v3392 = vadd.f32 %v59, %v3326
  %v3393 = vadd.f32 %v60, %v3331
  %v3394 = vadd.f32 %v61, %v3336
  %v3395 = vadd.f32 %v62, %v3341
  %v3396 = vadd.f32 %v63, %v3346
  %v3397 = vadd.f32 %v64, %v3351
  %v3398 = vadd.f32 %v65, %v3356
  %v3399 = vadd.f32 %v66, %v3361
  %v3400 = vadd.f32 %v67, %v3366
  %v3401 = vadd.f32 %v68, %v3371
  %v3402 = vadd.f32 %v69, %v3376
  %v3403 = vadd.f32 %v70, %v3381
  %v3404 = vadd.f32 %v71, %v3386
  %v3405 = vsel %vm72, %v3389, 0.0
  %3406 = vadd.xlane.f32.xlu0 %v3405
  %v3407 = vpop.xlane.xlu0 %3406
  %v3408 = vsel %vm72, %v3390, 0.0
  %3409 = vadd.xlane.f32.xlu0 %v3408
  %v3410 = vpop.xlane.xlu0 %3409
  %v3411 = vsel %vm72, %v3391, 0.0
  %3412 = vadd.xlane.f32.xlu0 %v3411
  %v3413 = vpop.xlane.xlu0 %3412
  %v3414 = vsel %vm72, %v3392, 0.0
  %3415 = vadd.xlane.f32.xlu0 %v3414
  %v3416 = vpop.xlane.xlu0 %3415
  %v3417 = vsel %vm72, %v3393, 0.0
  %3418 = vadd.xlane.f32.xlu0 %v3417
  %v3419 = vpop.xlane.xlu0 %3418
  %v3420 = vsel %vm72, %v3394, 0.0
  %3421 = vadd.xlane.f32.xlu0 %v3420
  %v3422 = vpop.xlane.xlu0 %3421
  %v3423 = vsel %vm72, %v3395, 0.0
  %3424 = vadd.xlane.f32.xlu0 %v3423
  %v3425 = vpop.xlane.xlu0 %3424
  %v3426 = vsel %vm72, %v3396, 0.0
  %3427 = vadd.xlane.f32.xlu0 %v3426
  %v3428 = vpop.xlane.xlu0 %3427
  %v3429 = vsel %vm72, %v3397, 0.0
  %3430 = vadd.xlane.f32.xlu0 %v3429
  %v3431 = vpop.xlane.xlu0 %3430
  %v3432 = vsel %vm72, %v3398, 0.0
  %3433 = vadd.xlane.f32.xlu0 %v3432
  %v3434 = vpop.xlane.xlu0 %3433
  %v3435 = vsel %vm72, %v3399, 0.0
  %3436 = vadd.xlane.f32.xlu0 %v3435
  %v3437 = vpop.xlane.xlu0 %3436
  %v3438 = vsel %vm72, %v3400, 0.0
  %3439 = vadd.xlane.f32.xlu0 %v3438
  %v3440 = vpop.xlane.xlu0 %3439
  %v3441 = vsel %vm72, %v3401, 0.0
  %3442 = vadd.xlane.f32.xlu0 %v3441
  %v3443 = vpop.xlane.xlu0 %3442
  %v3444 = vsel %vm72, %v3402, 0.0
  %3445 = vadd.xlane.f32.xlu0 %v3444
  %v3446 = vpop.xlane.xlu0 %3445
  %v3447 = vsel %vm72, %v3403, 0.0
  %3448 = vadd.xlane.f32.xlu0 %v3447
  %v3449 = vpop.xlane.xlu0 %3448
  %v3450 = vsel %vm72, %v3404, 0.0
  %3451 = vadd.xlane.f32.xlu0 %v3450
  %v3452 = vpop.xlane.xlu0 %3451
  %v3453 = vmul.f32 %v3407, %v121
  %v3454 = vmul.f32 %v3410, %v121
  %v3455 = vmul.f32 %v3413, %v121
  %v3456 = vmul.f32 %v3416, %v121
  %v3457 = vmul.f32 %v3419, %v121
  %v3458 = vmul.f32 %v3422, %v121
  %v3459 = vmul.f32 %v3425, %v121
  %v3460 = vmul.f32 %v3428, %v121
  %v3461 = vmul.f32 %v3431, %v121
  %v3462 = vmul.f32 %v3434, %v121
  %v3463 = vmul.f32 %v3437, %v121
  %v3464 = vmul.f32 %v3440, %v121
  %v3465 = vmul.f32 %v3443, %v121
  %v3466 = vmul.f32 %v3446, %v121
  %v3467 = vmul.f32 %v3449, %v121
  %v3468 = vmul.f32 %v3452, %v121
  %v3469 = vsub.f32 %v3389, %v3453
  %v3470 = vsub.f32 %v3390, %v3454
  %v3471 = vsub.f32 %v3391, %v3455
  %v3472 = vsub.f32 %v3392, %v3456
  %v3473 = vsub.f32 %v3393, %v3457
  %v3474 = vsub.f32 %v3394, %v3458
  %v3475 = vsub.f32 %v3395, %v3459
  %v3476 = vsub.f32 %v3396, %v3460
  %v3477 = vsub.f32 %v3397, %v3461
  %v3478 = vsub.f32 %v3398, %v3462
  %v3479 = vsub.f32 %v3399, %v3463
  %v3480 = vsub.f32 %v3400, %v3464
  %v3481 = vsub.f32 %v3401, %v3465
  %v3482 = vsub.f32 %v3402, %v3466
  %v3483 = vsub.f32 %v3403, %v3467
  %v3484 = vsub.f32 %v3404, %v3468
  %v3485 = vmul.f32 %v3469, %v3469
  %v3486 = vmul.f32 %v3470, %v3470
  %v3487 = vmul.f32 %v3471, %v3471
  %v3488 = vmul.f32 %v3472, %v3472
  %v3489 = vmul.f32 %v3473, %v3473
  %v3490 = vmul.f32 %v3474, %v3474
  %v3491 = vmul.f32 %v3475, %v3475
  %v3492 = vmul.f32 %v3476, %v3476
  %v3493 = vmul.f32 %v3477, %v3477
  %v3494 = vmul.f32 %v3478, %v3478
  %v3495 = vmul.f32 %v3479, %v3479
  %v3496 = vmul.f32 %v3480, %v3480
  %v3497 = vmul.f32 %v3481, %v3481
  %v3498 = vmul.f32 %v3482, %v3482
  %v3499 = vmul.f32 %v3483, %v3483
  %v3500 = vmul.f32 %v3484, %v3484
  %v3501 = vsel %vm72, %v3485, 0.0
  %3502 = vadd.xlane.f32.xlu0 %v3501
  %v3503 = vpop.xlane.xlu0 %3502
  %v3504 = vsel %vm72, %v3486, 0.0
  %3505 = vadd.xlane.f32.xlu0 %v3504
  %v3506 = vpop.xlane.xlu0 %3505
  %v3507 = vsel %vm72, %v3487, 0.0
  %3508 = vadd.xlane.f32.xlu0 %v3507
  %v3509 = vpop.xlane.xlu0 %3508
  %v3510 = vsel %vm72, %v3488, 0.0
  %3511 = vadd.xlane.f32.xlu0 %v3510
  %v3512 = vpop.xlane.xlu0 %3511
  %v3513 = vsel %vm72, %v3489, 0.0
  %3514 = vadd.xlane.f32.xlu0 %v3513
  %v3515 = vpop.xlane.xlu0 %3514
  %v3516 = vsel %vm72, %v3490, 0.0
  %3517 = vadd.xlane.f32.xlu0 %v3516
  %v3518 = vpop.xlane.xlu0 %3517
  %v3519 = vsel %vm72, %v3491, 0.0
  %3520 = vadd.xlane.f32.xlu0 %v3519
  %v3521 = vpop.xlane.xlu0 %3520
  %v3522 = vsel %vm72, %v3492, 0.0
  %3523 = vadd.xlane.f32.xlu0 %v3522
  %v3524 = vpop.xlane.xlu0 %3523
  %v3525 = vsel %vm72, %v3493, 0.0
  %3526 = vadd.xlane.f32.xlu0 %v3525
  %v3527 = vpop.xlane.xlu0 %3526
  %v3528 = vsel %vm72, %v3494, 0.0
  %3529 = vadd.xlane.f32.xlu0 %v3528
  %v3530 = vpop.xlane.xlu0 %3529
  %v3531 = vsel %vm72, %v3495, 0.0
  %3532 = vadd.xlane.f32.xlu0 %v3531
  %v3533 = vpop.xlane.xlu0 %3532
  %v3534 = vsel %vm72, %v3496, 0.0
  %3535 = vadd.xlane.f32.xlu0 %v3534
  %v3536 = vpop.xlane.xlu0 %3535
  %v3537 = vsel %vm72, %v3497, 0.0
  %3538 = vadd.xlane.f32.xlu0 %v3537
  %v3539 = vpop.xlane.xlu0 %3538
  %v3540 = vsel %vm72, %v3498, 0.0
  %3541 = vadd.xlane.f32.xlu0 %v3540
  %v3542 = vpop.xlane.xlu0 %3541
  %v3543 = vsel %vm72, %v3499, 0.0
  %3544 = vadd.xlane.f32.xlu0 %v3543
  %v3545 = vpop.xlane.xlu0 %3544
  %v3546 = vsel %vm72, %v3500, 0.0
  %3547 = vadd.xlane.f32.xlu0 %v3546
  %v3548 = vpop.xlane.xlu0 %3547
  %v3549 = vmul.f32 %v3503, %v121
  %v3550 = vmul.f32 %v3506, %v121
  %v3551 = vmul.f32 %v3509, %v121
  %v3552 = vmul.f32 %v3512, %v121
  %v3553 = vmul.f32 %v3515, %v121
  %v3554 = vmul.f32 %v3518, %v121
  %v3555 = vmul.f32 %v3521, %v121
  %v3556 = vmul.f32 %v3524, %v121
  %v3557 = vmul.f32 %v3527, %v121
  %v3558 = vmul.f32 %v3530, %v121
  %v3559 = vmul.f32 %v3533, %v121
  %v3560 = vmul.f32 %v3536, %v121
  %v3561 = vmul.f32 %v3539, %v121
  %v3562 = vmul.f32 %v3542, %v121
  %v3563 = vmul.f32 %v3545, %v121
  %v3564 = vmul.f32 %v3548, %v121
  %v3565 = vadd.f32 %v3549, 1e-05
  %v3566 = vadd.f32 %v3550, 1e-05
  %v3567 = vadd.f32 %v3551, 1e-05
  %v3568 = vadd.f32 %v3552, 1e-05
  %v3569 = vadd.f32 %v3553, 1e-05
  %v3570 = vadd.f32 %v3554, 1e-05
  %v3571 = vadd.f32 %v3555, 1e-05
  %v3572 = vadd.f32 %v3556, 1e-05
  %v3573 = vadd.f32 %v3557, 1e-05
  %v3574 = vadd.f32 %v3558, 1e-05
  %v3575 = vadd.f32 %v3559, 1e-05
  %v3576 = vadd.f32 %v3560, 1e-05
  %v3577 = vadd.f32 %v3561, 1e-05
  %v3578 = vadd.f32 %v3562, 1e-05
  %v3579 = vadd.f32 %v3563, 1e-05
  %v3580 = vadd.f32 %v3564, 1e-05
  %v3581 = vrsqrt.pop %v3565
  %v3582 = vrsqrt.pop %v3566
  %v3583 = vrsqrt.pop %v3567
  %v3584 = vrsqrt.pop %v3568
  %v3585 = vrsqrt.pop %v3569
  %v3586 = vrsqrt.pop %v3570
  %v3587 = vrsqrt.pop %v3571
  %v3588 = vrsqrt.pop %v3572
  %v3589 = vrsqrt.pop %v3573
  %v3590 = vrsqrt.pop %v3574
  %v3591 = vrsqrt.pop %v3575
  %v3592 = vrsqrt.pop %v3576
  %v3593 = vrsqrt.pop %v3577
  %v3594 = vrsqrt.pop %v3578
  %v3595 = vrsqrt.pop %v3579
  %v3596 = vrsqrt.pop %v3580
  %v3597 = vmul.f32 %v3469, %v3581
  %v3598 = vmul.f32 %v3470, %v3582
  %v3599 = vmul.f32 %v3471, %v3583
  %v3600 = vmul.f32 %v3472, %v3584
  %v3601 = vmul.f32 %v3473, %v3585
  %v3602 = vmul.f32 %v3474, %v3586
  %v3603 = vmul.f32 %v3475, %v3587
  %v3604 = vmul.f32 %v3476, %v3588
  %v3605 = vmul.f32 %v3477, %v3589
  %v3606 = vmul.f32 %v3478, %v3590
  %v3607 = vmul.f32 %v3479, %v3591
  %v3608 = vmul.f32 %v3480, %v3592
  %v3609 = vmul.f32 %v3481, %v3593
  %v3610 = vmul.f32 %v3482, %v3594
  %v3611 = vmul.f32 %v3483, %v3595
  %v3612 = vmul.f32 %v3484, %v3596
  %v3613 = vld [vmem:[%s11] sm:$0x1]
  %v3615 = vlaneseq
  %v3616 = vshrl.u32 %v3615, 7
  %v3617 = vsub.s32 0, %v3616
  %v3618 = vrot.slane %v3613, %v3617
  %v3620 = vmul.f32 %v3597, %v3618
  %v3621 = vmul.f32 %v3598, %v3618
  %v3622 = vmul.f32 %v3599, %v3618
  %v3623 = vmul.f32 %v3600, %v3618
  %v3624 = vmul.f32 %v3601, %v3618
  %v3625 = vmul.f32 %v3602, %v3618
  %v3626 = vmul.f32 %v3603, %v3618
  %v3627 = vmul.f32 %v3604, %v3618
  %v3628 = vmul.f32 %v3605, %v3618
  %v3629 = vmul.f32 %v3606, %v3618
  %v3630 = vmul.f32 %v3607, %v3618
  %v3631 = vmul.f32 %v3608, %v3618
  %v3632 = vmul.f32 %v3609, %v3618
  %v3633 = vmul.f32 %v3610, %v3618
  %v3634 = vmul.f32 %v3611, %v3618
  %v3635 = vmul.f32 %v3612, %v3618
  %v3636 = vld [vmem:[%s12] sm:$0x1]
  %v3638 = vlaneseq
  %v3639 = vshrl.u32 %v3638, 7
  %v3640 = vsub.s32 0, %v3639
  %v3641 = vrot.slane %v3636, %v3640
  %v3643 = vadd.f32 %v3620, %v3641
  %v3644 = vadd.f32 %v3621, %v3641
  %v3645 = vadd.f32 %v3622, %v3641
  %v3646 = vadd.f32 %v3623, %v3641
  %v3647 = vadd.f32 %v3624, %v3641
  %v3648 = vadd.f32 %v3625, %v3641
  %v3649 = vadd.f32 %v3626, %v3641
  %v3650 = vadd.f32 %v3627, %v3641
  %v3651 = vadd.f32 %v3628, %v3641
  %v3652 = vadd.f32 %v3629, %v3641
  %v3653 = vadd.f32 %v3630, %v3641
  %v3654 = vadd.f32 %v3631, %v3641
  %v3655 = vadd.f32 %v3632, %v3641
  %v3656 = vadd.f32 %v3633, %v3641
  %v3657 = vadd.f32 %v3634, %v3641
  %v3658 = vadd.f32 %v3635, %v3641
  %v3659 = vld [vmem:[%s13] sm:$0xff]
  %v3660 = vld [vmem:[%s13 + $0x8] sm:$0xff]
  %v3661 = vld [vmem:[%s13 + $0x10] sm:$0xff]
  %v3662 = vld [vmem:[%s13 + $0x18] sm:$0xff]
  %v3663 = vld [vmem:[%s14] sm:$0x1]
  %v3665 = vlaneseq
  %v3666 = vshrl.u32 %v3665, 7
  %v3667 = vsub.s32 0, %v3666
  %v3668 = vrot.slane %v3663, %v3667
  %v3671 = vsel %vm72, %v3643, 0
  %v3674 = vsel %vm72, %v3644, 0
  %v3677 = vsel %vm72, %v3645, 0
  %v3680 = vsel %vm72, %v3646, 0
  %v3683 = vsel %vm72, %v3647, 0
  %v3686 = vsel %vm72, %v3648, 0
  %v3689 = vsel %vm72, %v3649, 0
  %v3692 = vsel %vm72, %v3650, 0
  %v3695 = vsel %vm72, %v3651, 0
  %v3698 = vsel %vm72, %v3652, 0
  %v3701 = vsel %vm72, %v3653, 0
  %v3704 = vsel %vm72, %v3654, 0
  %v3707 = vsel %vm72, %v3655, 0
  %v3710 = vsel %vm72, %v3656, 0
  %v3713 = vsel %vm72, %v3657, 0
  %v3716 = vsel %vm72, %v3658, 0
  %3718 = vmatprep.subr.mxu0 0.0
  %3719 = vmatpush1.msra.mxu0 %v3659
  %3720 = vmatprep.subr.mxu0 0.0
  %3721 = vmatpush1.msra.mxu0 %v3660
  %3722 = vmatprep.subr.mxu0 0.0
  %3723 = vmatpush1.msra.mxu0 %v3661
  %3724 = vmatprep.subr.mxu0 0.0
  %3725 = vmatpush1.msra.mxu0 %v3662
  %3726 = vmatprep.subr.mxu0 0.0
  %3727 = vmatpush1.msra.mxu0 0.0
  %3728 = vmatprep.subr.mxu0 0.0
  %3729 = vmatpush1.msra.mxu0 0.0
  %3730 = vmatprep.subr.mxu0 0.0
  %3731 = vmatpush1.msra.mxu0 0.0
  %3732 = vmatprep.subr.mxu0 0.0
  %3733 = vmatpush1.msra.mxu0 0.0
  %3734 = vmatprep.subr.mxu0 0.0
  %3735 = vmatpush1.msra.mxu0 0.0
  %3736 = vmatprep.subr.mxu0 0.0
  %3737 = vmatpush1.msra.mxu0 0.0
  %3738 = vmatprep.subr.mxu0 0.0
  %3739 = vmatpush1.msra.mxu0 0.0
  %3740 = vmatprep.subr.mxu0 0.0
  %3741 = vmatpush1.msra.mxu0 0.0
  %3742 = vmatprep.subr.mxu0 0.0
  %3743 = vmatpush1.msra.mxu0 0.0
  %3744 = vmatprep.subr.mxu0 0.0
  %3745 = vmatpush1.msra.mxu0 0.0
  %3746 = vmatprep.subr.mxu0 0.0
  %3747 = vmatpush1.msra.mxu0 0.0
  %3748 = vmatprep.subr.mxu0 0.0
  %3749 = vmatpush1.msra.mxu0 0.0
  %3750 = vmatprep.subr.mxu0 0.0
  %3751 = vmatpush1.msra.mxu0 0.0
  %3752 = vmatprep.subr.mxu0 0.0
  %3753 = vmatpush1.msra.mxu0 0.0
  %3754 = vmatprep.subr.mxu0 0.0
  %3755 = vmatpush1.msra.mxu0 0.0
  %3756 = vmatprep.subr.mxu0 0.0
  %3757 = vmatpush1.msra.mxu0 0.0
  %3758 = vmatprep.subr.mxu0 0.0
  %3759 = vmatpush1.msra.mxu0 0.0
  %3760 = vmatprep.subr.mxu0 0.0
  %3761 = vmatpush1.msra.mxu0 0.0
  %3762 = vmatprep.subr.mxu0 0.0
  %3763 = vmatpush1.msra.mxu0 0.0
  %3764 = vmatprep.subr.mxu0 0.0
  %3765 = vmatpush1.msra.mxu0 0.0
  %3766 = vmatprep.subr.mxu0 0.0
  %3767 = vmatpush1.msra.mxu0 0.0
  %3768 = vmatprep.subr.mxu0 0.0
  %3769 = vmatpush1.msra.mxu0 0.0
  %3770 = vmatprep.subr.mxu0 0.0
  %3771 = vmatpush1.msra.mxu0 0.0
  %3772 = vmatprep.subr.mxu0 0.0
  %3773 = vmatpush1.msra.mxu0 0.0
  %3774 = vmatprep.subr.mxu0 0.0
  %3775 = vmatpush1.msra.mxu0 0.0
  %3776 = vmatprep.subr.mxu0 0.0
  %3777 = vmatpush1.msra.mxu0 0.0
  %3778 = vmatprep.subr.mxu0 0.0
  %3779 = vmatpush1.msra.mxu0 0.0
  %3780 = vmatprep.subr.mxu0 0.0
  %3781 = vmatpush1.msra.mxu0 0.0
  %3782 = vmatprep.mubr.f32.mxu0 0.0
  %3783 = vmatmul.mubr.f32.gmra.mrb[0].mxu0 %v3671
  %v3784 = vpop.f32.mrb[0].mxu0
  %v3785 = vadd.f32 %v3668, %v3784
  %v3786 = vpop.f32.mrb[0].mxu0
  %3787 = vmatprep.mubr.f32.mxu0 0.0
  %3788 = vmatmul.mubr.f32.gmra.mrb[0].mxu0 %v3674
  %v3789 = vpop.f32.mrb[0].mxu0
  %v3790 = vadd.f32 %v3668, %v3789
  %v3791 = vpop.f32.mrb[0].mxu0
  %3792 = vmatprep.mubr.f32.mxu0 0.0
  %3793 = vmatmul.mubr.f32.gmra.mrb[0].mxu0 %v3677
  %v3794 = vpop.f32.mrb[0].mxu0
  %v3795 = vadd.f32 %v3668, %v3794
  %v3796 = vpop.f32.mrb[0].mxu0
  %3797 = vmatprep.mubr.f32.mxu0 0.0
  %3798 = vmatmul.mubr.f32.gmra.mrb[0].mxu0 %v3680
  %v3799 = vpop.f32.mrb[0].mxu0
  %v3800 = vadd.f32 %v3668, %v3799
  %v3801 = vpop.f32.mrb[0].mxu0
  %3802 = vmatprep.mubr.f32.mxu0 0.0
  %3803 = vmatmul.mubr.f32.gmra.mrb[0].mxu0 %v3683
  %v3804 = vpop.f32.mrb[0].mxu0
  %v3805 = vadd.f32 %v3668, %v3804
  %v3806 = vpop.f32.mrb[0].mxu0
  %3807 = vmatprep.mubr.f32.mxu0 0.0
  %3808 = vmatmul.mubr.f32.gmra.mrb[0].mxu0 %v3686
  %v3809 = vpop.f32.mrb[0].mxu0
  %v3810 = vadd.f32 %v3668, %v3809
  %v3811 = vpop.f32.mrb[0].mxu0
  %3812 = vmatprep.mubr.f32.mxu0 0.0
  %3813 = vmatmul.mubr.f32.gmra.mrb[0].mxu0 %v3689
  %v3814 = vpop.f32.mrb[0].mxu0
  %v3815 = vadd.f32 %v3668, %v3814
  %v3816 = vpop.f32.mrb[0].mxu0
  %3817 = vmatprep.mubr.f32.mxu0 0.0
  %3818 = vmatmul.mubr.f32.gmra.mrb[0].mxu0 %v3692
  %v3819 = vpop.f32.mrb[0].mxu0
  %v3820 = vadd.f32 %v3668, %v3819
  %v3821 = vpop.f32.mrb[0].mxu0
  %3822 = vmatprep.mubr.f32.mxu0 0.0
  %3823 = vmatmul.mubr.f32.gmra.mrb[0].mxu0 %v3695
  %v3824 = vpop.f32.mrb[0].mxu0
  %v3825 = vadd.f32 %v3668, %v3824
  %v3826 = vpop.f32.mrb[0].mxu0
  %3827 = vmatprep.mubr.f32.mxu0 0.0
  %3828 = vmatmul.mubr.f32.gmra.mrb[0].mxu0 %v3698
  %v3829 = vpop.f32.mrb[0].mxu0
  %v3830 = vadd.f32 %v3668, %v3829
  %v3831 = vpop.f32.mrb[0].mxu0
  %3832 = vmatprep.mubr.f32.mxu0 0.0
  %3833 = vmatmul.mubr.f32.gmra.mrb[0].mxu0 %v3701
  %v3834 = vpop.f32.mrb[0].mxu0
  %v3835 = vadd.f32 %v3668, %v3834
  %v3836 = vpop.f32.mrb[0].mxu0
  %3837 = vmatprep.mubr.f32.mxu0 0.0
  %3838 = vmatmul.mubr.f32.gmra.mrb[0].mxu0 %v3704
  %v3839 = vpop.f32.mrb[0].mxu0
  %v3840 = vadd.f32 %v3668, %v3839
  %v3841 = vpop.f32.mrb[0].mxu0
  %3842 = vmatprep.mubr.f32.mxu0 0.0
  %3843 = vmatmul.mubr.f32.gmra.mrb[0].mxu0 %v3707
  %v3844 = vpop.f32.mrb[0].mxu0
  %v3845 = vadd.f32 %v3668, %v3844
  %v3846 = vpop.f32.mrb[0].mxu0
  %3847 = vmatprep.mubr.f32.mxu0 0.0
  %3848 = vmatmul.mubr.f32.gmra.mrb[0].mxu0 %v3710
  %v3849 = vpop.f32.mrb[0].mxu0
  %v3850 = vadd.f32 %v3668, %v3849
  %v3851 = vpop.f32.mrb[0].mxu0
  %3852 = vmatprep.mubr.f32.mxu0 0.0
  %3853 = vmatmul.mubr.f32.gmra.mrb[0].mxu0 %v3713
  %v3854 = vpop.f32.mrb[0].mxu0
  %v3855 = vadd.f32 %v3668, %v3854
  %v3856 = vpop.f32.mrb[0].mxu0
  %3857 = vmatprep.mubr.f32.mxu0 0.0
  %3858 = vmatmul.mubr.f32.gmra.mrb[0].mxu0 %v3716
  %v3859 = vpop.f32.mrb[0].mxu0
  %v3860 = vadd.f32 %v3668, %v3859
  %v3861 = vpop.f32.mrb[0].mxu0
  %3862 = vdwg.mxu0
  %v3863 = vmul.f32 %v3785, %v3785
  %v3864 = vmul.f32 %v3790, %v3790
  %v3865 = vmul.f32 %v3795, %v3795
  %v3866 = vmul.f32 %v3800, %v3800
  %v3867 = vmul.f32 %v3805, %v3805
  %v3868 = vmul.f32 %v3810, %v3810
  %v3869 = vmul.f32 %v3815, %v3815
  %v3870 = vmul.f32 %v3820, %v3820
  %v3871 = vmul.f32 %v3825, %v3825
  %v3872 = vmul.f32 %v3830, %v3830
  %v3873 = vmul.f32 %v3835, %v3835
  %v3874 = vmul.f32 %v3840, %v3840
  %v3875 = vmul.f32 %v3845, %v3845
  %v3876 = vmul.f32 %v3850, %v3850
  %v3877 = vmul.f32 %v3855, %v3855
  %v3878 = vmul.f32 %v3860, %v3860
  %v3879 = vmul.f32 %v3785, %v3863
  %v3880 = vmul.f32 %v3790, %v3864
  %v3881 = vmul.f32 %v3795, %v3865
  %v3882 = vmul.f32 %v3800, %v3866
  %v3883 = vmul.f32 %v3805, %v3867
  %v3884 = vmul.f32 %v3810, %v3868
  %v3885 = vmul.f32 %v3815, %v3869
  %v3886 = vmul.f32 %v3820, %v3870
  %v3887 = vmul.f32 %v3825, %v3871
  %v3888 = vmul.f32 %v3830, %v3872
  %v3889 = vmul.f32 %v3835, %v3873
  %v3890 = vmul.f32 %v3840, %v3874
  %v3891 = vmul.f32 %v3845, %v3875
  %v3892 = vmul.f32 %v3850, %v3876
  %v3893 = vmul.f32 %v3855, %v3877
  %v3894 = vmul.f32 %v3860, %v3878
  %v3895 = vmul.f32 %v3879, 0.044715
  %v3896 = vmul.f32 %v3880, 0.044715
  %v3897 = vmul.f32 %v3881, 0.044715
  %v3898 = vmul.f32 %v3882, 0.044715
  %v3899 = vmul.f32 %v3883, 0.044715
  %v3900 = vmul.f32 %v3884, 0.044715
  %v3901 = vmul.f32 %v3885, 0.044715
  %v3902 = vmul.f32 %v3886, 0.044715
  %v3903 = vmul.f32 %v3887, 0.044715
  %v3904 = vmul.f32 %v3888, 0.044715
  %v3905 = vmul.f32 %v3889, 0.044715
  %v3906 = vmul.f32 %v3890, 0.044715
  %v3907 = vmul.f32 %v3891, 0.044715
  %v3908 = vmul.f32 %v3892, 0.044715
  %v3909 = vmul.f32 %v3893, 0.044715
  %v3910 = vmul.f32 %v3894, 0.044715
  %v3911 = vadd.f32 %v3785, %v3895
  %v3912 = vadd.f32 %v3790, %v3896
  %v3913 = vadd.f32 %v3795, %v3897
  %v3914 = vadd.f32 %v3800, %v3898
  %v3915 = vadd.f32 %v3805, %v3899
  %v3916 = vadd.f32 %v3810, %v3900
  %v3917 = vadd.f32 %v3815, %v3901
  %v3918 = vadd.f32 %v3820, %v3902
  %v3919 = vadd.f32 %v3825, %v3903
  %v3920 = vadd.f32 %v3830, %v3904
  %v3921 = vadd.f32 %v3835, %v3905
  %v3922 = vadd.f32 %v3840, %v3906
  %v3923 = vadd.f32 %v3845, %v3907
  %v3924 = vadd.f32 %v3850, %v3908
  %v3925 = vadd.f32 %v3855, %v3909
  %v3926 = vadd.f32 %v3860, %v3910
  %v3927 = vmul.f32 %v3911, 0.7978846
  %v3928 = vmul.f32 %v3912, 0.7978846
  %v3929 = vmul.f32 %v3913, 0.7978846
  %v3930 = vmul.f32 %v3914, 0.7978846
  %v3931 = vmul.f32 %v3915, 0.7978846
  %v3932 = vmul.f32 %v3916, 0.7978846
  %v3933 = vmul.f32 %v3917, 0.7978846
  %v3934 = vmul.f32 %v3918, 0.7978846
  %v3935 = vmul.f32 %v3919, 0.7978846
  %v3936 = vmul.f32 %v3920, 0.7978846
  %v3937 = vmul.f32 %v3921, 0.7978846
  %v3938 = vmul.f32 %v3922, 0.7978846
  %v3939 = vmul.f32 %v3923, 0.7978846
  %v3940 = vmul.f32 %v3924, 0.7978846
  %v3941 = vmul.f32 %v3925, 0.7978846
  %v3942 = vmul.f32 %v3926, 0.7978846
  %v3943 = vtanh.pop %v3927
  %v3944 = vtanh.pop %v3928
  %v3945 = vtanh.pop %v3929
  %v3946 = vtanh.pop %v3930
  %v3947 = vtanh.pop %v3931
  %v3948 = vtanh.pop %v3932
  %v3949 = vtanh.pop %v3933
  %v3950 = vtanh.pop %v3934
  %v3951 = vtanh.pop %v3935
  %v3952 = vtanh.pop %v3936
  %v3953 = vtanh.pop %v3937
  %v3954 = vtanh.pop %v3938
  %v3955 = vtanh.pop %v3939
  %v3956 = vtanh.pop %v3940
  %v3957 = vtanh.pop %v3941
  %v3958 = vtanh.pop %v3942
  %v3959 = vadd.f32 %v3943, 1.0
  %v3960 = vadd.f32 %v3944, 1.0
  %v3961 = vadd.f32 %v3945, 1.0
  %v3962 = vadd.f32 %v3946, 1.0
  %v3963 = vadd.f32 %v3947, 1.0
  %v3964 = vadd.f32 %v3948, 1.0
  %v3965 = vadd.f32 %v3949, 1.0
  %v3966 = vadd.f32 %v3950, 1.0
  %v3967 = vadd.f32 %v3951, 1.0
  %v3968 = vadd.f32 %v3952, 1.0
  %v3969 = vadd.f32 %v3953, 1.0
  %v3970 = vadd.f32 %v3954, 1.0
  %v3971 = vadd.f32 %v3955, 1.0
  %v3972 = vadd.f32 %v3956, 1.0
  %v3973 = vadd.f32 %v3957, 1.0
  %v3974 = vadd.f32 %v3958, 1.0
  %v3975 = vmul.f32 %v3959, 0.5
  %v3976 = vmul.f32 %v3960, 0.5
  %v3977 = vmul.f32 %v3961, 0.5
  %v3978 = vmul.f32 %v3962, 0.5
  %v3979 = vmul.f32 %v3963, 0.5
  %v3980 = vmul.f32 %v3964, 0.5
  %v3981 = vmul.f32 %v3965, 0.5
  %v3982 = vmul.f32 %v3966, 0.5
  %v3983 = vmul.f32 %v3967, 0.5
  %v3984 = vmul.f32 %v3968, 0.5
  %v3985 = vmul.f32 %v3969, 0.5
  %v3986 = vmul.f32 %v3970, 0.5
  %v3987 = vmul.f32 %v3971, 0.5
  %v3988 = vmul.f32 %v3972, 0.5
  %v3989 = vmul.f32 %v3973, 0.5
  %v3990 = vmul.f32 %v3974, 0.5
  %v3991 = vmul.f32 %v3785, %v3975
  %v3992 = vmul.f32 %v3790, %v3976
  %v3993 = vmul.f32 %v3795, %v3977
  %v3994 = vmul.f32 %v3800, %v3978
  %v3995 = vmul.f32 %v3805, %v3979
  %v3996 = vmul.f32 %v3810, %v3980
  %v3997 = vmul.f32 %v3815, %v3981
  %v3998 = vmul.f32 %v3820, %v3982
  %v3999 = vmul.f32 %v3825, %v3983
  %v4000 = vmul.f32 %v3830, %v3984
  %v4001 = vmul.f32 %v3835, %v3985
  %v4002 = vmul.f32 %v3840, %v3986
  %v4003 = vmul.f32 %v3845, %v3987
  %v4004 = vmul.f32 %v3850, %v3988
  %v4005 = vmul.f32 %v3855, %v3989
  %v4006 = vmul.f32 %v3860, %v3990
  %v4007 = vld [vmem:[%s15] sm:$0xff]
  %v4008 = vld [vmem:[%s15 + $0x8] sm:$0xff]
  %v4009 = vld [vmem:[%s15 + $0x10] sm:$0xff]
  %v4010 = vld [vmem:[%s15 + $0x18] sm:$0xff]
  %v4011 = vld [vmem:[%s15 + $0x20] sm:$0xff]
  %v4012 = vld [vmem:[%s15 + $0x28] sm:$0xff]
  %v4013 = vld [vmem:[%s15 + $0x30] sm:$0xff]
  %v4014 = vld [vmem:[%s15 + $0x38] sm:$0xff]
  %v4015 = vld [vmem:[%s15 + $0x40] sm:$0xff]
  %v4016 = vld [vmem:[%s15 + $0x48] sm:$0xff]
  %v4017 = vld [vmem:[%s15 + $0x50] sm:$0xff]
  %v4018 = vld [vmem:[%s15 + $0x58] sm:$0xff]
  %v4019 = vld [vmem:[%s15 + $0x60] sm:$0xff]
  %v4020 = vld [vmem:[%s15 + $0x68] sm:$0xff]
  %v4021 = vld [vmem:[%s15 + $0x70] sm:$0xff]
  %v4022 = vld [vmem:[%s15 + $0x78] sm:$0xff]
  %v4023 = vld [vmem:[%s16] sm:$0x1]
  %v4025 = vlaneseq
  %v4026 = vshrl.u32 %v4025, 7
  %v4027 = vsub.s32 0, %v4026
  %v4028 = vrot.slane %v4023, %v4027
  %4030 = vmatprep.subr.mxu0 0.0
  %4031 = vmatpush1.msra.mxu0 %v4007
  %4032 = vmatprep.subr.mxu0 0.0
  %4033 = vmatpush1.msra.mxu0 %v4008
  %4034 = vmatprep.subr.mxu0 0.0
  %4035 = vmatpush1.msra.mxu0 %v4009
  %4036 = vmatprep.subr.mxu0 0.0
  %4037 = vmatpush1.msra.mxu0 %v4010
  %4038 = vmatprep.subr.mxu0 0.0
  %4039 = vmatpush1.msra.mxu0 %v4011
  %4040 = vmatprep.subr.mxu0 0.0
  %4041 = vmatpush1.msra.mxu0 %v4012
  %4042 = vmatprep.subr.mxu0 0.0
  %4043 = vmatpush1.msra.mxu0 %v4013
  %4044 = vmatprep.subr.mxu0 0.0
  %4045 = vmatpush1.msra.mxu0 %v4014
  %4046 = vmatprep.subr.mxu0 0.0
  %4047 = vmatpush1.msra.mxu0 %v4015
  %4048 = vmatprep.subr.mxu0 0.0
  %4049 = vmatpush1.msra.mxu0 %v4016
  %4050 = vmatprep.subr.mxu0 0.0
  %4051 = vmatpush1.msra.mxu0 %v4017
  %4052 = vmatprep.subr.mxu0 0.0
  %4053 = vmatpush1.msra.mxu0 %v4018
  %4054 = vmatprep.subr.mxu0 0.0
  %4055 = vmatpush1.msra.mxu0 %v4019
  %4056 = vmatprep.subr.mxu0 0.0
  %4057 = vmatpush1.msra.mxu0 %v4020
  %4058 = vmatprep.subr.mxu0 0.0
  %4059 = vmatpush1.msra.mxu0 %v4021
  %4060 = vmatprep.subr.mxu0 0.0
  %4061 = vmatpush1.msra.mxu0 %v4022
  %4062 = vmatprep.subr.mxu0 0.0
  %4063 = vmatpush1.msra.mxu0 0.0
  %4064 = vmatprep.subr.mxu0 0.0
  %4065 = vmatpush1.msra.mxu0 0.0
  %4066 = vmatprep.subr.mxu0 0.0
  %4067 = vmatpush1.msra.mxu0 0.0
  %4068 = vmatprep.subr.mxu0 0.0
  %4069 = vmatpush1.msra.mxu0 0.0
  %4070 = vmatprep.subr.mxu0 0.0
  %4071 = vmatpush1.msra.mxu0 0.0
  %4072 = vmatprep.subr.mxu0 0.0
  %4073 = vmatpush1.msra.mxu0 0.0
  %4074 = vmatprep.subr.mxu0 0.0
  %4075 = vmatpush1.msra.mxu0 0.0
  %4076 = vmatprep.subr.mxu0 0.0
  %4077 = vmatpush1.msra.mxu0 0.0
  %4078 = vmatprep.subr.mxu0 0.0
  %4079 = vmatpush1.msra.mxu0 0.0
  %4080 = vmatprep.subr.mxu0 0.0
  %4081 = vmatpush1.msra.mxu0 0.0
  %4082 = vmatprep.subr.mxu0 0.0
  %4083 = vmatpush1.msra.mxu0 0.0
  %4084 = vmatprep.subr.mxu0 0.0
  %4085 = vmatpush1.msra.mxu0 0.0
  %4086 = vmatprep.subr.mxu0 0.0
  %4087 = vmatpush1.msra.mxu0 0.0
  %4088 = vmatprep.subr.mxu0 0.0
  %4089 = vmatpush1.msra.mxu0 0.0
  %4090 = vmatprep.subr.mxu0 0.0
  %4091 = vmatpush1.msra.mxu0 0.0
  %4092 = vmatprep.subr.mxu0 0.0
  %4093 = vmatpush1.msra.mxu0 0.0
  %4094 = vmatprep.mubr.f32.mxu0 0.0
  %4095 = vmatmul.mubr.f32.gmra.mrb[0].mxu0 %v3991
  %v4096 = vpop.f32.mrb[0].mxu0
  %v4097 = vadd.f32 %v4028, %v4096
  %v4098 = vpop.f32.mrb[0].mxu0
  %4099 = vmatprep.mubr.f32.mxu0 0.0
  %4100 = vmatmul.mubr.f32.gmra.mrb[0].mxu0 %v3992
  %v4101 = vpop.f32.mrb[0].mxu0
  %v4102 = vadd.f32 %v4028, %v4101
  %v4103 = vpop.f32.mrb[0].mxu0
  %4104 = vmatprep.mubr.f32.mxu0 0.0
  %4105 = vmatmul.mubr.f32.gmra.mrb[0].mxu0 %v3993
  %v4106 = vpop.f32.mrb[0].mxu0
  %v4107 = vadd.f32 %v4028, %v4106
  %v4108 = vpop.f32.mrb[0].mxu0
  %4109 = vmatprep.mubr.f32.mxu0 0.0
  %4110 = vmatmul.mubr.f32.gmra.mrb[0].mxu0 %v3994
  %v4111 = vpop.f32.mrb[0].mxu0
  %v4112 = vadd.f32 %v4028, %v4111
  %v4113 = vpop.f32.mrb[0].mxu0
  %4114 = vmatprep.mubr.f32.mxu0 0.0
  %4115 = vmatmul.mubr.f32.gmra.mrb[0].mxu0 %v3995
  %v4116 = vpop.f32.mrb[0].mxu0
  %v4117 = vadd.f32 %v4028, %v4116
  %v4118 = vpop.f32.mrb[0].mxu0
  %4119 = vmatprep.mubr.f32.mxu0 0.0
  %4120 = vmatmul.mubr.f32.gmra.mrb[0].mxu0 %v3996
  %v4121 = vpop.f32.mrb[0].mxu0
  %v4122 = vadd.f32 %v4028, %v4121
  %v4123 = vpop.f32.mrb[0].mxu0
  %4124 = vmatprep.mubr.f32.mxu0 0.0
  %4125 = vmatmul.mubr.f32.gmra.mrb[0].mxu0 %v3997
  %v4126 = vpop.f32.mrb[0].mxu0
  %v4127 = vadd.f32 %v4028, %v4126
  %v4128 = vpop.f32.mrb[0].mxu0
  %4129 = vmatprep.mubr.f32.mxu0 0.0
  %4130 = vmatmul.mubr.f32.gmra.mrb[0].mxu0 %v3998
  %v4131 = vpop.f32.mrb[0].mxu0
  %v4132 = vadd.f32 %v4028, %v4131
  %v4133 = vpop.f32.mrb[0].mxu0
  %4134 = vmatprep.mubr.f32.mxu0 0.0
  %4135 = vmatmul.mubr.f32.gmra.mrb[0].mxu0 %v3999
  %v4136 = vpop.f32.mrb[0].mxu0
  %v4137 = vadd.f32 %v4028, %v4136
  %v4138 = vpop.f32.mrb[0].mxu0
  %4139 = vmatprep.mubr.f32.mxu0 0.0
  %4140 = vmatmul.mubr.f32.gmra.mrb[0].mxu0 %v4000
  %v4141 = vpop.f32.mrb[0].mxu0
  %v4142 = vadd.f32 %v4028, %v4141
  %v4143 = vpop.f32.mrb[0].mxu0
  %4144 = vmatprep.mubr.f32.mxu0 0.0
  %4145 = vmatmul.mubr.f32.gmra.mrb[0].mxu0 %v4001
  %v4146 = vpop.f32.mrb[0].mxu0
  %v4147 = vadd.f32 %v4028, %v4146
  %v4148 = vpop.f32.mrb[0].mxu0
  %4149 = vmatprep.mubr.f32.mxu0 0.0
  %4150 = vmatmul.mubr.f32.gmra.mrb[0].mxu0 %v4002
  %v4151 = vpop.f32.mrb[0].mxu0
  %v4152 = vadd.f32 %v4028, %v4151
  %v4153 = vpop.f32.mrb[0].mxu0
  %4154 = vmatprep.mubr.f32.mxu0 0.0
  %4155 = vmatmul.mubr.f32.gmra.mrb[0].mxu0 %v4003
  %v4156 = vpop.f32.mrb[0].mxu0
  %v4157 = vadd.f32 %v4028, %v4156
  %v4158 = vpop.f32.mrb[0].mxu0
  %4159 = vmatprep.mubr.f32.mxu0 0.0
  %4160 = vmatmul.mubr.f32.gmra.mrb[0].mxu0 %v4004
  %v4161 = vpop.f32.mrb[0].mxu0
  %v4162 = vadd.f32 %v4028, %v4161
  %v4163 = vpop.f32.mrb[0].mxu0
  %4164 = vmatprep.mubr.f32.mxu0 0.0
  %4165 = vmatmul.mubr.f32.gmra.mrb[0].mxu0 %v4005
  %v4166 = vpop.f32.mrb[0].mxu0
  %v4167 = vadd.f32 %v4028, %v4166
  %v4168 = vpop.f32.mrb[0].mxu0
  %4169 = vmatprep.mubr.f32.mxu0 0.0
  %4170 = vmatmul.mubr.f32.gmra.mrb[0].mxu0 %v4006
  %v4171 = vpop.f32.mrb[0].mxu0
  %v4172 = vadd.f32 %v4028, %v4171
  %v4173 = vpop.f32.mrb[0].mxu0
  %4174 = vdwg.mxu0
  %v4175 = vadd.f32 %v3389, %v4097
  %v4176 = vadd.f32 %v3390, %v4102
  %v4177 = vadd.f32 %v3391, %v4107
  %v4178 = vadd.f32 %v3392, %v4112
  %v4179 = vadd.f32 %v3393, %v4117
  %v4180 = vadd.f32 %v3394, %v4122
  %v4181 = vadd.f32 %v3395, %v4127
  %v4182 = vadd.f32 %v3396, %v4132
  %v4183 = vadd.f32 %v3397, %v4137
  %v4184 = vadd.f32 %v3398, %v4142
  %v4185 = vadd.f32 %v3399, %v4147
  %v4186 = vadd.f32 %v3400, %v4152
  %v4187 = vadd.f32 %v3401, %v4157
  %v4188 = vadd.f32 %v3402, %v4162
  %v4189 = vadd.f32 %v3403, %v4167
  %v4190 = vadd.f32 %v3404, %v4172
  %4191 = vst.msk [vmem:[%s17] sm:$0xff] %vm72, %v4175
  %4192 = vst.msk [vmem:[%s17 + $0x8] sm:$0xff] %vm72, %v4176
  %4193 = vst.msk [vmem:[%s17 + $0x10] sm:$0xff] %vm72, %v4177
  %4194 = vst.msk [vmem:[%s17 + $0x18] sm:$0xff] %vm72, %v4178
  %4195 = vst.msk [vmem:[%s17 + $0x20] sm:$0xff] %vm72, %v4179
  %4196 = vst.msk [vmem:[%s17 + $0x28] sm:$0xff] %vm72, %v4180
  %4197 = vst.msk [vmem:[%s17 + $0x30] sm:$0xff] %vm72, %v4181
  %4198 = vst.msk [vmem:[%s17 + $0x38] sm:$0xff] %vm72, %v4182
  %4199 = vst.msk [vmem:[%s17 + $0x40] sm:$0xff] %vm72, %v4183
  %4200 = vst.msk [vmem:[%s17 + $0x48] sm:$0xff] %vm72, %v4184
  %4201 = vst.msk [vmem:[%s17 + $0x50] sm:$0xff] %vm72, %v4185
  %4202 = vst.msk [vmem:[%s17 + $0x58] sm:$0xff] %vm72, %v4186
  %4203 = vst.msk [vmem:[%s17 + $0x60] sm:$0xff] %vm72, %v4187
  %4204 = vst.msk [vmem:[%s17 + $0x68] sm:$0xff] %vm72, %v4188
  %4205 = vst.msk [vmem:[%s17 + $0x70] sm:$0xff] %vm72, %v4189
  %4206 = vst.msk [vmem:[%s17 + $0x78] sm:$0xff] %vm72, %v4190
  // Predicated region
  $region70: #{tpu_custom_call.1} parent=0 // pred_check
    _
  $region71: #{tpu_custom_call.1} parent=0 // pred_check_branch
    %4208 = sbr.rel (0) target = $region73
  $region72: #{tpu_custom_call.1} parent=0 // pred_region
    _
  $region73: #{tpu_custom_call.1} parent=0 // pred_fallthru
    _
  // Predicated region
  $region74: #{tpu_custom_call.1} parent=0 // pred_check
    _
  $region75: #{tpu_custom_call.1} parent=0 // pred_check_branch
    %4210 = sbr.rel (0) target = $region77
  $region76: #{tpu_custom_call.1} parent=0 // pred_region
    _
  $region77: #{tpu_custom_call.1} parent=0 // pred_fallthru
    _

</llo_original>
